<compile_context>
chip_gen: v7x
topology: tpu7x:2x2x1
jax: 0.10.0
libtpu: 0.0.40
codegen_flags: <defaults>
</compile_context>

<pallas_src>
import jax
import jax.numpy as jnp
from jax.experimental import pallas as pl
from jax.experimental.pallas import tpu as pltpu

LATENT_DIM = 64
IN_FEATURES = 28 * 28          # 784
TB_MAX = 512                   # batch tile (amortizes ~0.35us/step overhead, fits VMEM easily)


def _round_up(x, m):
    return (x + m - 1) // m * m


def _cdiv(a, b):
    return (a + b - 1) // b


def _autoencoder_kernel(
    x_ref,
    w1_ref, b1_ref,
    w2_ref, b2_ref,
    w34_ref, b34_ref,
    w5_ref, b5_ref,
    w6_ref, b6_ref,
    out_ref,
):
    """Fused encoder+decoder MLP for one batch tile.

    All matmuls are bf16 x bf16 -> f32 on the MXU; bias adds run in f32, ReLU in bf16
    (post-downcast), sigmoid via EUP exp + approx reciprocal.
    """
    x = x_ref[...].astype(jnp.bfloat16)                                       # (tb, 784)

    # ---- encoder ----
    h = jnp.dot(x, w1_ref[...], preferred_element_type=jnp.float32) + b1_ref[...]
    h = jnp.maximum(h.astype(jnp.bfloat16), 0.0)                              # ReLU (bf16)
    h = jnp.dot(h, w2_ref[...], preferred_element_type=jnp.float32) + b2_ref[...]
    h = jnp.maximum(h.astype(jnp.bfloat16), 0.0)                              # ReLU (bf16)

    # ---- fused latent (Linear(256->64) ∘ Linear(64->256)) + decoder ----
    h = jnp.dot(h, w34_ref[...], preferred_element_type=jnp.float32) + b34_ref[...]
    h = jnp.maximum(h.astype(jnp.bfloat16), 0.0)                              # ReLU (bf16)
    h = jnp.dot(h, w5_ref[...], preferred_element_type=jnp.float32) + b5_ref[...]
    h = jnp.maximum(h.astype(jnp.bfloat16), 0.0)                              # ReLU (bf16)
    y = jnp.dot(h, w6_ref[...], preferred_element_type=jnp.float32) + b6_ref[...]

    # Sigmoid: exp on EUP, 1/(1+e) via approx reciprocal (EUP slot, frees VALU).
    y = pl.reciprocal(1.0 + jnp.exp(-y), approx=True)

    out_ref[...] = y.astype(out_ref.dtype)                                    # (tb, 784) f32


def init_params(key, latent_dim=LATENT_DIM):
    """nn.Linear-style init, U(-1/sqrt(fan_in), +1/sqrt(fan_in)).

    Weights stored (in_features, out_features); biases as (1, out_features). f32.
    """
    dims = [IN_FEATURES, 512, 256, latent_dim, 256, 512, IN_FEATURES]
    params = []
    for i in range(6):
        fan_in, fan_out = dims[i], dims[i + 1]
        key, wk, bk = jax.random.split(key, 3)
        bound = 1.0 / jnp.sqrt(jnp.float32(fan_in))
        w = jax.random.uniform(wk, (fan_in, fan_out), jnp.float32, -bound, bound)
        b = jax.random.uniform(bk, (1, fan_out), jnp.float32, -bound, bound)
        params.append((w, b))
    return params


def prepare_params(params):
    """One-time setup.

    Fuses the latent pair (Linear(256->64), Linear(64->256)) into a single 256x256 layer
    (exact: relu((x@w3+b3)@w4+b4) == relu(x@(w3@w4) + (b3@w4+b4)); the latent z is never
    exposed by the module's forward).  Weights cast to bf16 for the MXU; biases stay f32.
    """
    (w1, b1), (w2, b2), (w3, b3), (w4, b4), (w5, b5), (w6, b6) = params
    w34 = w3 @ w4                     # (256, 256) f32
    b34 = b3 @ w4 + b4                # (1, 256)   f32

    prepared = []
    for w, b in ((w1, b1), (w2, b2), (w34, b34), (w5, b5), (w6, b6)):
        prepared.append((w.astype(jnp.bfloat16), b.astype(jnp.float32)))
    return prepared


@jax.jit
def autoencoder_forward(x_nchw, prepared_params):
    """x_nchw: (B, 1, 28, 28) float32 -> (B, 1, 28, 28) float32."""
    B = x_nchw.shape[0]
    x_flat = x_nchw.reshape(B, IN_FEATURES).astype(jnp.float32)   # nn.Flatten()

    # Batch tile: >=2 tiles when B allows (so both v7x TCs get work), capped at TB_MAX,
    # multiple of 16 (bf16 sublane pack).  Tiny batches just pad up to one 16-row tile.
    if B > 16:
        tb = min(TB_MAX, _round_up(_cdiv(B, 2), 16))
    else:
        tb = 16
    b_pad = _round_up(B, tb)

    if b_pad > B:
        x_in = jnp.pad(x_flat, ((0, b_pad - B), (0, 0)))
    else:
        x_in = x_flat

    flat_params = []
    for w, b in prepared_params:
        flat_params.extend([w, b])

    # x/out are batch-tiled (last dim == full array dim, so 784-wide blocks are legal);
    # weights & biases use whole-array blocks with a constant index_map -> fetched once,
    # VMEM-resident across all grid steps.
    x_spec = pl.BlockSpec((tb, IN_FEATURES), lambda i: (i, 0))
    out_spec = pl.BlockSpec((tb, IN_FEATURES), lambda i: (i, 0))
    param_specs = [pl.BlockSpec(p.shape, lambda i: (0, 0)) for p in flat_params]

    out = pl.pallas_call(
        _autoencoder_kernel,
        out_shape=jax.ShapeDtypeStruct((b_pad, IN_FEATURES), jnp.float32),
        grid=(b_pad // tb,),
        in_specs=[x_spec] + param_specs,
        out_specs=out_spec,
        compiler_params=pltpu.CompilerParams(
            dimension_semantics=("parallel",),        # shard batch tiles across v7x's 2 TCs
            vmem_limit_bytes=48 * 1024 * 1024,        # valid on v7x (64 MiB VMEM)
        ),
    )(x_in, *flat_params)

    if b_pad > B:
        out = out[:B]
    return out.reshape(B, 1, 28, 28)                              # nn.Unflatten(1, (1, 28, 28))


def _reference_forward(x_nchw, params):
    """Pure-JAX f32 reference of the PyTorch module (for correctness check)."""
    B = x_nchw.shape[0]
    h = x_nchw.reshape(B, IN_FEATURES)
    (w1, b1), (w2, b2), (w3, b3), (w4, b4), (w5, b5), (w6, b6) = params
    h = jnp.maximum(h @ w1 + b1, 0.0)
    h = jnp.maximum(h @ w2 + b2, 0.0)
    z = h @ w3 + b3
    h = jnp.maximum(z @ w4 + b4, 0.0)
    h = jnp.maximum(h @ w5 + b5, 0.0)
    y = jax.nn.sigmoid(h @ w6 + b6)
    return y.reshape(B, 1, 28, 28)


if __name__ == "__main__":
    key = jax.random.PRNGKey(0)
    pkey, xkey = jax.random.split(key)

    params = init_params(pkey, LATENT_DIM)
    prepared = prepare_params(params)

    # Small FashionMNIST-like batch: (B=2, C=1, H=28, W=28), NCHW.
    x = jax.random.uniform(xkey, (2, 1, 28, 28), jnp.float32)

    y = autoencoder_forward(x, prepared)
    y = jax.block_until_ready(y)

    assert y.shape == (2, 1, 28, 28), y.shape
    assert y.dtype == jnp.float32
    assert bool(jnp.all(jnp.isfinite(y)))
    # Sigmoid output must lie in [0, 1] (allow saturation / approx-reciprocal rounding slack).
    assert bool(jnp.all((y > -1e-3) & (y < 1.0 + 1e-3)))

    # Numerical check vs. pure f32 reference (bf16 weights/activations, f32 accumulation).
    y_ref = _reference_forward(x, params)
    max_err = float(jnp.max(jnp.abs(y - y_ref)))
    assert max_err < 5e-2, f"max abs error vs f32 reference too large: {max_err}"

    print("KERNEL_OK")
</pallas_src>

<mosaic_0001>
module attributes {stable_mosaic.version = 11 : i64} {
  func.func @_autoencoder_kernel(%arg0: i32, %arg1: memref<16x784xf32, #tpu.memory_space<vmem>>, %arg2: memref<784x512xbf16, #tpu.memory_space<vmem>>, %arg3: memref<1x512xf32, #tpu.memory_space<vmem>>, %arg4: memref<512x256xbf16, #tpu.memory_space<vmem>>, %arg5: memref<1x256xf32, #tpu.memory_space<vmem>>, %arg6: memref<256x256xbf16, #tpu.memory_space<vmem>>, %arg7: memref<1x256xf32, #tpu.memory_space<vmem>>, %arg8: memref<256x512xbf16, #tpu.memory_space<vmem>>, %arg9: memref<1x512xf32, #tpu.memory_space<vmem>>, %arg10: memref<512x784xbf16, #tpu.memory_space<vmem>>, %arg11: memref<1x784xf32, #tpu.memory_space<vmem>>, %arg12: memref<16x784xf32, #tpu.memory_space<vmem>>) attributes {dimension_semantics = [#tpu.dimension_semantics<parallel>], iteration_bounds = array<i64: 1>, scalar_prefetch = 0 : i64, scratch_operands = 0 : i64, tpu.core_type = #tpu.core_type<tc>, window_params = [{transform_indices = @transform_0, window_bounds = array<i64: 16, 784>}, {pipeline_mode = #tpu.pipeline_mode<synchronous>, transform_indices = @transform_1, window_bounds = array<i64: 784, 512>}, {pipeline_mode = #tpu.pipeline_mode<synchronous>, transform_indices = @transform_2, window_bounds = array<i64: 1, 512>}, {pipeline_mode = #tpu.pipeline_mode<synchronous>, transform_indices = @transform_3, window_bounds = array<i64: 512, 256>}, {pipeline_mode = #tpu.pipeline_mode<synchronous>, transform_indices = @transform_4, window_bounds = array<i64: 1, 256>}, {pipeline_mode = #tpu.pipeline_mode<synchronous>, transform_indices = @transform_5, window_bounds = array<i64: 256, 256>}, {pipeline_mode = #tpu.pipeline_mode<synchronous>, transform_indices = @transform_6, window_bounds = array<i64: 1, 256>}, {pipeline_mode = #tpu.pipeline_mode<synchronous>, transform_indices = @transform_7, window_bounds = array<i64: 256, 512>}, {pipeline_mode = #tpu.pipeline_mode<synchronous>, transform_indices = @transform_8, window_bounds = array<i64: 1, 512>}, {pipeline_mode = #tpu.pipeline_mode<synchronous>, transform_indices = @transform_9, window_bounds = array<i64: 512, 784>}, {pipeline_mode = #tpu.pipeline_mode<synchronous>, transform_indices = @transform_10, window_bounds = array<i64: 1, 784>}, {transform_indices = @transform_11, window_bounds = array<i64: 16, 784>}]} {
    %c0 = arith.constant 0 : index
    %c0_0 = arith.constant 0 : index
    %0 = vector.load %arg1[%c0, %c0_0] : memref<16x784xf32, #tpu.memory_space<vmem>>, vector<16x784xf32>
    %1 = arith.truncf %0 : vector<16x784xf32> to vector<16x784xbf16>
    %c0_1 = arith.constant 0 : index
    %c0_2 = arith.constant 0 : index
    %2 = vector.load %arg2[%c0_1, %c0_2] : memref<784x512xbf16, #tpu.memory_space<vmem>>, vector<784x512xbf16>
    %cst = arith.constant dense<0.000000e+00> : vector<16x512xf32>
    %3 = tpu.matmul %1, %2, %cst {dimension_numbers = #tpu.dot_dimension_numbers<[1], [0], [0], [1], [0, 0, 1, 1], [], []>} : vector<16x784xbf16>, vector<784x512xbf16>, vector<16x512xf32> -> vector<16x512xf32>
    %c0_3 = arith.constant 0 : index
    %c0_4 = arith.constant 0 : index
    %4 = vector.load %arg3[%c0_3, %c0_4] : memref<1x512xf32, #tpu.memory_space<vmem>>, vector<1x512xf32>
    %5 = vector.broadcast %4 : vector<1x512xf32> to vector<16x512xf32>
    %6 = arith.addf %3, %5 : vector<16x512xf32>
    %7 = arith.truncf %6 : vector<16x512xf32> to vector<16x512xbf16>
    %cst_5 = arith.constant 0.000000e+00 : bf16
    %8 = vector.broadcast %cst_5 : bf16 to vector<16x512xbf16>
    %9 = arith.maximumf %7, %8 : vector<16x512xbf16>
    %c0_6 = arith.constant 0 : index
    %c0_7 = arith.constant 0 : index
    %10 = vector.load %arg4[%c0_6, %c0_7] : memref<512x256xbf16, #tpu.memory_space<vmem>>, vector<512x256xbf16>
    %cst_8 = arith.constant dense<0.000000e+00> : vector<16x256xf32>
    %11 = tpu.matmul %9, %10, %cst_8 {dimension_numbers = #tpu.dot_dimension_numbers<[1], [0], [0], [1], [0, 0, 1, 1], [], []>} : vector<16x512xbf16>, vector<512x256xbf16>, vector<16x256xf32> -> vector<16x256xf32>
    %c0_9 = arith.constant 0 : index
    %c0_10 = arith.constant 0 : index
    %12 = vector.load %arg5[%c0_9, %c0_10] : memref<1x256xf32, #tpu.memory_space<vmem>>, vector<1x256xf32>
    %13 = vector.broadcast %12 : vector<1x256xf32> to vector<16x256xf32>
    %14 = arith.addf %11, %13 : vector<16x256xf32>
    %15 = arith.truncf %14 : vector<16x256xf32> to vector<16x256xbf16>
    %cst_11 = arith.constant 0.000000e+00 : bf16
    %16 = vector.broadcast %cst_11 : bf16 to vector<16x256xbf16>
    %17 = arith.maximumf %15, %16 : vector<16x256xbf16>
    %c0_12 = arith.constant 0 : index
    %c0_13 = arith.constant 0 : index
    %18 = vector.load %arg6[%c0_12, %c0_13] : memref<256x256xbf16, #tpu.memory_space<vmem>>, vector<256x256xbf16>
    %cst_14 = arith.constant dense<0.000000e+00> : vector<16x256xf32>
    %19 = tpu.matmul %17, %18, %cst_14 {dimension_numbers = #tpu.dot_dimension_numbers<[1], [0], [0], [1], [0, 0, 1, 1], [], []>} : vector<16x256xbf16>, vector<256x256xbf16>, vector<16x256xf32> -> vector<16x256xf32>
    %c0_15 = arith.constant 0 : index
    %c0_16 = arith.constant 0 : index
    %20 = vector.load %arg7[%c0_15, %c0_16] : memref<1x256xf32, #tpu.memory_space<vmem>>, vector<1x256xf32>
    %21 = vector.broadcast %20 : vector<1x256xf32> to vector<16x256xf32>
    %22 = arith.addf %19, %21 : vector<16x256xf32>
    %23 = arith.truncf %22 : vector<16x256xf32> to vector<16x256xbf16>
    %cst_17 = arith.constant 0.000000e+00 : bf16
    %24 = vector.broadcast %cst_17 : bf16 to vector<16x256xbf16>
    %25 = arith.maximumf %23, %24 : vector<16x256xbf16>
    %c0_18 = arith.constant 0 : index
    %c0_19 = arith.constant 0 : index
    %26 = vector.load %arg8[%c0_18, %c0_19] : memref<256x512xbf16, #tpu.memory_space<vmem>>, vector<256x512xbf16>
    %cst_20 = arith.constant dense<0.000000e+00> : vector<16x512xf32>
    %27 = tpu.matmul %25, %26, %cst_20 {dimension_numbers = #tpu.dot_dimension_numbers<[1], [0], [0], [1], [0, 0, 1, 1], [], []>} : vector<16x256xbf16>, vector<256x512xbf16>, vector<16x512xf32> -> vector<16x512xf32>
    %c0_21 = arith.constant 0 : index
    %c0_22 = arith.constant 0 : index
    %28 = vector.load %arg9[%c0_21, %c0_22] : memref<1x512xf32, #tpu.memory_space<vmem>>, vector<1x512xf32>
    %29 = vector.broadcast %28 : vector<1x512xf32> to vector<16x512xf32>
    %30 = arith.addf %27, %29 : vector<16x512xf32>
    %31 = arith.truncf %30 : vector<16x512xf32> to vector<16x512xbf16>
    %cst_23 = arith.constant 0.000000e+00 : bf16
    %32 = vector.broadcast %cst_23 : bf16 to vector<16x512xbf16>
    %33 = arith.maximumf %31, %32 : vector<16x512xbf16>
    %c0_24 = arith.constant 0 : index
    %c0_25 = arith.constant 0 : index
    %34 = vector.load %arg10[%c0_24, %c0_25] : memref<512x784xbf16, #tpu.memory_space<vmem>>, vector<512x784xbf16>
    %cst_26 = arith.constant dense<0.000000e+00> : vector<16x784xf32>
    %35 = tpu.matmul %33, %34, %cst_26 {dimension_numbers = #tpu.dot_dimension_numbers<[1], [0], [0], [1], [0, 0, 1, 1], [], []>} : vector<16x512xbf16>, vector<512x784xbf16>, vector<16x784xf32> -> vector<16x784xf32>
    %c0_27 = arith.constant 0 : index
    %c0_28 = arith.constant 0 : index
    %36 = vector.load %arg11[%c0_27, %c0_28] : memref<1x784xf32, #tpu.memory_space<vmem>>, vector<1x784xf32>
    %37 = vector.broadcast %36 : vector<1x784xf32> to vector<16x784xf32>
    %38 = arith.addf %35, %37 : vector<16x784xf32>
    %cst_29 = arith.constant 0.000000e+00 : f32
    %39 = vector.broadcast %cst_29 : f32 to vector<16x784xf32>
    %40 = arith.subf %39, %38 : vector<16x784xf32>
    %41 = math.exp %40 : vector<16x784xf32>
    %cst_30 = arith.constant 1.000000e+00 : f32
    %42 = vector.broadcast %cst_30 : f32 to vector<16x784xf32>
    %43 = arith.addf %42, %41 : vector<16x784xf32>
    %44 = tpu.reciprocal %43 {approx = true} : vector<16x784xf32> -> vector<16x784xf32>
    %c0_31 = arith.constant 0 : index
    %c0_32 = arith.constant 0 : index
    %45 = vector.load %arg12[%c0_31, %c0_32] : memref<16x784xf32, #tpu.memory_space<vmem>>, vector<16x784xf32>
    tpu.vector_store %arg12[%c0_31, %c0_32], %44 {strides = array<i32>} : memref<16x784xf32, #tpu.memory_space<vmem>>, vector<16x784xf32>,
    return
  }
  func.func @transform_0(%arg0: i32) -> (i32, i32) {
    %c0_i32 = arith.constant 0 : i32
    %c0_i32_0 = arith.constant 0 : i32
    return %arg0, %c0_i32 : i32, i32
  }
  func.func @transform_1(%arg0: i32) -> (i32, i32) {
    %c0_i32 = arith.constant 0 : i32
    %c0_i32_0 = arith.constant 0 : i32
    %c0_i32_1 = arith.constant 0 : i32
    return %c0_i32, %c0_i32_0 : i32, i32
  }
  func.func @transform_2(%arg0: i32) -> (i32, i32) {
    %c0_i32 = arith.constant 0 : i32
    %c0_i32_0 = arith.constant 0 : i32
    %c0_i32_1 = arith.constant 0 : i32
    return %c0_i32, %c0_i32_0 : i32, i32
  }
  func.func @transform_3(%arg0: i32) -> (i32, i32) {
    %c0_i32 = arith.constant 0 : i32
    %c0_i32_0 = arith.constant 0 : i32
    %c0_i32_1 = arith.constant 0 : i32
    return %c0_i32, %c0_i32_0 : i32, i32
  }
  func.func @transform_4(%arg0: i32) -> (i32, i32) {
    %c0_i32 = arith.constant 0 : i32
    %c0_i32_0 = arith.constant 0 : i32
    %c0_i32_1 = arith.constant 0 : i32
    return %c0_i32, %c0_i32_0 : i32, i32
  }
  func.func @transform_5(%arg0: i32) -> (i32, i32) {
    %c0_i32 = arith.constant 0 : i32
    %c0_i32_0 = arith.constant 0 : i32
    %c0_i32_1 = arith.constant 0 : i32
    return %c0_i32, %c0_i32_0 : i32, i32
  }
  func.func @transform_6(%arg0: i32) -> (i32, i32) {
    %c0_i32 = arith.constant 0 : i32
    %c0_i32_0 = arith.constant 0 : i32
    %c0_i32_1 = arith.constant 0 : i32
    return %c0_i32, %c0_i32_0 : i32, i32
  }
  func.func @transform_7(%arg0: i32) -> (i32, i32) {
    %c0_i32 = arith.constant 0 : i32
    %c0_i32_0 = arith.constant 0 : i32
    %c0_i32_1 = arith.constant 0 : i32
    return %c0_i32, %c0_i32_0 : i32, i32
  }
  func.func @transform_8(%arg0: i32) -> (i32, i32) {
    %c0_i32 = arith.constant 0 : i32
    %c0_i32_0 = arith.constant 0 : i32
    %c0_i32_1 = arith.constant 0 : i32
    return %c0_i32, %c0_i32_0 : i32, i32
  }
  func.func @transform_9(%arg0: i32) -> (i32, i32) {
    %c0_i32 = arith.constant 0 : i32
    %c0_i32_0 = arith.constant 0 : i32
    %c0_i32_1 = arith.constant 0 : i32
    return %c0_i32, %c0_i32_0 : i32, i32
  }
  func.func @transform_10(%arg0: i32) -> (i32, i32) {
    %c0_i32 = arith.constant 0 : i32
    %c0_i32_0 = arith.constant 0 : i32
    %c0_i32_1 = arith.constant 0 : i32
    return %c0_i32, %c0_i32_0 : i32, i32
  }
  func.func @transform_11(%arg0: i32) -> (i32, i32) {
    %c0_i32 = arith.constant 0 : i32
    %c0_i32_0 = arith.constant 0 : i32
    return %arg0, %c0_i32 : i32, i32
  }
}

</mosaic_0001>

<llo_original>
// kernel: autoencoder_forward.1
$region0: #{autoencoder_forward.1}
  #allocation0 [shape = 'u32[]', space=smem, size = 0x4, offset = 0x4, fixed_abs, tag = 'smem constant byte address 0x4 - core index']
  #allocation1 [shape = 'u32[144,128]{1,0:T(1,128)}', space=vmem, size = 0x12000, scoped, tag = 'internal scratch']
  %s0 = inlined_call_operand.vmem [shape: f32[16,784], index: 0, kind: input, shape index: {}]
  %s1 = inlined_call_operand.vmem [shape: bf16[784,512], index: 1, kind: input, shape index: {}]
  %s2 = inlined_call_operand.vmem [shape: f32[1,512], index: 2, kind: input, shape index: {}]
  %s3 = inlined_call_operand.vmem [shape: bf16[512,256], index: 3, kind: input, shape index: {}]
  %s4 = inlined_call_operand.vmem [shape: f32[1,256], index: 4, kind: input, shape index: {}]
  %s5 = inlined_call_operand.vmem [shape: bf16[256,256], index: 5, kind: input, shape index: {}]
  %s6 = inlined_call_operand.vmem [shape: f32[1,256], index: 6, kind: input, shape index: {}]
  %s7 = inlined_call_operand.vmem [shape: bf16[256,512], index: 7, kind: input, shape index: {}]
  %s8 = inlined_call_operand.vmem [shape: f32[1,512], index: 8, kind: input, shape index: {}]
  %s9 = inlined_call_operand.vmem [shape: bf16[512,784], index: 9, kind: input, shape index: {}]
  %s10 = inlined_call_operand.vmem [shape: f32[1,784], index: 10, kind: input, shape index: {}]
  %s11 = inlined_call_operand.vmem [shape: f32[16,784], index: 11, kind: output, shape index: {}]
  %s12 = sld [smem:[#allocation0]]
  $region54: #{autoencoder_forward.1} parent=0
    _
  %s14 = ssub.s32 1, %s12
  %s15 = scalar_select 0, %s14, %s12
  // Predicated region
  $region2: #{autoencoder_forward.1} parent=0 // pred_check
    _
  $region3: #{autoencoder_forward.1} parent=0 // pred_check_branch
    %17 = sbr.rel (0) target = $region5
  $region4: #{autoencoder_forward.1} parent=0 // pred_region
    _
  $region5: #{autoencoder_forward.1} parent=0 // pred_fallthru
    _
  // Predicated region
  $region6: #{autoencoder_forward.1} parent=0 // pred_check
    _
  $region7: #{autoencoder_forward.1} parent=0 // pred_check_branch
    %19 = sbr.rel (0) target = $region9
  $region8: #{autoencoder_forward.1} parent=0 // pred_region
    _
  $region9: #{autoencoder_forward.1} parent=0 // pred_fallthru
    _
  // Predicated region
  $region10: #{autoencoder_forward.1} parent=0 // pred_check
    _
  $region11: #{autoencoder_forward.1} parent=0 // pred_check_branch
    %21 = sbr.rel (0) target = $region13
  $region12: #{autoencoder_forward.1} parent=0 // pred_region
    _
  $region13: #{autoencoder_forward.1} parent=0 // pred_fallthru
    _
  // Predicated region
  $region14: #{autoencoder_forward.1} parent=0 // pred_check
    _
  $region15: #{autoencoder_forward.1} parent=0 // pred_check_branch
    %23 = sbr.rel (0) target = $region17
  $region16: #{autoencoder_forward.1} parent=0 // pred_region
    _
  $region17: #{autoencoder_forward.1} parent=0 // pred_fallthru
    _
  // Predicated region
  $region18: #{autoencoder_forward.1} parent=0 // pred_check
    _
  $region19: #{autoencoder_forward.1} parent=0 // pred_check_branch
    %25 = sbr.rel (0) target = $region21
  $region20: #{autoencoder_forward.1} parent=0 // pred_region
    _
  $region21: #{autoencoder_forward.1} parent=0 // pred_fallthru
    _
  // Predicated region
  $region22: #{autoencoder_forward.1} parent=0 // pred_check
    _
  $region23: #{autoencoder_forward.1} parent=0 // pred_check_branch
    %27 = sbr.rel (0) target = $region25
  $region24: #{autoencoder_forward.1} parent=0 // pred_region
    _
  $region25: #{autoencoder_forward.1} parent=0 // pred_fallthru
    _
  // Predicated region
  $region26: #{autoencoder_forward.1} parent=0 // pred_check
    _
  $region27: #{autoencoder_forward.1} parent=0 // pred_check_branch
    %29 = sbr.rel (0) target = $region29
  $region28: #{autoencoder_forward.1} parent=0 // pred_region
    _
  $region29: #{autoencoder_forward.1} parent=0 // pred_fallthru
    _
  // Predicated region
  $region30: #{autoencoder_forward.1} parent=0 // pred_check
    _
  $region31: #{autoencoder_forward.1} parent=0 // pred_check_branch
    %31 = sbr.rel (0) target = $region33
  $region32: #{autoencoder_forward.1} parent=0 // pred_region
    _
  $region33: #{autoencoder_forward.1} parent=0 // pred_fallthru
    _
  // Predicated region
  $region34: #{autoencoder_forward.1} parent=0 // pred_check
    _
  $region35: #{autoencoder_forward.1} parent=0 // pred_check_branch
    %33 = sbr.rel (0) target = $region37
  $region36: #{autoencoder_forward.1} parent=0 // pred_region
    _
  $region37: #{autoencoder_forward.1} parent=0 // pred_fallthru
    _
  // Predicated region
  $region38: #{autoencoder_forward.1} parent=0 // pred_check
    _
  $region39: #{autoencoder_forward.1} parent=0 // pred_check_branch
    %35 = sbr.rel (0) target = $region41
  $region40: #{autoencoder_forward.1} parent=0 // pred_region
    _
  $region41: #{autoencoder_forward.1} parent=0 // pred_fallthru
    _
  // Predicated region
  $region42: #{autoencoder_forward.1} parent=0 // pred_check
    _
  $region43: #{autoencoder_forward.1} parent=0 // pred_check_branch
    %37 = sbr.rel (0) target = $region45
  $region44: #{autoencoder_forward.1} parent=0 // pred_region
    _
  $region45: #{autoencoder_forward.1} parent=0 // pred_fallthru
    _
  %v39 = vld [vmem:[%s0] sm:$0xff]
  %v40 = vld [vmem:[%s0 + $0x8] sm:$0xff]
  %v41 = vld [vmem:[%s0 + $0x10] sm:$0xff]
  %v42 = vld [vmem:[%s0 + $0x18] sm:$0xff]
  %v43 = vld [vmem:[%s0 + $0x20] sm:$0xff]
  %v44 = vld [vmem:[%s0 + $0x28] sm:$0xff]
  %v45 = vld [vmem:[%s0 + $0x30] sm:$0xff]
  %v46 = vld [vmem:[%s0 + $0x38] sm:$0xff]
  %v47 = vld [vmem:[%s0 + $0x40] sm:$0xff]
  %v48 = vld [vmem:[%s0 + $0x48] sm:$0xff]
  %v49 = vld [vmem:[%s0 + $0x50] sm:$0xff]
  %v50 = vld [vmem:[%s0 + $0x58] sm:$0xff]
  %v51 = vld [vmem:[%s0 + $0x60] sm:$0xff]
  %v52 = vld [vmem:[%s0 + $0x68] sm:$0xff]
  %v53 = vpack.c.bf16 %v46, %v39
  %v54 = vpack.c.bf16 %v47, %v40
  %v55 = vpack.c.bf16 %v48, %v41
  %v56 = vpack.c.bf16 %v49, %v42
  %v57 = vpack.c.bf16 %v50, %v43
  %v58 = vpack.c.bf16 %v51, %v44
  %v59 = vpack.c.bf16 %v52, %v45
  %v60 = vld [vmem:[%s1] sm:$0xff]
  %v61 = vld [vmem:[%s1 + $0x8] sm:$0xff]
  %v62 = vld [vmem:[%s1 + $0x10] sm:$0xff]
  %v63 = vld [vmem:[%s1 + $0x18] sm:$0xff]
  %v64 = vld [vmem:[%s1 + $0x20] sm:$0xff]
  %v65 = vld [vmem:[%s1 + $0x28] sm:$0xff]
  %v66 = vld [vmem:[%s1 + $0x30] sm:$0xff]
  %v67 = vld [vmem:[%s1 + $0x38] sm:$0xff]
  %v68 = vld [vmem:[%s1 + $0x40] sm:$0xff]
  %v69 = vld [vmem:[%s1 + $0x48] sm:$0xff]
  %v70 = vld [vmem:[%s1 + $0x50] sm:$0xff]
  %v71 = vld [vmem:[%s1 + $0x58] sm:$0xff]
  %v72 = vld [vmem:[%s1 + $0x60] sm:$0xff]
  %v73 = vld [vmem:[%s1 + $0x68] sm:$0xff]
  %v74 = vld [vmem:[%s1 + $0x70] sm:$0xff]
  %v75 = vld [vmem:[%s1 + $0x78] sm:$0xff]
  %v76 = vld [vmem:[%s1 + $0x80] sm:$0xff]
  %v77 = vld [vmem:[%s1 + $0x88] sm:$0xff]
  %v78 = vld [vmem:[%s1 + $0x90] sm:$0xff]
  %v79 = vld [vmem:[%s1 + $0x98] sm:$0xff]
  %v80 = vld [vmem:[%s1 + $0xa0] sm:$0xff]
  %v81 = vld [vmem:[%s1 + $0xa8] sm:$0xff]
  %v82 = vld [vmem:[%s1 + $0xb0] sm:$0xff]
  %v83 = vld [vmem:[%s1 + $0xb8] sm:$0xff]
  %v84 = vld [vmem:[%s1 + $0xc0] sm:$0xff]
  %v85 = vld [vmem:[%s1 + $0xc8] sm:$0xff]
  %v86 = vld [vmem:[%s1 + $0xd0] sm:$0xff]
  %v87 = vld [vmem:[%s1 + $0xd8] sm:$0xff]
  %v88 = vld [vmem:[%s1 + $0xe0] sm:$0xff]
  %v89 = vld [vmem:[%s1 + $0xe8] sm:$0xff]
  %v90 = vld [vmem:[%s1 + $0xf0] sm:$0xff]
  %v91 = vld [vmem:[%s1 + $0xf8] sm:$0xff]
  %v92 = vld [vmem:[%s1 + $0x100] sm:$0xff]
  %v93 = vld [vmem:[%s1 + $0x108] sm:$0xff]
  %v94 = vld [vmem:[%s1 + $0x110] sm:$0xff]
  %v95 = vld [vmem:[%s1 + $0x118] sm:$0xff]
  %v96 = vld [vmem:[%s1 + $0x120] sm:$0xff]
  %v97 = vld [vmem:[%s1 + $0x128] sm:$0xff]
  %v98 = vld [vmem:[%s1 + $0x130] sm:$0xff]
  %v99 = vld [vmem:[%s1 + $0x138] sm:$0xff]
  %v100 = vld [vmem:[%s1 + $0x140] sm:$0xff]
  %v101 = vld [vmem:[%s1 + $0x148] sm:$0xff]
  %v102 = vld [vmem:[%s1 + $0x150] sm:$0xff]
  %v103 = vld [vmem:[%s1 + $0x158] sm:$0xff]
  %v104 = vld [vmem:[%s1 + $0x160] sm:$0xff]
  %v105 = vld [vmem:[%s1 + $0x168] sm:$0xff]
  %v106 = vld [vmem:[%s1 + $0x170] sm:$0xff]
  %v107 = vld [vmem:[%s1 + $0x178] sm:$0xff]
  %v108 = vld [vmem:[%s1 + $0x180] sm:$0xff]
  %v109 = vld [vmem:[%s1 + $0x188] sm:$0xff]
  %v110 = vld [vmem:[%s1 + $0x190] sm:$0xff]
  %v111 = vld [vmem:[%s1 + $0x198] sm:$0xff]
  %v112 = vld [vmem:[%s1 + $0x1a0] sm:$0xff]
  %v113 = vld [vmem:[%s1 + $0x1a8] sm:$0xff]
  %v114 = vld [vmem:[%s1 + $0x1b0] sm:$0xff]
  %v115 = vld [vmem:[%s1 + $0x1b8] sm:$0xff]
  %v116 = vld [vmem:[%s1 + $0x1c0] sm:$0xff]
  %v117 = vld [vmem:[%s1 + $0x1c8] sm:$0xff]
  %v118 = vld [vmem:[%s1 + $0x1d0] sm:$0xff]
  %v119 = vld [vmem:[%s1 + $0x1d8] sm:$0xff]
  %v120 = vld [vmem:[%s1 + $0x1e0] sm:$0xff]
  %v121 = vld [vmem:[%s1 + $0x1e8] sm:$0xff]
  %v122 = vld [vmem:[%s1 + $0x1f0] sm:$0xff]
  %v123 = vld [vmem:[%s1 + $0x1f8] sm:$0xff]
  %v124 = vld [vmem:[%s1 + $0x200] sm:$0xff]
  %v125 = vld [vmem:[%s1 + $0x208] sm:$0xff]
  %v126 = vld [vmem:[%s1 + $0x210] sm:$0xff]
  %v127 = vld [vmem:[%s1 + $0x218] sm:$0xff]
  %v128 = vld [vmem:[%s1 + $0x220] sm:$0xff]
  %v129 = vld [vmem:[%s1 + $0x228] sm:$0xff]
  %v130 = vld [vmem:[%s1 + $0x230] sm:$0xff]
  %v131 = vld [vmem:[%s1 + $0x238] sm:$0xff]
  %v132 = vld [vmem:[%s1 + $0x240] sm:$0xff]
  %v133 = vld [vmem:[%s1 + $0x248] sm:$0xff]
  %v134 = vld [vmem:[%s1 + $0x250] sm:$0xff]
  %v135 = vld [vmem:[%s1 + $0x258] sm:$0xff]
  %v136 = vld [vmem:[%s1 + $0x260] sm:$0xff]
  %v137 = vld [vmem:[%s1 + $0x268] sm:$0xff]
  %v138 = vld [vmem:[%s1 + $0x270] sm:$0xff]
  %v139 = vld [vmem:[%s1 + $0x278] sm:$0xff]
  %v140 = vld [vmem:[%s1 + $0x280] sm:$0xff]
  %v141 = vld [vmem:[%s1 + $0x288] sm:$0xff]
  %v142 = vld [vmem:[%s1 + $0x290] sm:$0xff]
  %v143 = vld [vmem:[%s1 + $0x298] sm:$0xff]
  %v144 = vld [vmem:[%s1 + $0x2a0] sm:$0xff]
  %v145 = vld [vmem:[%s1 + $0x2a8] sm:$0xff]
  %v146 = vld [vmem:[%s1 + $0x2b0] sm:$0xff]
  %v147 = vld [vmem:[%s1 + $0x2b8] sm:$0xff]
  %v148 = vld [vmem:[%s1 + $0x2c0] sm:$0xff]
  %v149 = vld [vmem:[%s1 + $0x2c8] sm:$0xff]
  %v150 = vld [vmem:[%s1 + $0x2d0] sm:$0xff]
  %v151 = vld [vmem:[%s1 + $0x2d8] sm:$0xff]
  %v152 = vld [vmem:[%s1 + $0x2e0] sm:$0xff]
  %v153 = vld [vmem:[%s1 + $0x2e8] sm:$0xff]
  %v154 = vld [vmem:[%s1 + $0x2f0] sm:$0xff]
  %v155 = vld [vmem:[%s1 + $0x2f8] sm:$0xff]
  %v156 = vld [vmem:[%s1 + $0x300] sm:$0xff]
  %v157 = vld [vmem:[%s1 + $0x308] sm:$0xff]
  %v158 = vld [vmem:[%s1 + $0x310] sm:$0xff]
  %v159 = vld [vmem:[%s1 + $0x318] sm:$0xff]
  %v160 = vld [vmem:[%s1 + $0x320] sm:$0xff]
  %v161 = vld [vmem:[%s1 + $0x328] sm:$0xff]
  %v162 = vld [vmem:[%s1 + $0x330] sm:$0xff]
  %v163 = vld [vmem:[%s1 + $0x338] sm:$0xff]
  %v164 = vld [vmem:[%s1 + $0x340] sm:$0xff]
  %v165 = vld [vmem:[%s1 + $0x348] sm:$0xff]
  %v166 = vld [vmem:[%s1 + $0x350] sm:$0xff]
  %v167 = vld [vmem:[%s1 + $0x358] sm:$0xff]
  %v168 = vld [vmem:[%s1 + $0x360] sm:$0xff]
  %v169 = vld [vmem:[%s1 + $0x368] sm:$0xff]
  %v170 = vld [vmem:[%s1 + $0x370] sm:$0xff]
  %v171 = vld [vmem:[%s1 + $0x378] sm:$0xff]
  %v172 = vld [vmem:[%s1 + $0x380] sm:$0xff]
  %v173 = vld [vmem:[%s1 + $0x388] sm:$0xff]
  %v174 = vld [vmem:[%s1 + $0x390] sm:$0xff]
  %v175 = vld [vmem:[%s1 + $0x398] sm:$0xff]
  %v176 = vld [vmem:[%s1 + $0x3a0] sm:$0xff]
  %v177 = vld [vmem:[%s1 + $0x3a8] sm:$0xff]
  %v178 = vld [vmem:[%s1 + $0x3b0] sm:$0xff]
  %v179 = vld [vmem:[%s1 + $0x3b8] sm:$0xff]
  %v180 = vld [vmem:[%s1 + $0x3c0] sm:$0xff]
  %v181 = vld [vmem:[%s1 + $0x3c8] sm:$0xff]
  %v182 = vld [vmem:[%s1 + $0x3d0] sm:$0xff]
  %v183 = vld [vmem:[%s1 + $0x3d8] sm:$0xff]
  %v184 = vld [vmem:[%s1 + $0x3e0] sm:$0xff]
  %v185 = vld [vmem:[%s1 + $0x3e8] sm:$0xff]
  %v186 = vld [vmem:[%s1 + $0x3f0] sm:$0xff]
  %v187 = vld [vmem:[%s1 + $0x3f8] sm:$0xff]
  %v188 = vld [vmem:[%s1 + $0x400] sm:$0xff]
  %v189 = vld [vmem:[%s1 + $0x408] sm:$0xff]
  %v190 = vld [vmem:[%s1 + $0x410] sm:$0xff]
  %v191 = vld [vmem:[%s1 + $0x418] sm:$0xff]
  %v192 = vld [vmem:[%s1 + $0x420] sm:$0xff]
  %v193 = vld [vmem:[%s1 + $0x428] sm:$0xff]
  %v194 = vld [vmem:[%s1 + $0x430] sm:$0xff]
  %v195 = vld [vmem:[%s1 + $0x438] sm:$0xff]
  %v196 = vld [vmem:[%s1 + $0x440] sm:$0xff]
  %v197 = vld [vmem:[%s1 + $0x448] sm:$0xff]
  %v198 = vld [vmem:[%s1 + $0x450] sm:$0xff]
  %v199 = vld [vmem:[%s1 + $0x458] sm:$0xff]
  %v200 = vld [vmem:[%s1 + $0x460] sm:$0xff]
  %v201 = vld [vmem:[%s1 + $0x468] sm:$0xff]
  %v202 = vld [vmem:[%s1 + $0x470] sm:$0xff]
  %v203 = vld [vmem:[%s1 + $0x478] sm:$0xff]
  %v204 = vld [vmem:[%s1 + $0x480] sm:$0xff]
  %v205 = vld [vmem:[%s1 + $0x488] sm:$0xff]
  %v206 = vld [vmem:[%s1 + $0x490] sm:$0xff]
  %v207 = vld [vmem:[%s1 + $0x498] sm:$0xff]
  %v208 = vld [vmem:[%s1 + $0x4a0] sm:$0xff]
  %v209 = vld [vmem:[%s1 + $0x4a8] sm:$0xff]
  %v210 = vld [vmem:[%s1 + $0x4b0] sm:$0xff]
  %v211 = vld [vmem:[%s1 + $0x4b8] sm:$0xff]
  %v212 = vld [vmem:[%s1 + $0x4c0] sm:$0xff]
  %v213 = vld [vmem:[%s1 + $0x4c8] sm:$0xff]
  %v214 = vld [vmem:[%s1 + $0x4d0] sm:$0xff]
  %v215 = vld [vmem:[%s1 + $0x4d8] sm:$0xff]
  %v216 = vld [vmem:[%s1 + $0x4e0] sm:$0xff]
  %v217 = vld [vmem:[%s1 + $0x4e8] sm:$0xff]
  %v218 = vld [vmem:[%s1 + $0x4f0] sm:$0xff]
  %v219 = vld [vmem:[%s1 + $0x4f8] sm:$0xff]
  %v220 = vld [vmem:[%s1 + $0x500] sm:$0xff]
  %v221 = vld [vmem:[%s1 + $0x508] sm:$0xff]
  %v222 = vld [vmem:[%s1 + $0x510] sm:$0xff]
  %v223 = vld [vmem:[%s1 + $0x518] sm:$0xff]
  %v224 = vld [vmem:[%s1 + $0x520] sm:$0xff]
  %v225 = vld [vmem:[%s1 + $0x528] sm:$0xff]
  %v226 = vld [vmem:[%s1 + $0x530] sm:$0xff]
  %v227 = vld [vmem:[%s1 + $0x538] sm:$0xff]
  %v228 = vld [vmem:[%s1 + $0x540] sm:$0xff]
  %v229 = vld [vmem:[%s1 + $0x548] sm:$0xff]
  %v230 = vld [vmem:[%s1 + $0x550] sm:$0xff]
  %v231 = vld [vmem:[%s1 + $0x558] sm:$0xff]
  %v232 = vld [vmem:[%s1 + $0x560] sm:$0xff]
  %v233 = vld [vmem:[%s1 + $0x568] sm:$0xff]
  %v234 = vld [vmem:[%s1 + $0x570] sm:$0xff]
  %v235 = vld [vmem:[%s1 + $0x578] sm:$0xff]
  %v236 = vld [vmem:[%s1 + $0x580] sm:$0xff]
  %v237 = vld [vmem:[%s1 + $0x588] sm:$0xff]
  %v238 = vld [vmem:[%s1 + $0x590] sm:$0xff]
  %v239 = vld [vmem:[%s1 + $0x598] sm:$0xff]
  %v240 = vld [vmem:[%s1 + $0x5a0] sm:$0xff]
  %v241 = vld [vmem:[%s1 + $0x5a8] sm:$0xff]
  %v242 = vld [vmem:[%s1 + $0x5b0] sm:$0xff]
  %v243 = vld [vmem:[%s1 + $0x5b8] sm:$0xff]
  %v244 = vld [vmem:[%s1 + $0x5c0] sm:$0xff]
  %v245 = vld [vmem:[%s1 + $0x5c8] sm:$0xff]
  %v246 = vld [vmem:[%s1 + $0x5d0] sm:$0xff]
  %v247 = vld [vmem:[%s1 + $0x5d8] sm:$0xff]
  %v248 = vld [vmem:[%s1 + $0x5e0] sm:$0xff]
  %v249 = vld [vmem:[%s1 + $0x5e8] sm:$0xff]
  %v250 = vld [vmem:[%s1 + $0x5f0] sm:$0xff]
  %v251 = vld [vmem:[%s1 + $0x5f8] sm:$0xff]
  %v252 = vld [vmem:[%s1 + $0x600] sm:$0xff]
  %v253 = vld [vmem:[%s1 + $0x608] sm:$0xff]
  %v254 = vld [vmem:[%s1 + $0x610] sm:$0xff]
  %v255 = vld [vmem:[%s1 + $0x618] sm:$0xff]
  %v256 = vld [vmem:[%s2] sm:$0xf]
  %v258 = vlaneseq
  %v259 = vshrl.u32 %v258, 7
  %v260 = vsub.s32 0, %v259
  %v261 = vrot.slane %v256, %v260
  %v262 = vlaneseq
  %v263 = vshrl.u32 %v262, 7
  %v264 = vsub.s32 1, %v263
  %v265 = vrot.slane %v256, %v264
  %v266 = vlaneseq
  %v267 = vshrl.u32 %v266, 7
  %v268 = vsub.s32 2, %v267
  %v269 = vrot.slane %v256, %v268
  %v270 = vlaneseq
  %v271 = vshrl.u32 %v270, 7
  %v272 = vsub.s32 3, %v271
  %v273 = vrot.slane %v256, %v272
  %v474 = vunpack.c.l.b16 %v60
  %v475 = vunpack.c.h.b16 %v60
  %v476 = vunpack.c.l.b16 %v61
  %v477 = vunpack.c.h.b16 %v61
  %v478 = vunpack.c.l.b16 %v62
  %v479 = vunpack.c.h.b16 %v62
  %v480 = vunpack.c.l.b16 %v63
  %v481 = vunpack.c.h.b16 %v63
  %v482 = vunpack.c.l.b16 %v64
  %v483 = vunpack.c.h.b16 %v64
  %v484 = vunpack.c.l.b16 %v65
  %v485 = vunpack.c.h.b16 %v65
  %v486 = vunpack.c.l.b16 %v66
  %v487 = vunpack.c.h.b16 %v66
  %v488 = vunpack.c.l.b16 %v67
  %v489 = vunpack.c.h.b16 %v67
  %v490 = vunpack.c.l.b16 %v68
  %v491 = vunpack.c.h.b16 %v68
  %v492 = vunpack.c.l.b16 %v69
  %v493 = vunpack.c.h.b16 %v69
  %v494 = vunpack.c.l.b16 %v70
  %v495 = vunpack.c.h.b16 %v70
  %v496 = vunpack.c.l.b16 %v71
  %v497 = vunpack.c.h.b16 %v71
  %v498 = vunpack.c.l.b16 %v72
  %v499 = vunpack.c.h.b16 %v72
  %v500 = vunpack.c.l.b16 %v73
  %v501 = vunpack.c.h.b16 %v73
  %v502 = vunpack.c.l.b16 %v74
  %v503 = vunpack.c.h.b16 %v74
  %v504 = vunpack.c.l.b16 %v75
  %v505 = vunpack.c.h.b16 %v75
  %v506 = vunpack.c.l.b16 %v76
  %v507 = vunpack.c.h.b16 %v76
  %v508 = vunpack.c.l.b16 %v77
  %v509 = vunpack.c.h.b16 %v77
  %v510 = vunpack.c.l.b16 %v78
  %v511 = vunpack.c.h.b16 %v78
  %v512 = vunpack.c.l.b16 %v79
  %v513 = vunpack.c.h.b16 %v79
  %v514 = vunpack.c.l.b16 %v80
  %v515 = vunpack.c.h.b16 %v80
  %v516 = vunpack.c.l.b16 %v81
  %v517 = vunpack.c.h.b16 %v81
  %v518 = vunpack.c.l.b16 %v82
  %v519 = vunpack.c.h.b16 %v82
  %v520 = vunpack.c.l.b16 %v83
  %v521 = vunpack.c.h.b16 %v83
  %v522 = vunpack.c.l.b16 %v84
  %v523 = vunpack.c.h.b16 %v84
  %v524 = vunpack.c.l.b16 %v85
  %v525 = vunpack.c.h.b16 %v85
  %v526 = vunpack.c.l.b16 %v86
  %v527 = vunpack.c.h.b16 %v86
  %v528 = vunpack.c.l.b16 %v87
  %v529 = vunpack.c.h.b16 %v87
  %v530 = vunpack.c.l.b16 %v88
  %v531 = vunpack.c.h.b16 %v88
  %v532 = vunpack.c.l.b16 %v89
  %v533 = vunpack.c.h.b16 %v89
  %v534 = vunpack.c.l.b16 %v90
  %v535 = vunpack.c.h.b16 %v90
  %v536 = vunpack.c.l.b16 %v91
  %v537 = vunpack.c.h.b16 %v91
  %v538 = vunpack.c.l.b16 %v92
  %v539 = vunpack.c.h.b16 %v92
  %v540 = vunpack.c.l.b16 %v93
  %v541 = vunpack.c.h.b16 %v93
  %v542 = vunpack.c.l.b16 %v94
  %v543 = vunpack.c.h.b16 %v94
  %v544 = vunpack.c.l.b16 %v95
  %v545 = vunpack.c.h.b16 %v95
  %v546 = vunpack.c.l.b16 %v96
  %v547 = vunpack.c.h.b16 %v96
  %v548 = vunpack.c.l.b16 %v97
  %v549 = vunpack.c.h.b16 %v97
  %v550 = vunpack.c.l.b16 %v98
  %v551 = vunpack.c.h.b16 %v98
  %v552 = vunpack.c.l.b16 %v99
  %v553 = vunpack.c.h.b16 %v99
  %v554 = vunpack.c.l.b16 %v100
  %v555 = vunpack.c.h.b16 %v100
  %v556 = vunpack.c.l.b16 %v101
  %v557 = vunpack.c.h.b16 %v101
  %v558 = vunpack.c.l.b16 %v102
  %v559 = vunpack.c.h.b16 %v102
  %v560 = vunpack.c.l.b16 %v103
  %v561 = vunpack.c.h.b16 %v103
  %v562 = vunpack.c.l.b16 %v104
  %v563 = vunpack.c.h.b16 %v104
  %v564 = vunpack.c.l.b16 %v105
  %v565 = vunpack.c.h.b16 %v105
  %v566 = vunpack.c.l.b16 %v106
  %v567 = vunpack.c.h.b16 %v106
  %v568 = vunpack.c.l.b16 %v107
  %v569 = vunpack.c.h.b16 %v107
  %v570 = vunpack.c.l.b16 %v108
  %v571 = vunpack.c.h.b16 %v108
  %v572 = vunpack.c.l.b16 %v109
  %v573 = vunpack.c.h.b16 %v109
  %v574 = vunpack.c.l.b16 %v110
  %v575 = vunpack.c.h.b16 %v110
  %v576 = vunpack.c.l.b16 %v111
  %v577 = vunpack.c.h.b16 %v111
  %v578 = vunpack.c.l.b16 %v112
  %v579 = vunpack.c.h.b16 %v112
  %v580 = vunpack.c.l.b16 %v113
  %v581 = vunpack.c.h.b16 %v113
  %v582 = vunpack.c.l.b16 %v114
  %v583 = vunpack.c.h.b16 %v114
  %v584 = vunpack.c.l.b16 %v115
  %v585 = vunpack.c.h.b16 %v115
  %v586 = vunpack.c.l.b16 %v116
  %v587 = vunpack.c.h.b16 %v116
  %v588 = vunpack.c.l.b16 %v117
  %v589 = vunpack.c.h.b16 %v117
  %v590 = vunpack.c.l.b16 %v118
  %v591 = vunpack.c.h.b16 %v118
  %v592 = vunpack.c.l.b16 %v119
  %v593 = vunpack.c.h.b16 %v119
  %v594 = vunpack.c.l.b16 %v120
  %v595 = vunpack.c.h.b16 %v120
  %v596 = vunpack.c.l.b16 %v121
  %v597 = vunpack.c.h.b16 %v121
  %v598 = vunpack.c.l.b16 %v122
  %v599 = vunpack.c.h.b16 %v122
  %v600 = vunpack.c.l.b16 %v123
  %v601 = vunpack.c.h.b16 %v123
  %v602 = vunpack.c.l.b16 %v124
  %v603 = vunpack.c.h.b16 %v124
  %v604 = vunpack.c.l.b16 %v125
  %v605 = vunpack.c.h.b16 %v125
  %v606 = vunpack.c.l.b16 %v126
  %v607 = vunpack.c.h.b16 %v126
  %v608 = vunpack.c.l.b16 %v127
  %v609 = vunpack.c.h.b16 %v127
  %v610 = vunpack.c.l.b16 %v128
  %v611 = vunpack.c.h.b16 %v128
  %v612 = vunpack.c.l.b16 %v129
  %v613 = vunpack.c.h.b16 %v129
  %v614 = vunpack.c.l.b16 %v130
  %v615 = vunpack.c.h.b16 %v130
  %v616 = vunpack.c.l.b16 %v131
  %v617 = vunpack.c.h.b16 %v131
  %v618 = vunpack.c.l.b16 %v132
  %v619 = vunpack.c.h.b16 %v132
  %v620 = vunpack.c.l.b16 %v133
  %v621 = vunpack.c.h.b16 %v133
  %v622 = vunpack.c.l.b16 %v134
  %v623 = vunpack.c.h.b16 %v134
  %v624 = vunpack.c.l.b16 %v135
  %v625 = vunpack.c.h.b16 %v135
  %v626 = vunpack.c.l.b16 %v136
  %v627 = vunpack.c.h.b16 %v136
  %v628 = vunpack.c.l.b16 %v137
  %v629 = vunpack.c.h.b16 %v137
  %v630 = vunpack.c.l.b16 %v138
  %v631 = vunpack.c.h.b16 %v138
  %v632 = vunpack.c.l.b16 %v139
  %v633 = vunpack.c.h.b16 %v139
  %v634 = vunpack.c.l.b16 %v140
  %v635 = vunpack.c.h.b16 %v140
  %v636 = vunpack.c.l.b16 %v141
  %v637 = vunpack.c.h.b16 %v141
  %v638 = vunpack.c.l.b16 %v142
  %v639 = vunpack.c.h.b16 %v142
  %v640 = vunpack.c.l.b16 %v143
  %v641 = vunpack.c.h.b16 %v143
  %v642 = vunpack.c.l.b16 %v144
  %v643 = vunpack.c.h.b16 %v144
  %v644 = vunpack.c.l.b16 %v145
  %v645 = vunpack.c.h.b16 %v145
  %v646 = vunpack.c.l.b16 %v146
  %v647 = vunpack.c.h.b16 %v146
  %v648 = vunpack.c.l.b16 %v147
  %v649 = vunpack.c.h.b16 %v147
  %v650 = vunpack.c.l.b16 %v148
  %v651 = vunpack.c.h.b16 %v148
  %v652 = vunpack.c.l.b16 %v149
  %v653 = vunpack.c.h.b16 %v149
  %v654 = vunpack.c.l.b16 %v150
  %v655 = vunpack.c.h.b16 %v150
  %v656 = vunpack.c.l.b16 %v151
  %v657 = vunpack.c.h.b16 %v151
  %v658 = vunpack.c.l.b16 %v152
  %v659 = vunpack.c.h.b16 %v152
  %v660 = vunpack.c.l.b16 %v153
  %v661 = vunpack.c.h.b16 %v153
  %v662 = vunpack.c.l.b16 %v154
  %v663 = vunpack.c.h.b16 %v154
  %v664 = vunpack.c.l.b16 %v155
  %v665 = vunpack.c.h.b16 %v155
  %v666 = vunpack.c.l.b16 %v156
  %v667 = vunpack.c.h.b16 %v156
  %v668 = vunpack.c.l.b16 %v157
  %v669 = vunpack.c.h.b16 %v157
  %v670 = vunpack.c.l.b16 %v158
  %v671 = vunpack.c.h.b16 %v158
  %v672 = vunpack.c.l.b16 %v159
  %v673 = vunpack.c.h.b16 %v159
  %v674 = vunpack.c.l.b16 %v160
  %v675 = vunpack.c.h.b16 %v160
  %v676 = vunpack.c.l.b16 %v161
  %v677 = vunpack.c.h.b16 %v161
  %v678 = vunpack.c.l.b16 %v162
  %v679 = vunpack.c.h.b16 %v162
  %v680 = vunpack.c.l.b16 %v163
  %v681 = vunpack.c.h.b16 %v163
  %v682 = vunpack.c.l.b16 %v164
  %v683 = vunpack.c.h.b16 %v164
  %v684 = vunpack.c.l.b16 %v165
  %v685 = vunpack.c.h.b16 %v165
  %v686 = vunpack.c.l.b16 %v166
  %v687 = vunpack.c.h.b16 %v166
  %v688 = vunpack.c.l.b16 %v167
  %v689 = vunpack.c.h.b16 %v167
  %v690 = vunpack.c.l.b16 %v168
  %v691 = vunpack.c.h.b16 %v168
  %v692 = vunpack.c.l.b16 %v169
  %v693 = vunpack.c.h.b16 %v169
  %v694 = vunpack.c.l.b16 %v170
  %v695 = vunpack.c.h.b16 %v170
  %v696 = vunpack.c.l.b16 %v171
  %v697 = vunpack.c.h.b16 %v171
  %v698 = vunpack.c.l.b16 %v172
  %v699 = vunpack.c.h.b16 %v172
  %v700 = vunpack.c.l.b16 %v173
  %v701 = vunpack.c.h.b16 %v173
  %v702 = vunpack.c.l.b16 %v174
  %v703 = vunpack.c.h.b16 %v174
  %v704 = vunpack.c.l.b16 %v175
  %v705 = vunpack.c.h.b16 %v175
  %v706 = vunpack.c.l.b16 %v176
  %v707 = vunpack.c.h.b16 %v176
  %v708 = vunpack.c.l.b16 %v177
  %v709 = vunpack.c.h.b16 %v177
  %v710 = vunpack.c.l.b16 %v178
  %v711 = vunpack.c.h.b16 %v178
  %v712 = vunpack.c.l.b16 %v179
  %v713 = vunpack.c.h.b16 %v179
  %v714 = vunpack.c.l.b16 %v180
  %v715 = vunpack.c.h.b16 %v180
  %v716 = vunpack.c.l.b16 %v181
  %v717 = vunpack.c.h.b16 %v181
  %v718 = vunpack.c.l.b16 %v182
  %v719 = vunpack.c.h.b16 %v182
  %v720 = vunpack.c.l.b16 %v183
  %v721 = vunpack.c.h.b16 %v183
  %v722 = vunpack.c.l.b16 %v184
  %v723 = vunpack.c.h.b16 %v184
  %v724 = vunpack.c.l.b16 %v185
  %v725 = vunpack.c.h.b16 %v185
  %v726 = vunpack.c.l.b16 %v186
  %v727 = vunpack.c.h.b16 %v186
  %v728 = vunpack.c.l.b16 %v187
  %v729 = vunpack.c.h.b16 %v187
  %v730 = vunpack.c.l.b16 %v188
  %v731 = vunpack.c.h.b16 %v188
  %v732 = vunpack.c.l.b16 %v189
  %v733 = vunpack.c.h.b16 %v189
  %v734 = vunpack.c.l.b16 %v190
  %v735 = vunpack.c.h.b16 %v190
  %v736 = vunpack.c.l.b16 %v191
  %v737 = vunpack.c.h.b16 %v191
  %v738 = vunpack.c.l.b16 %v192
  %v739 = vunpack.c.h.b16 %v192
  %v740 = vunpack.c.l.b16 %v193
  %v741 = vunpack.c.h.b16 %v193
  %v742 = vunpack.c.l.b16 %v194
  %v743 = vunpack.c.h.b16 %v194
  %v744 = vunpack.c.l.b16 %v195
  %v745 = vunpack.c.h.b16 %v195
  %v746 = vunpack.c.l.b16 %v196
  %v747 = vunpack.c.h.b16 %v196
  %v748 = vunpack.c.l.b16 %v197
  %v749 = vunpack.c.h.b16 %v197
  %v750 = vunpack.c.l.b16 %v198
  %v751 = vunpack.c.h.b16 %v198
  %v752 = vunpack.c.l.b16 %v199
  %v753 = vunpack.c.h.b16 %v199
  %v754 = vunpack.c.l.b16 %v200
  %v755 = vunpack.c.h.b16 %v200
  %v756 = vunpack.c.l.b16 %v201
  %v757 = vunpack.c.h.b16 %v201
  %v758 = vunpack.c.l.b16 %v202
  %v759 = vunpack.c.h.b16 %v202
  %v760 = vunpack.c.l.b16 %v203
  %v761 = vunpack.c.h.b16 %v203
  %v762 = vunpack.c.l.b16 %v204
  %v763 = vunpack.c.h.b16 %v204
  %v764 = vunpack.c.l.b16 %v205
  %v765 = vunpack.c.h.b16 %v205
  %v766 = vunpack.c.l.b16 %v206
  %v767 = vunpack.c.h.b16 %v206
  %v768 = vunpack.c.l.b16 %v207
  %v769 = vunpack.c.h.b16 %v207
  %v770 = vunpack.c.l.b16 %v208
  %v771 = vunpack.c.h.b16 %v208
  %v772 = vunpack.c.l.b16 %v209
  %v773 = vunpack.c.h.b16 %v209
  %v774 = vunpack.c.l.b16 %v210
  %v775 = vunpack.c.h.b16 %v210
  %v776 = vunpack.c.l.b16 %v211
  %v777 = vunpack.c.h.b16 %v211
  %v778 = vunpack.c.l.b16 %v212
  %v779 = vunpack.c.h.b16 %v212
  %v780 = vunpack.c.l.b16 %v213
  %v781 = vunpack.c.h.b16 %v213
  %v782 = vunpack.c.l.b16 %v214
  %v783 = vunpack.c.h.b16 %v214
  %v784 = vunpack.c.l.b16 %v215
  %v785 = vunpack.c.h.b16 %v215
  %v786 = vunpack.c.l.b16 %v216
  %v787 = vunpack.c.h.b16 %v216
  %v788 = vunpack.c.l.b16 %v217
  %v789 = vunpack.c.h.b16 %v217
  %v790 = vunpack.c.l.b16 %v218
  %v791 = vunpack.c.h.b16 %v218
  %v792 = vunpack.c.l.b16 %v219
  %v793 = vunpack.c.h.b16 %v219
  %v794 = vunpack.c.l.b16 %v220
  %v795 = vunpack.c.h.b16 %v220
  %v796 = vunpack.c.l.b16 %v221
  %v797 = vunpack.c.h.b16 %v221
  %v798 = vunpack.c.l.b16 %v222
  %v799 = vunpack.c.h.b16 %v222
  %v800 = vunpack.c.l.b16 %v223
  %v801 = vunpack.c.h.b16 %v223
  %v802 = vunpack.c.l.b16 %v224
  %v803 = vunpack.c.h.b16 %v224
  %v804 = vunpack.c.l.b16 %v225
  %v805 = vunpack.c.h.b16 %v225
  %v806 = vunpack.c.l.b16 %v226
  %v807 = vunpack.c.h.b16 %v226
  %v808 = vunpack.c.l.b16 %v227
  %v809 = vunpack.c.h.b16 %v227
  %v810 = vunpack.c.l.b16 %v228
  %v811 = vunpack.c.h.b16 %v228
  %v812 = vunpack.c.l.b16 %v229
  %v813 = vunpack.c.h.b16 %v229
  %v814 = vunpack.c.l.b16 %v230
  %v815 = vunpack.c.h.b16 %v230
  %v816 = vunpack.c.l.b16 %v231
  %v817 = vunpack.c.h.b16 %v231
  %v818 = vunpack.c.l.b16 %v232
  %v819 = vunpack.c.h.b16 %v232
  %v820 = vunpack.c.l.b16 %v233
  %v821 = vunpack.c.h.b16 %v233
  %v822 = vunpack.c.l.b16 %v234
  %v823 = vunpack.c.h.b16 %v234
  %v824 = vunpack.c.l.b16 %v235
  %v825 = vunpack.c.h.b16 %v235
  %v826 = vunpack.c.l.b16 %v236
  %v827 = vunpack.c.h.b16 %v236
  %v828 = vunpack.c.l.b16 %v237
  %v829 = vunpack.c.h.b16 %v237
  %v830 = vunpack.c.l.b16 %v238
  %v831 = vunpack.c.h.b16 %v238
  %v832 = vunpack.c.l.b16 %v239
  %v833 = vunpack.c.h.b16 %v239
  %v834 = vunpack.c.l.b16 %v240
  %v835 = vunpack.c.h.b16 %v240
  %v836 = vunpack.c.l.b16 %v241
  %v837 = vunpack.c.h.b16 %v241
  %v838 = vunpack.c.l.b16 %v242
  %v839 = vunpack.c.h.b16 %v242
  %v840 = vunpack.c.l.b16 %v243
  %v841 = vunpack.c.h.b16 %v243
  %v842 = vunpack.c.l.b16 %v244
  %v843 = vunpack.c.h.b16 %v244
  %v844 = vunpack.c.l.b16 %v245
  %v845 = vunpack.c.h.b16 %v245
  %v846 = vunpack.c.l.b16 %v246
  %v847 = vunpack.c.h.b16 %v246
  %v848 = vunpack.c.l.b16 %v247
  %v849 = vunpack.c.h.b16 %v247
  %v850 = vunpack.c.l.b16 %v248
  %v851 = vunpack.c.h.b16 %v248
  %v852 = vunpack.c.l.b16 %v249
  %v853 = vunpack.c.h.b16 %v249
  %v854 = vunpack.c.l.b16 %v250
  %v855 = vunpack.c.h.b16 %v250
  %v856 = vunpack.c.l.b16 %v251
  %v857 = vunpack.c.h.b16 %v251
  %v858 = vunpack.c.l.b16 %v252
  %v859 = vunpack.c.h.b16 %v252
  %v860 = vunpack.c.l.b16 %v253
  %v861 = vunpack.c.h.b16 %v253
  %v862 = vunpack.c.l.b16 %v254
  %v863 = vunpack.c.h.b16 %v254
  %v864 = vunpack.c.l.b16 %v255
  %v865 = vunpack.c.h.b16 %v255
  %v866 = vpack.c.b16 %v478, %v474
  %v867 = vpack.c.b16 %v479, %v475
  %v868 = vpack.c.b16 %v480, %v476
  %v869 = vpack.c.b16 %v481, %v477
  %v870 = vpack.c.b16 %v486, %v482
  %v871 = vpack.c.b16 %v487, %v483
  %v872 = vpack.c.b16 %v488, %v484
  %v873 = vpack.c.b16 %v489, %v485
  %v874 = vpack.c.b16 %v494, %v490
  %v875 = vpack.c.b16 %v495, %v491
  %v876 = vpack.c.b16 %v496, %v492
  %v877 = vpack.c.b16 %v497, %v493
  %v878 = vpack.c.b16 %v502, %v498
  %v879 = vpack.c.b16 %v503, %v499
  %v880 = vpack.c.b16 %v504, %v500
  %v881 = vpack.c.b16 %v505, %v501
  %v882 = vpack.c.b16 %v510, %v506
  %v883 = vpack.c.b16 %v511, %v507
  %v884 = vpack.c.b16 %v512, %v508
  %v885 = vpack.c.b16 %v513, %v509
  %v886 = vpack.c.b16 %v518, %v514
  %v887 = vpack.c.b16 %v519, %v515
  %v888 = vpack.c.b16 %v520, %v516
  %v889 = vpack.c.b16 %v521, %v517
  %v890 = vpack.c.b16 %v526, %v522
  %v891 = vpack.c.b16 %v527, %v523
  %v892 = vpack.c.b16 %v528, %v524
  %v893 = vpack.c.b16 %v529, %v525
  %v894 = vpack.c.b16 %v534, %v530
  %v895 = vpack.c.b16 %v535, %v531
  %v896 = vpack.c.b16 %v536, %v532
  %v897 = vpack.c.b16 %v537, %v533
  %v898 = vpack.c.b16 %v542, %v538
  %v899 = vpack.c.b16 %v543, %v539
  %v900 = vpack.c.b16 %v544, %v540
  %v901 = vpack.c.b16 %v545, %v541
  %v902 = vpack.c.b16 %v550, %v546
  %v903 = vpack.c.b16 %v551, %v547
  %v904 = vpack.c.b16 %v552, %v548
  %v905 = vpack.c.b16 %v553, %v549
  %v906 = vpack.c.b16 %v558, %v554
  %v907 = vpack.c.b16 %v559, %v555
  %v908 = vpack.c.b16 %v560, %v556
  %v909 = vpack.c.b16 %v561, %v557
  %v910 = vpack.c.b16 %v566, %v562
  %v911 = vpack.c.b16 %v567, %v563
  %v912 = vpack.c.b16 %v568, %v564
  %v913 = vpack.c.b16 %v569, %v565
  %v914 = vpack.c.b16 %v574, %v570
  %v915 = vpack.c.b16 %v575, %v571
  %v916 = vpack.c.b16 %v576, %v572
  %v917 = vpack.c.b16 %v577, %v573
  %v918 = vpack.c.b16 %v582, %v578
  %v919 = vpack.c.b16 %v583, %v579
  %v920 = vpack.c.b16 %v584, %v580
  %v921 = vpack.c.b16 %v585, %v581
  %v922 = vpack.c.b16 %v590, %v586
  %v923 = vpack.c.b16 %v591, %v587
  %v924 = vpack.c.b16 %v592, %v588
  %v925 = vpack.c.b16 %v593, %v589
  %v926 = vpack.c.b16 %v598, %v594
  %v927 = vpack.c.b16 %v599, %v595
  %v928 = vpack.c.b16 %v600, %v596
  %v929 = vpack.c.b16 %v601, %v597
  %v930 = vpack.c.b16 %v606, %v602
  %v931 = vpack.c.b16 %v607, %v603
  %v932 = vpack.c.b16 %v608, %v604
  %v933 = vpack.c.b16 %v609, %v605
  %v934 = vpack.c.b16 %v614, %v610
  %v935 = vpack.c.b16 %v615, %v611
  %v936 = vpack.c.b16 %v616, %v612
  %v937 = vpack.c.b16 %v617, %v613
  %v938 = vpack.c.b16 %v622, %v618
  %v939 = vpack.c.b16 %v623, %v619
  %v940 = vpack.c.b16 %v624, %v620
  %v941 = vpack.c.b16 %v625, %v621
  %v942 = vpack.c.b16 %v630, %v626
  %v943 = vpack.c.b16 %v631, %v627
  %v944 = vpack.c.b16 %v632, %v628
  %v945 = vpack.c.b16 %v633, %v629
  %v946 = vpack.c.b16 %v638, %v634
  %v947 = vpack.c.b16 %v639, %v635
  %v948 = vpack.c.b16 %v640, %v636
  %v949 = vpack.c.b16 %v641, %v637
  %v950 = vpack.c.b16 %v646, %v642
  %v951 = vpack.c.b16 %v647, %v643
  %v952 = vpack.c.b16 %v648, %v644
  %v953 = vpack.c.b16 %v649, %v645
  %v954 = vpack.c.b16 %v654, %v650
  %v955 = vpack.c.b16 %v655, %v651
  %v956 = vpack.c.b16 %v656, %v652
  %v957 = vpack.c.b16 %v657, %v653
  %v958 = vpack.c.b16 %v662, %v658
  %v959 = vpack.c.b16 %v663, %v659
  %v960 = vpack.c.b16 %v664, %v660
  %v961 = vpack.c.b16 %v665, %v661
  %v962 = vpack.c.b16 %v670, %v666
  %v963 = vpack.c.b16 %v671, %v667
  %v964 = vpack.c.b16 %v672, %v668
  %v965 = vpack.c.b16 %v673, %v669
  %v966 = vpack.c.b16 %v678, %v674
  %v967 = vpack.c.b16 %v679, %v675
  %v968 = vpack.c.b16 %v680, %v676
  %v969 = vpack.c.b16 %v681, %v677
  %v970 = vpack.c.b16 %v686, %v682
  %v971 = vpack.c.b16 %v687, %v683
  %v972 = vpack.c.b16 %v688, %v684
  %v973 = vpack.c.b16 %v689, %v685
  %v974 = vpack.c.b16 %v694, %v690
  %v975 = vpack.c.b16 %v695, %v691
  %v976 = vpack.c.b16 %v696, %v692
  %v977 = vpack.c.b16 %v697, %v693
  %v978 = vpack.c.b16 %v702, %v698
  %v979 = vpack.c.b16 %v703, %v699
  %v980 = vpack.c.b16 %v704, %v700
  %v981 = vpack.c.b16 %v705, %v701
  %v982 = vpack.c.b16 %v710, %v706
  %v983 = vpack.c.b16 %v711, %v707
  %v984 = vpack.c.b16 %v712, %v708
  %v985 = vpack.c.b16 %v713, %v709
  %v986 = vpack.c.b16 %v718, %v714
  %v987 = vpack.c.b16 %v719, %v715
  %v988 = vpack.c.b16 %v720, %v716
  %v989 = vpack.c.b16 %v721, %v717
  %v990 = vpack.c.b16 %v726, %v722
  %v991 = vpack.c.b16 %v727, %v723
  %v992 = vpack.c.b16 %v728, %v724
  %v993 = vpack.c.b16 %v729, %v725
  %v994 = vpack.c.b16 %v734, %v730
  %v995 = vpack.c.b16 %v735, %v731
  %v996 = vpack.c.b16 %v736, %v732
  %v997 = vpack.c.b16 %v737, %v733
  %v998 = vpack.c.b16 %v742, %v738
  %v999 = vpack.c.b16 %v743, %v739
  %v1000 = vpack.c.b16 %v744, %v740
  %v1001 = vpack.c.b16 %v745, %v741
  %v1002 = vpack.c.b16 %v750, %v746
  %v1003 = vpack.c.b16 %v751, %v747
  %v1004 = vpack.c.b16 %v752, %v748
  %v1005 = vpack.c.b16 %v753, %v749
  %v1006 = vpack.c.b16 %v758, %v754
  %v1007 = vpack.c.b16 %v759, %v755
  %v1008 = vpack.c.b16 %v760, %v756
  %v1009 = vpack.c.b16 %v761, %v757
  %v1010 = vpack.c.b16 %v766, %v762
  %v1011 = vpack.c.b16 %v767, %v763
  %v1012 = vpack.c.b16 %v768, %v764
  %v1013 = vpack.c.b16 %v769, %v765
  %v1014 = vpack.c.b16 %v774, %v770
  %v1015 = vpack.c.b16 %v775, %v771
  %v1016 = vpack.c.b16 %v776, %v772
  %v1017 = vpack.c.b16 %v777, %v773
  %v1018 = vpack.c.b16 %v782, %v778
  %v1019 = vpack.c.b16 %v783, %v779
  %v1020 = vpack.c.b16 %v784, %v780
  %v1021 = vpack.c.b16 %v785, %v781
  %v1022 = vpack.c.b16 %v790, %v786
  %v1023 = vpack.c.b16 %v791, %v787
  %v1024 = vpack.c.b16 %v792, %v788
  %v1025 = vpack.c.b16 %v793, %v789
  %v1026 = vpack.c.b16 %v798, %v794
  %v1027 = vpack.c.b16 %v799, %v795
  %v1028 = vpack.c.b16 %v800, %v796
  %v1029 = vpack.c.b16 %v801, %v797
  %v1030 = vpack.c.b16 %v806, %v802
  %v1031 = vpack.c.b16 %v807, %v803
  %v1032 = vpack.c.b16 %v808, %v804
  %v1033 = vpack.c.b16 %v809, %v805
  %v1034 = vpack.c.b16 %v814, %v810
  %v1035 = vpack.c.b16 %v815, %v811
  %v1036 = vpack.c.b16 %v816, %v812
  %v1037 = vpack.c.b16 %v817, %v813
  %v1038 = vpack.c.b16 %v822, %v818
  %v1039 = vpack.c.b16 %v823, %v819
  %v1040 = vpack.c.b16 %v824, %v820
  %v1041 = vpack.c.b16 %v825, %v821
  %v1042 = vpack.c.b16 %v830, %v826
  %v1043 = vpack.c.b16 %v831, %v827
  %v1044 = vpack.c.b16 %v832, %v828
  %v1045 = vpack.c.b16 %v833, %v829
  %v1046 = vpack.c.b16 %v838, %v834
  %v1047 = vpack.c.b16 %v839, %v835
  %v1048 = vpack.c.b16 %v840, %v836
  %v1049 = vpack.c.b16 %v841, %v837
  %v1050 = vpack.c.b16 %v846, %v842
  %v1051 = vpack.c.b16 %v847, %v843
  %v1052 = vpack.c.b16 %v848, %v844
  %v1053 = vpack.c.b16 %v849, %v845
  %v1054 = vpack.c.b16 %v854, %v850
  %v1055 = vpack.c.b16 %v855, %v851
  %v1056 = vpack.c.b16 %v856, %v852
  %v1057 = vpack.c.b16 %v857, %v853
  %v1058 = vpack.c.b16 %v862, %v858
  %v1059 = vpack.c.b16 %v863, %v859
  %v1060 = vpack.c.b16 %v864, %v860
  %v1061 = vpack.c.b16 %v865, %v861
  %vm1258 = vcmask 130048
  %v1260 = vsel %vm1258, %v59, 0
  %1262 = vmatprep.subr.bf16.mxu0 %v867
  %1263 = vmatpush1.bf16.msra.mxu0 %v866
  %1264 = vmatprep.subr.bf16.mxu0 %v871
  %1265 = vmatpush1.bf16.msra.mxu0 %v870
  %1266 = vmatprep.subr.bf16.mxu0 %v875
  %1267 = vmatpush1.bf16.msra.mxu0 %v874
  %1268 = vmatprep.subr.bf16.mxu0 %v879
  %1269 = vmatpush1.bf16.msra.mxu0 %v878
  %1270 = vmatprep.subr.bf16.mxu0 %v883
  %1271 = vmatpush1.bf16.msra.mxu0 %v882
  %1272 = vmatprep.subr.bf16.mxu0 %v887
  %1273 = vmatpush1.bf16.msra.mxu0 %v886
  %1274 = vmatprep.subr.bf16.mxu0 %v891
  %1275 = vmatpush1.bf16.msra.mxu0 %v890
  %1276 = vmatprep.subr.bf16.mxu0 %v895
  %1277 = vmatpush1.bf16.msra.mxu0 %v894
  %1278 = vmatprep.subr.bf16.mxu0 %v899
  %1279 = vmatpush1.bf16.msra.mxu0 %v898
  %1280 = vmatprep.subr.bf16.mxu0 %v903
  %1281 = vmatpush1.bf16.msra.mxu0 %v902
  %1282 = vmatprep.subr.bf16.mxu0 %v907
  %1283 = vmatpush1.bf16.msra.mxu0 %v906
  %1284 = vmatprep.subr.bf16.mxu0 %v911
  %1285 = vmatpush1.bf16.msra.mxu0 %v910
  %1286 = vmatprep.subr.bf16.mxu0 %v915
  %1287 = vmatpush1.bf16.msra.mxu0 %v914
  %1288 = vmatprep.subr.bf16.mxu0 %v919
  %1289 = vmatpush1.bf16.msra.mxu0 %v918
  %1290 = vmatprep.subr.bf16.mxu0 %v923
  %1291 = vmatpush1.bf16.msra.mxu0 %v922
  %1292 = vmatprep.subr.bf16.mxu0 %v927
  %1293 = vmatpush1.bf16.msra.mxu0 %v926
  %1294 = vmatprep.mubr.bf16.mxu0 %v54
  %1295 = vmatmul.mubr.bf16.gmra.mrb[0].mxu0 %v53
  %v1296 = vpop.f32.mrb[0].mxu0
  %v1297 = vadd.f32 %v261, %v1296
  %v1298 = vpop.f32.mrb[0].mxu0
  %v1299 = vadd.f32 %v265, %v1298
  %v1300 = vpop.f32.mrb[0].mxu0
  %v1301 = vadd.f32 %v261, %v1300
  %v1302 = vpop.f32.mrb[0].mxu0
  %v1303 = vadd.f32 %v265, %v1302
  %1304 = vdwg.mxu0
  %1305 = vmatprep.subr.bf16.mxu0 %v931
  %1306 = vmatpush1.bf16.msra.mxu0 %v930
  %1307 = vmatprep.subr.bf16.mxu0 %v935
  %1308 = vmatpush1.bf16.msra.mxu0 %v934
  %1309 = vmatprep.subr.bf16.mxu0 %v939
  %1310 = vmatpush1.bf16.msra.mxu0 %v938
  %1311 = vmatprep.subr.bf16.mxu0 %v943
  %1312 = vmatpush1.bf16.msra.mxu0 %v942
  %1313 = vmatprep.subr.bf16.mxu0 %v947
  %1314 = vmatpush1.bf16.msra.mxu0 %v946
  %1315 = vmatprep.subr.bf16.mxu0 %v951
  %1316 = vmatpush1.bf16.msra.mxu0 %v950
  %1317 = vmatprep.subr.bf16.mxu0 %v955
  %1318 = vmatpush1.bf16.msra.mxu0 %v954
  %1319 = vmatprep.subr.bf16.mxu0 %v959
  %1320 = vmatpush1.bf16.msra.mxu0 %v958
  %1321 = vmatprep.subr.bf16.mxu0 %v963
  %1322 = vmatpush1.bf16.msra.mxu0 %v962
  %1323 = vmatprep.subr.bf16.mxu0 %v967
  %1324 = vmatpush1.bf16.msra.mxu0 %v966
  %1325 = vmatprep.subr.bf16.mxu0 %v971
  %1326 = vmatpush1.bf16.msra.mxu0 %v970
  %1327 = vmatprep.subr.bf16.mxu0 %v975
  %1328 = vmatpush1.bf16.msra.mxu0 %v974
  %1329 = vmatprep.subr.bf16.mxu0 %v979
  %1330 = vmatpush1.bf16.msra.mxu0 %v978
  %1331 = vmatprep.subr.bf16.mxu0 %v983
  %1332 = vmatpush1.bf16.msra.mxu0 %v982
  %1333 = vmatprep.subr.bf16.mxu0 %v987
  %1334 = vmatpush1.bf16.msra.mxu0 %v986
  %1335 = vmatprep.subr.bf16.mxu0 %v991
  %1336 = vmatpush1.bf16.msra.mxu0 %v990
  %1337 = vmatprep.mubr.bf16.mxu0 %v56
  %1338 = vmatmul.mubr.bf16.gmra.mrb[0].mxu0 %v55
  %v1339 = vpop.f32.mrb[0].mxu0
  %v1340 = vadd.f32 %v1297, %v1339
  %v1341 = vpop.f32.mrb[0].mxu0
  %v1342 = vadd.f32 %v1299, %v1341
  %v1343 = vpop.f32.mrb[0].mxu0
  %v1344 = vadd.f32 %v1301, %v1343
  %v1345 = vpop.f32.mrb[0].mxu0
  %v1346 = vadd.f32 %v1303, %v1345
  %1347 = vdwg.mxu0
  %1348 = vmatprep.subr.bf16.mxu0 %v995
  %1349 = vmatpush1.bf16.msra.mxu0 %v994
  %1350 = vmatprep.subr.bf16.mxu0 %v999
  %1351 = vmatpush1.bf16.msra.mxu0 %v998
  %1352 = vmatprep.subr.bf16.mxu0 %v1003
  %1353 = vmatpush1.bf16.msra.mxu0 %v1002
  %1354 = vmatprep.subr.bf16.mxu0 %v1007
  %1355 = vmatpush1.bf16.msra.mxu0 %v1006
  %1356 = vmatprep.subr.bf16.mxu0 %v1011
  %1357 = vmatpush1.bf16.msra.mxu0 %v1010
  %1358 = vmatprep.subr.bf16.mxu0 %v1015
  %1359 = vmatpush1.bf16.msra.mxu0 %v1014
  %1360 = vmatprep.subr.bf16.mxu0 %v1019
  %1361 = vmatpush1.bf16.msra.mxu0 %v1018
  %1362 = vmatprep.subr.bf16.mxu0 %v1023
  %1363 = vmatpush1.bf16.msra.mxu0 %v1022
  %1364 = vmatprep.subr.bf16.mxu0 %v1027
  %1365 = vmatpush1.bf16.msra.mxu0 %v1026
  %1366 = vmatprep.subr.bf16.mxu0 %v1031
  %1367 = vmatpush1.bf16.msra.mxu0 %v1030
  %1368 = vmatprep.subr.bf16.mxu0 %v1035
  %1369 = vmatpush1.bf16.msra.mxu0 %v1034
  %1370 = vmatprep.subr.bf16.mxu0 %v1039
  %1371 = vmatpush1.bf16.msra.mxu0 %v1038
  %1372 = vmatprep.subr.bf16.mxu0 %v1043
  %1373 = vmatpush1.bf16.msra.mxu0 %v1042
  %1374 = vmatprep.subr.bf16.mxu0 %v1047
  %1375 = vmatpush1.bf16.msra.mxu0 %v1046
  %1376 = vmatprep.subr.bf16.mxu0 %v1051
  %1377 = vmatpush1.bf16.msra.mxu0 %v1050
  %1378 = vmatprep.subr.bf16.mxu0 %v1055
  %1379 = vmatpush1.bf16.msra.mxu0 %v1054
  %1380 = vmatprep.mubr.bf16.mxu0 %v58
  %1381 = vmatmul.mubr.bf16.gmra.mrb[0].mxu0 %v57
  %v1382 = vpop.f32.mrb[0].mxu0
  %v1383 = vadd.f32 %v1340, %v1382
  %v1384 = vpop.f32.mrb[0].mxu0
  %v1385 = vadd.f32 %v1342, %v1384
  %v1386 = vpop.f32.mrb[0].mxu0
  %v1387 = vadd.f32 %v1344, %v1386
  %v1388 = vpop.f32.mrb[0].mxu0
  %v1389 = vadd.f32 %v1346, %v1388
  %1390 = vdwg.mxu0
  %1391 = vmatprep.subr.bf16.mxu0 %v1059
  %1392 = vmatpush1.bf16.msra.mxu0 %v1058
  %1393 = vmatprep.subr.bf16.mxu0 0
  %1394 = vmatpush1.bf16.msra.mxu0 0
  %1395 = vmatprep.subr.bf16.mxu0 0
  %1396 = vmatpush1.bf16.msra.mxu0 0
  %1397 = vmatprep.subr.bf16.mxu0 0
  %1398 = vmatpush1.bf16.msra.mxu0 0
  %1399 = vmatprep.subr.bf16.mxu0 0
  %1400 = vmatpush1.bf16.msra.mxu0 0
  %1401 = vmatprep.subr.bf16.mxu0 0
  %1402 = vmatpush1.bf16.msra.mxu0 0
  %1403 = vmatprep.subr.bf16.mxu0 0
  %1404 = vmatpush1.bf16.msra.mxu0 0
  %1405 = vmatprep.subr.bf16.mxu0 0
  %1406 = vmatpush1.bf16.msra.mxu0 0
  %1407 = vmatprep.subr.bf16.mxu0 0
  %1408 = vmatpush1.bf16.msra.mxu0 0
  %1409 = vmatprep.subr.bf16.mxu0 0
  %1410 = vmatpush1.bf16.msra.mxu0 0
  %1411 = vmatprep.subr.bf16.mxu0 0
  %1412 = vmatpush1.bf16.msra.mxu0 0
  %1413 = vmatprep.subr.bf16.mxu0 0
  %1414 = vmatpush1.bf16.msra.mxu0 0
  %1415 = vmatprep.subr.bf16.mxu0 0
  %1416 = vmatpush1.bf16.msra.mxu0 0
  %1417 = vmatprep.subr.bf16.mxu0 0
  %1418 = vmatpush1.bf16.msra.mxu0 0
  %1419 = vmatprep.subr.bf16.mxu0 0
  %1420 = vmatpush1.bf16.msra.mxu0 0
  %1421 = vmatprep.subr.bf16.mxu0 0
  %1422 = vmatpush1.bf16.msra.mxu0 0
  %1423 = vmatprep.mubr.bf16.mxu0 0
  %1424 = vmatmul.mubr.bf16.gmra.mrb[0].mxu0 %v1260
  %v1425 = vpop.f32.mrb[0].mxu0
  %v1426 = vadd.f32 %v1383, %v1425
  %v1427 = vpop.f32.mrb[0].mxu0
  %v1428 = vadd.f32 %v1385, %v1427
  %v1429 = vpop.f32.mrb[0].mxu0
  %v1430 = vadd.f32 %v1387, %v1429
  %v1431 = vpop.f32.mrb[0].mxu0
  %v1432 = vadd.f32 %v1389, %v1431
  %1433 = vdwg.mxu0
  %1434 = vmatprep.subr.bf16.mxu0 %v869
  %1435 = vmatpush1.bf16.msra.mxu0 %v868
  %1436 = vmatprep.subr.bf16.mxu0 %v873
  %1437 = vmatpush1.bf16.msra.mxu0 %v872
  %1438 = vmatprep.subr.bf16.mxu0 %v877
  %1439 = vmatpush1.bf16.msra.mxu0 %v876
  %1440 = vmatprep.subr.bf16.mxu0 %v881
  %1441 = vmatpush1.bf16.msra.mxu0 %v880
  %1442 = vmatprep.subr.bf16.mxu0 %v885
  %1443 = vmatpush1.bf16.msra.mxu0 %v884
  %1444 = vmatprep.subr.bf16.mxu0 %v889
  %1445 = vmatpush1.bf16.msra.mxu0 %v888
  %1446 = vmatprep.subr.bf16.mxu0 %v893
  %1447 = vmatpush1.bf16.msra.mxu0 %v892
  %1448 = vmatprep.subr.bf16.mxu0 %v897
  %1449 = vmatpush1.bf16.msra.mxu0 %v896
  %1450 = vmatprep.subr.bf16.mxu0 %v901
  %1451 = vmatpush1.bf16.msra.mxu0 %v900
  %1452 = vmatprep.subr.bf16.mxu0 %v905
  %1453 = vmatpush1.bf16.msra.mxu0 %v904
  %1454 = vmatprep.subr.bf16.mxu0 %v909
  %1455 = vmatpush1.bf16.msra.mxu0 %v908
  %1456 = vmatprep.subr.bf16.mxu0 %v913
  %1457 = vmatpush1.bf16.msra.mxu0 %v912
  %1458 = vmatprep.subr.bf16.mxu0 %v917
  %1459 = vmatpush1.bf16.msra.mxu0 %v916
  %1460 = vmatprep.subr.bf16.mxu0 %v921
  %1461 = vmatpush1.bf16.msra.mxu0 %v920
  %1462 = vmatprep.subr.bf16.mxu0 %v925
  %1463 = vmatpush1.bf16.msra.mxu0 %v924
  %1464 = vmatprep.subr.bf16.mxu0 %v929
  %1465 = vmatpush1.bf16.msra.mxu0 %v928
  %1466 = vmatprep.mubr.bf16.mxu0 %v54
  %1467 = vmatmul.mubr.bf16.gmra.mrb[0].mxu0 %v53
  %v1468 = vpop.f32.mrb[0].mxu0
  %v1469 = vadd.f32 %v269, %v1468
  %v1470 = vpop.f32.mrb[0].mxu0
  %v1471 = vadd.f32 %v273, %v1470
  %v1472 = vpop.f32.mrb[0].mxu0
  %v1473 = vadd.f32 %v269, %v1472
  %v1474 = vpop.f32.mrb[0].mxu0
  %v1475 = vadd.f32 %v273, %v1474
  %1476 = vdwg.mxu0
  %1477 = vmatprep.subr.bf16.mxu0 %v933
  %1478 = vmatpush1.bf16.msra.mxu0 %v932
  %1479 = vmatprep.subr.bf16.mxu0 %v937
  %1480 = vmatpush1.bf16.msra.mxu0 %v936
  %1481 = vmatprep.subr.bf16.mxu0 %v941
  %1482 = vmatpush1.bf16.msra.mxu0 %v940
  %1483 = vmatprep.subr.bf16.mxu0 %v945
  %1484 = vmatpush1.bf16.msra.mxu0 %v944
  %1485 = vmatprep.subr.bf16.mxu0 %v949
  %1486 = vmatpush1.bf16.msra.mxu0 %v948
  %1487 = vmatprep.subr.bf16.mxu0 %v953
  %1488 = vmatpush1.bf16.msra.mxu0 %v952
  %1489 = vmatprep.subr.bf16.mxu0 %v957
  %1490 = vmatpush1.bf16.msra.mxu0 %v956
  %1491 = vmatprep.subr.bf16.mxu0 %v961
  %1492 = vmatpush1.bf16.msra.mxu0 %v960
  %1493 = vmatprep.subr.bf16.mxu0 %v965
  %1494 = vmatpush1.bf16.msra.mxu0 %v964
  %1495 = vmatprep.subr.bf16.mxu0 %v969
  %1496 = vmatpush1.bf16.msra.mxu0 %v968
  %1497 = vmatprep.subr.bf16.mxu0 %v973
  %1498 = vmatpush1.bf16.msra.mxu0 %v972
  %1499 = vmatprep.subr.bf16.mxu0 %v977
  %1500 = vmatpush1.bf16.msra.mxu0 %v976
  %1501 = vmatprep.subr.bf16.mxu0 %v981
  %1502 = vmatpush1.bf16.msra.mxu0 %v980
  %1503 = vmatprep.subr.bf16.mxu0 %v985
  %1504 = vmatpush1.bf16.msra.mxu0 %v984
  %1505 = vmatprep.subr.bf16.mxu0 %v989
  %1506 = vmatpush1.bf16.msra.mxu0 %v988
  %1507 = vmatprep.subr.bf16.mxu0 %v993
  %1508 = vmatpush1.bf16.msra.mxu0 %v992
  %1509 = vmatprep.mubr.bf16.mxu0 %v56
  %1510 = vmatmul.mubr.bf16.gmra.mrb[0].mxu0 %v55
  %v1511 = vpop.f32.mrb[0].mxu0
  %v1512 = vadd.f32 %v1469, %v1511
  %v1513 = vpop.f32.mrb[0].mxu0
  %v1514 = vadd.f32 %v1471, %v1513
  %v1515 = vpop.f32.mrb[0].mxu0
  %v1516 = vadd.f32 %v1473, %v1515
  %v1517 = vpop.f32.mrb[0].mxu0
  %v1518 = vadd.f32 %v1475, %v1517
  %1519 = vdwg.mxu0
  %1520 = vmatprep.subr.bf16.mxu0 %v997
  %1521 = vmatpush1.bf16.msra.mxu0 %v996
  %1522 = vmatprep.subr.bf16.mxu0 %v1001
  %1523 = vmatpush1.bf16.msra.mxu0 %v1000
  %1524 = vmatprep.subr.bf16.mxu0 %v1005
  %1525 = vmatpush1.bf16.msra.mxu0 %v1004
  %1526 = vmatprep.subr.bf16.mxu0 %v1009
  %1527 = vmatpush1.bf16.msra.mxu0 %v1008
  %1528 = vmatprep.subr.bf16.mxu0 %v1013
  %1529 = vmatpush1.bf16.msra.mxu0 %v1012
  %1530 = vmatprep.subr.bf16.mxu0 %v1017
  %1531 = vmatpush1.bf16.msra.mxu0 %v1016
  %1532 = vmatprep.subr.bf16.mxu0 %v1021
  %1533 = vmatpush1.bf16.msra.mxu0 %v1020
  %1534 = vmatprep.subr.bf16.mxu0 %v1025
  %1535 = vmatpush1.bf16.msra.mxu0 %v1024
  %1536 = vmatprep.subr.bf16.mxu0 %v1029
  %1537 = vmatpush1.bf16.msra.mxu0 %v1028
  %1538 = vmatprep.subr.bf16.mxu0 %v1033
  %1539 = vmatpush1.bf16.msra.mxu0 %v1032
  %1540 = vmatprep.subr.bf16.mxu0 %v1037
  %1541 = vmatpush1.bf16.msra.mxu0 %v1036
  %1542 = vmatprep.subr.bf16.mxu0 %v1041
  %1543 = vmatpush1.bf16.msra.mxu0 %v1040
  %1544 = vmatprep.subr.bf16.mxu0 %v1045
  %1545 = vmatpush1.bf16.msra.mxu0 %v1044
  %1546 = vmatprep.subr.bf16.mxu0 %v1049
  %1547 = vmatpush1.bf16.msra.mxu0 %v1048
  %1548 = vmatprep.subr.bf16.mxu0 %v1053
  %1549 = vmatpush1.bf16.msra.mxu0 %v1052
  %1550 = vmatprep.subr.bf16.mxu0 %v1057
  %1551 = vmatpush1.bf16.msra.mxu0 %v1056
  %1552 = vmatprep.mubr.bf16.mxu0 %v58
  %1553 = vmatmul.mubr.bf16.gmra.mrb[0].mxu0 %v57
  %v1554 = vpop.f32.mrb[0].mxu0
  %v1555 = vadd.f32 %v1512, %v1554
  %v1556 = vpop.f32.mrb[0].mxu0
  %v1557 = vadd.f32 %v1514, %v1556
  %v1558 = vpop.f32.mrb[0].mxu0
  %v1559 = vadd.f32 %v1516, %v1558
  %v1560 = vpop.f32.mrb[0].mxu0
  %v1561 = vadd.f32 %v1518, %v1560
  %1562 = vdwg.mxu0
  %1563 = vmatprep.subr.bf16.mxu0 %v1061
  %1564 = vmatpush1.bf16.msra.mxu0 %v1060
  %1565 = vmatprep.subr.bf16.mxu0 0
  %1566 = vmatpush1.bf16.msra.mxu0 0
  %1567 = vmatprep.subr.bf16.mxu0 0
  %1568 = vmatpush1.bf16.msra.mxu0 0
  %1569 = vmatprep.subr.bf16.mxu0 0
  %1570 = vmatpush1.bf16.msra.mxu0 0
  %1571 = vmatprep.subr.bf16.mxu0 0
  %1572 = vmatpush1.bf16.msra.mxu0 0
  %1573 = vmatprep.subr.bf16.mxu0 0
  %1574 = vmatpush1.bf16.msra.mxu0 0
  %1575 = vmatprep.subr.bf16.mxu0 0
  %1576 = vmatpush1.bf16.msra.mxu0 0
  %1577 = vmatprep.subr.bf16.mxu0 0
  %1578 = vmatpush1.bf16.msra.mxu0 0
  %1579 = vmatprep.subr.bf16.mxu0 0
  %1580 = vmatpush1.bf16.msra.mxu0 0
  %1581 = vmatprep.subr.bf16.mxu0 0
  %1582 = vmatpush1.bf16.msra.mxu0 0
  %1583 = vmatprep.subr.bf16.mxu0 0
  %1584 = vmatpush1.bf16.msra.mxu0 0
  %1585 = vmatprep.subr.bf16.mxu0 0
  %1586 = vmatpush1.bf16.msra.mxu0 0
  %1587 = vmatprep.subr.bf16.mxu0 0
  %1588 = vmatpush1.bf16.msra.mxu0 0
  %1589 = vmatprep.subr.bf16.mxu0 0
  %1590 = vmatpush1.bf16.msra.mxu0 0
  %1591 = vmatprep.subr.bf16.mxu0 0
  %1592 = vmatpush1.bf16.msra.mxu0 0
  %1593 = vmatprep.subr.bf16.mxu0 0
  %1594 = vmatpush1.bf16.msra.mxu0 0
  %1595 = vmatprep.mubr.bf16.mxu0 0
  %1596 = vmatmul.mubr.bf16.gmra.mrb[0].mxu0 %v1260
  %v1597 = vpop.f32.mrb[0].mxu0
  %v1598 = vadd.f32 %v1555, %v1597
  %v1599 = vpop.f32.mrb[0].mxu0
  %v1600 = vadd.f32 %v1557, %v1599
  %v1601 = vpop.f32.mrb[0].mxu0
  %v1602 = vadd.f32 %v1559, %v1601
  %v1603 = vpop.f32.mrb[0].mxu0
  %v1604 = vadd.f32 %v1561, %v1603
  %1605 = vdwg.mxu0
  %v1606 = vpack.c.bf16 %v1430, %v1426
  %v1607 = vpack.c.bf16 %v1432, %v1428
  %v1608 = vpack.c.bf16 %v1602, %v1598
  %v1609 = vpack.c.bf16 %v1604, %v1600
  %v1610 = vmax.bf16 %v1606, 0
  %v1611 = vmax.bf16 %v1607, 0
  %v1612 = vmax.bf16 %v1608, 0
  %v1613 = vmax.bf16 %v1609, 0
  %v1614 = vld [vmem:[%s3] sm:$0xff]
  %v1615 = vld [vmem:[%s3 + $0x8] sm:$0xff]
  %v1616 = vld [vmem:[%s3 + $0x10] sm:$0xff]
  %v1617 = vld [vmem:[%s3 + $0x18] sm:$0xff]
  %v1618 = vld [vmem:[%s3 + $0x20] sm:$0xff]
  %v1619 = vld [vmem:[%s3 + $0x28] sm:$0xff]
  %v1620 = vld [vmem:[%s3 + $0x30] sm:$0xff]
  %v1621 = vld [vmem:[%s3 + $0x38] sm:$0xff]
  %v1622 = vld [vmem:[%s3 + $0x40] sm:$0xff]
  %v1623 = vld [vmem:[%s3 + $0x48] sm:$0xff]
  %v1624 = vld [vmem:[%s3 + $0x50] sm:$0xff]
  %v1625 = vld [vmem:[%s3 + $0x58] sm:$0xff]
  %v1626 = vld [vmem:[%s3 + $0x60] sm:$0xff]
  %v1627 = vld [vmem:[%s3 + $0x68] sm:$0xff]
  %v1628 = vld [vmem:[%s3 + $0x70] sm:$0xff]
  %v1629 = vld [vmem:[%s3 + $0x78] sm:$0xff]
  %v1630 = vld [vmem:[%s3 + $0x80] sm:$0xff]
  %v1631 = vld [vmem:[%s3 + $0x88] sm:$0xff]
  %v1632 = vld [vmem:[%s3 + $0x90] sm:$0xff]
  %v1633 = vld [vmem:[%s3 + $0x98] sm:$0xff]
  %v1634 = vld [vmem:[%s3 + $0xa0] sm:$0xff]
  %v1635 = vld [vmem:[%s3 + $0xa8] sm:$0xff]
  %v1636 = vld [vmem:[%s3 + $0xb0] sm:$0xff]
  %v1637 = vld [vmem:[%s3 + $0xb8] sm:$0xff]
  %v1638 = vld [vmem:[%s3 + $0xc0] sm:$0xff]
  %v1639 = vld [vmem:[%s3 + $0xc8] sm:$0xff]
  %v1640 = vld [vmem:[%s3 + $0xd0] sm:$0xff]
  %v1641 = vld [vmem:[%s3 + $0xd8] sm:$0xff]
  %v1642 = vld [vmem:[%s3 + $0xe0] sm:$0xff]
  %v1643 = vld [vmem:[%s3 + $0xe8] sm:$0xff]
  %v1644 = vld [vmem:[%s3 + $0xf0] sm:$0xff]
  %v1645 = vld [vmem:[%s3 + $0xf8] sm:$0xff]
  %v1646 = vld [vmem:[%s3 + $0x100] sm:$0xff]
  %v1647 = vld [vmem:[%s3 + $0x108] sm:$0xff]
  %v1648 = vld [vmem:[%s3 + $0x110] sm:$0xff]
  %v1649 = vld [vmem:[%s3 + $0x118] sm:$0xff]
  %v1650 = vld [vmem:[%s3 + $0x120] sm:$0xff]
  %v1651 = vld [vmem:[%s3 + $0x128] sm:$0xff]
  %v1652 = vld [vmem:[%s3 + $0x130] sm:$0xff]
  %v1653 = vld [vmem:[%s3 + $0x138] sm:$0xff]
  %v1654 = vld [vmem:[%s3 + $0x140] sm:$0xff]
  %v1655 = vld [vmem:[%s3 + $0x148] sm:$0xff]
  %v1656 = vld [vmem:[%s3 + $0x150] sm:$0xff]
  %v1657 = vld [vmem:[%s3 + $0x158] sm:$0xff]
  %v1658 = vld [vmem:[%s3 + $0x160] sm:$0xff]
  %v1659 = vld [vmem:[%s3 + $0x168] sm:$0xff]
  %v1660 = vld [vmem:[%s3 + $0x170] sm:$0xff]
  %v1661 = vld [vmem:[%s3 + $0x178] sm:$0xff]
  %v1662 = vld [vmem:[%s3 + $0x180] sm:$0xff]
  %v1663 = vld [vmem:[%s3 + $0x188] sm:$0xff]
  %v1664 = vld [vmem:[%s3 + $0x190] sm:$0xff]
  %v1665 = vld [vmem:[%s3 + $0x198] sm:$0xff]
  %v1666 = vld [vmem:[%s3 + $0x1a0] sm:$0xff]
  %v1667 = vld [vmem:[%s3 + $0x1a8] sm:$0xff]
  %v1668 = vld [vmem:[%s3 + $0x1b0] sm:$0xff]
  %v1669 = vld [vmem:[%s3 + $0x1b8] sm:$0xff]
  %v1670 = vld [vmem:[%s3 + $0x1c0] sm:$0xff]
  %v1671 = vld [vmem:[%s3 + $0x1c8] sm:$0xff]
  %v1672 = vld [vmem:[%s3 + $0x1d0] sm:$0xff]
  %v1673 = vld [vmem:[%s3 + $0x1d8] sm:$0xff]
  %v1674 = vld [vmem:[%s3 + $0x1e0] sm:$0xff]
  %v1675 = vld [vmem:[%s3 + $0x1e8] sm:$0xff]
  %v1676 = vld [vmem:[%s3 + $0x1f0] sm:$0xff]
  %v1677 = vld [vmem:[%s3 + $0x1f8] sm:$0xff]
  %v1678 = vld [vmem:[%s4] sm:$0x3]
  %v1680 = vlaneseq
  %v1681 = vshrl.u32 %v1680, 7
  %v1682 = vsub.s32 0, %v1681
  %v1683 = vrot.slane %v1678, %v1682
  %v1684 = vlaneseq
  %v1685 = vshrl.u32 %v1684, 7
  %v1686 = vsub.s32 1, %v1685
  %v1687 = vrot.slane %v1678, %v1686
  %v1754 = vunpack.c.l.b16 %v1614
  %v1755 = vunpack.c.h.b16 %v1614
  %v1756 = vunpack.c.l.b16 %v1615
  %v1757 = vunpack.c.h.b16 %v1615
  %v1758 = vunpack.c.l.b16 %v1616
  %v1759 = vunpack.c.h.b16 %v1616
  %v1760 = vunpack.c.l.b16 %v1617
  %v1761 = vunpack.c.h.b16 %v1617
  %v1762 = vunpack.c.l.b16 %v1618
  %v1763 = vunpack.c.h.b16 %v1618
  %v1764 = vunpack.c.l.b16 %v1619
  %v1765 = vunpack.c.h.b16 %v1619
  %v1766 = vunpack.c.l.b16 %v1620
  %v1767 = vunpack.c.h.b16 %v1620
  %v1768 = vunpack.c.l.b16 %v1621
  %v1769 = vunpack.c.h.b16 %v1621
  %v1770 = vunpack.c.l.b16 %v1622
  %v1771 = vunpack.c.h.b16 %v1622
  %v1772 = vunpack.c.l.b16 %v1623
  %v1773 = vunpack.c.h.b16 %v1623
  %v1774 = vunpack.c.l.b16 %v1624
  %v1775 = vunpack.c.h.b16 %v1624
  %v1776 = vunpack.c.l.b16 %v1625
  %v1777 = vunpack.c.h.b16 %v1625
  %v1778 = vunpack.c.l.b16 %v1626
  %v1779 = vunpack.c.h.b16 %v1626
  %v1780 = vunpack.c.l.b16 %v1627
  %v1781 = vunpack.c.h.b16 %v1627
  %v1782 = vunpack.c.l.b16 %v1628
  %v1783 = vunpack.c.h.b16 %v1628
  %v1784 = vunpack.c.l.b16 %v1629
  %v1785 = vunpack.c.h.b16 %v1629
  %v1786 = vunpack.c.l.b16 %v1630
  %v1787 = vunpack.c.h.b16 %v1630
  %v1788 = vunpack.c.l.b16 %v1631
  %v1789 = vunpack.c.h.b16 %v1631
  %v1790 = vunpack.c.l.b16 %v1632
  %v1791 = vunpack.c.h.b16 %v1632
  %v1792 = vunpack.c.l.b16 %v1633
  %v1793 = vunpack.c.h.b16 %v1633
  %v1794 = vunpack.c.l.b16 %v1634
  %v1795 = vunpack.c.h.b16 %v1634
  %v1796 = vunpack.c.l.b16 %v1635
  %v1797 = vunpack.c.h.b16 %v1635
  %v1798 = vunpack.c.l.b16 %v1636
  %v1799 = vunpack.c.h.b16 %v1636
  %v1800 = vunpack.c.l.b16 %v1637
  %v1801 = vunpack.c.h.b16 %v1637
  %v1802 = vunpack.c.l.b16 %v1638
  %v1803 = vunpack.c.h.b16 %v1638
  %v1804 = vunpack.c.l.b16 %v1639
  %v1805 = vunpack.c.h.b16 %v1639
  %v1806 = vunpack.c.l.b16 %v1640
  %v1807 = vunpack.c.h.b16 %v1640
  %v1808 = vunpack.c.l.b16 %v1641
  %v1809 = vunpack.c.h.b16 %v1641
  %v1810 = vunpack.c.l.b16 %v1642
  %v1811 = vunpack.c.h.b16 %v1642
  %v1812 = vunpack.c.l.b16 %v1643
  %v1813 = vunpack.c.h.b16 %v1643
  %v1814 = vunpack.c.l.b16 %v1644
  %v1815 = vunpack.c.h.b16 %v1644
  %v1816 = vunpack.c.l.b16 %v1645
  %v1817 = vunpack.c.h.b16 %v1645
  %v1818 = vunpack.c.l.b16 %v1646
  %v1819 = vunpack.c.h.b16 %v1646
  %v1820 = vunpack.c.l.b16 %v1647
  %v1821 = vunpack.c.h.b16 %v1647
  %v1822 = vunpack.c.l.b16 %v1648
  %v1823 = vunpack.c.h.b16 %v1648
  %v1824 = vunpack.c.l.b16 %v1649
  %v1825 = vunpack.c.h.b16 %v1649
  %v1826 = vunpack.c.l.b16 %v1650
  %v1827 = vunpack.c.h.b16 %v1650
  %v1828 = vunpack.c.l.b16 %v1651
  %v1829 = vunpack.c.h.b16 %v1651
  %v1830 = vunpack.c.l.b16 %v1652
  %v1831 = vunpack.c.h.b16 %v1652
  %v1832 = vunpack.c.l.b16 %v1653
  %v1833 = vunpack.c.h.b16 %v1653
  %v1834 = vunpack.c.l.b16 %v1654
  %v1835 = vunpack.c.h.b16 %v1654
  %v1836 = vunpack.c.l.b16 %v1655
  %v1837 = vunpack.c.h.b16 %v1655
  %v1838 = vunpack.c.l.b16 %v1656
  %v1839 = vunpack.c.h.b16 %v1656
  %v1840 = vunpack.c.l.b16 %v1657
  %v1841 = vunpack.c.h.b16 %v1657
  %v1842 = vunpack.c.l.b16 %v1658
  %v1843 = vunpack.c.h.b16 %v1658
  %v1844 = vunpack.c.l.b16 %v1659
  %v1845 = vunpack.c.h.b16 %v1659
  %v1846 = vunpack.c.l.b16 %v1660
  %v1847 = vunpack.c.h.b16 %v1660
  %v1848 = vunpack.c.l.b16 %v1661
  %v1849 = vunpack.c.h.b16 %v1661
  %v1850 = vunpack.c.l.b16 %v1662
  %v1851 = vunpack.c.h.b16 %v1662
  %v1852 = vunpack.c.l.b16 %v1663
  %v1853 = vunpack.c.h.b16 %v1663
  %v1854 = vunpack.c.l.b16 %v1664
  %v1855 = vunpack.c.h.b16 %v1664
  %v1856 = vunpack.c.l.b16 %v1665
  %v1857 = vunpack.c.h.b16 %v1665
  %v1858 = vunpack.c.l.b16 %v1666
  %v1859 = vunpack.c.h.b16 %v1666
  %v1860 = vunpack.c.l.b16 %v1667
  %v1861 = vunpack.c.h.b16 %v1667
  %v1862 = vunpack.c.l.b16 %v1668
  %v1863 = vunpack.c.h.b16 %v1668
  %v1864 = vunpack.c.l.b16 %v1669
  %v1865 = vunpack.c.h.b16 %v1669
  %v1866 = vunpack.c.l.b16 %v1670
  %v1867 = vunpack.c.h.b16 %v1670
  %v1868 = vunpack.c.l.b16 %v1671
  %v1869 = vunpack.c.h.b16 %v1671
  %v1870 = vunpack.c.l.b16 %v1672
  %v1871 = vunpack.c.h.b16 %v1672
  %v1872 = vunpack.c.l.b16 %v1673
  %v1873 = vunpack.c.h.b16 %v1673
  %v1874 = vunpack.c.l.b16 %v1674
  %v1875 = vunpack.c.h.b16 %v1674
  %v1876 = vunpack.c.l.b16 %v1675
  %v1877 = vunpack.c.h.b16 %v1675
  %v1878 = vunpack.c.l.b16 %v1676
  %v1879 = vunpack.c.h.b16 %v1676
  %v1880 = vunpack.c.l.b16 %v1677
  %v1881 = vunpack.c.h.b16 %v1677
  %v1882 = vpack.c.b16 %v1756, %v1754
  %v1883 = vpack.c.b16 %v1757, %v1755
  %v1884 = vpack.c.b16 %v1760, %v1758
  %v1885 = vpack.c.b16 %v1761, %v1759
  %v1886 = vpack.c.b16 %v1764, %v1762
  %v1887 = vpack.c.b16 %v1765, %v1763
  %v1888 = vpack.c.b16 %v1768, %v1766
  %v1889 = vpack.c.b16 %v1769, %v1767
  %v1890 = vpack.c.b16 %v1772, %v1770
  %v1891 = vpack.c.b16 %v1773, %v1771
  %v1892 = vpack.c.b16 %v1776, %v1774
  %v1893 = vpack.c.b16 %v1777, %v1775
  %v1894 = vpack.c.b16 %v1780, %v1778
  %v1895 = vpack.c.b16 %v1781, %v1779
  %v1896 = vpack.c.b16 %v1784, %v1782
  %v1897 = vpack.c.b16 %v1785, %v1783
  %v1898 = vpack.c.b16 %v1788, %v1786
  %v1899 = vpack.c.b16 %v1789, %v1787
  %v1900 = vpack.c.b16 %v1792, %v1790
  %v1901 = vpack.c.b16 %v1793, %v1791
  %v1902 = vpack.c.b16 %v1796, %v1794
  %v1903 = vpack.c.b16 %v1797, %v1795
  %v1904 = vpack.c.b16 %v1800, %v1798
  %v1905 = vpack.c.b16 %v1801, %v1799
  %v1906 = vpack.c.b16 %v1804, %v1802
  %v1907 = vpack.c.b16 %v1805, %v1803
  %v1908 = vpack.c.b16 %v1808, %v1806
  %v1909 = vpack.c.b16 %v1809, %v1807
  %v1910 = vpack.c.b16 %v1812, %v1810
  %v1911 = vpack.c.b16 %v1813, %v1811
  %v1912 = vpack.c.b16 %v1816, %v1814
  %v1913 = vpack.c.b16 %v1817, %v1815
  %v1914 = vpack.c.b16 %v1820, %v1818
  %v1915 = vpack.c.b16 %v1821, %v1819
  %v1916 = vpack.c.b16 %v1824, %v1822
  %v1917 = vpack.c.b16 %v1825, %v1823
  %v1918 = vpack.c.b16 %v1828, %v1826
  %v1919 = vpack.c.b16 %v1829, %v1827
  %v1920 = vpack.c.b16 %v1832, %v1830
  %v1921 = vpack.c.b16 %v1833, %v1831
  %v1922 = vpack.c.b16 %v1836, %v1834
  %v1923 = vpack.c.b16 %v1837, %v1835
  %v1924 = vpack.c.b16 %v1840, %v1838
  %v1925 = vpack.c.b16 %v1841, %v1839
  %v1926 = vpack.c.b16 %v1844, %v1842
  %v1927 = vpack.c.b16 %v1845, %v1843
  %v1928 = vpack.c.b16 %v1848, %v1846
  %v1929 = vpack.c.b16 %v1849, %v1847
  %v1930 = vpack.c.b16 %v1852, %v1850
  %v1931 = vpack.c.b16 %v1853, %v1851
  %v1932 = vpack.c.b16 %v1856, %v1854
  %v1933 = vpack.c.b16 %v1857, %v1855
  %v1934 = vpack.c.b16 %v1860, %v1858
  %v1935 = vpack.c.b16 %v1861, %v1859
  %v1936 = vpack.c.b16 %v1864, %v1862
  %v1937 = vpack.c.b16 %v1865, %v1863
  %v1938 = vpack.c.b16 %v1868, %v1866
  %v1939 = vpack.c.b16 %v1869, %v1867
  %v1940 = vpack.c.b16 %v1872, %v1870
  %v1941 = vpack.c.b16 %v1873, %v1871
  %v1942 = vpack.c.b16 %v1876, %v1874
  %v1943 = vpack.c.b16 %v1877, %v1875
  %v1944 = vpack.c.b16 %v1880, %v1878
  %v1945 = vpack.c.b16 %v1881, %v1879
  %2010 = vmatprep.subr.bf16.mxu0 %v1883
  %2011 = vmatpush1.bf16.msra.mxu0 %v1882
  %2012 = vmatprep.subr.bf16.mxu0 %v1885
  %2013 = vmatpush1.bf16.msra.mxu0 %v1884
  %2014 = vmatprep.subr.bf16.mxu0 %v1887
  %2015 = vmatpush1.bf16.msra.mxu0 %v1886
  %2016 = vmatprep.subr.bf16.mxu0 %v1889
  %2017 = vmatpush1.bf16.msra.mxu0 %v1888
  %2018 = vmatprep.subr.bf16.mxu0 %v1891
  %2019 = vmatpush1.bf16.msra.mxu0 %v1890
  %2020 = vmatprep.subr.bf16.mxu0 %v1893
  %2021 = vmatpush1.bf16.msra.mxu0 %v1892
  %2022 = vmatprep.subr.bf16.mxu0 %v1895
  %2023 = vmatpush1.bf16.msra.mxu0 %v1894
  %2024 = vmatprep.subr.bf16.mxu0 %v1897
  %2025 = vmatpush1.bf16.msra.mxu0 %v1896
  %2026 = vmatprep.subr.bf16.mxu0 %v1899
  %2027 = vmatpush1.bf16.msra.mxu0 %v1898
  %2028 = vmatprep.subr.bf16.mxu0 %v1901
  %2029 = vmatpush1.bf16.msra.mxu0 %v1900
  %2030 = vmatprep.subr.bf16.mxu0 %v1903
  %2031 = vmatpush1.bf16.msra.mxu0 %v1902
  %2032 = vmatprep.subr.bf16.mxu0 %v1905
  %2033 = vmatpush1.bf16.msra.mxu0 %v1904
  %2034 = vmatprep.subr.bf16.mxu0 %v1907
  %2035 = vmatpush1.bf16.msra.mxu0 %v1906
  %2036 = vmatprep.subr.bf16.mxu0 %v1909
  %2037 = vmatpush1.bf16.msra.mxu0 %v1908
  %2038 = vmatprep.subr.bf16.mxu0 %v1911
  %2039 = vmatpush1.bf16.msra.mxu0 %v1910
  %2040 = vmatprep.subr.bf16.mxu0 %v1913
  %2041 = vmatpush1.bf16.msra.mxu0 %v1912
  %2042 = vmatprep.mubr.bf16.mxu0 %v1611
  %2043 = vmatmul.mubr.bf16.gmra.mrb[0].mxu0 %v1610
  %v2044 = vpop.f32.mrb[0].mxu0
  %v2045 = vadd.f32 %v1683, %v2044
  %v2046 = vpop.f32.mrb[0].mxu0
  %v2047 = vadd.f32 %v1687, %v2046
  %v2048 = vpop.f32.mrb[0].mxu0
  %v2049 = vadd.f32 %v1683, %v2048
  %v2050 = vpop.f32.mrb[0].mxu0
  %v2051 = vadd.f32 %v1687, %v2050
  %2052 = vdwg.mxu0
  %2053 = vmatprep.subr.bf16.mxu0 %v1915
  %2054 = vmatpush1.bf16.msra.mxu0 %v1914
  %2055 = vmatprep.subr.bf16.mxu0 %v1917
  %2056 = vmatpush1.bf16.msra.mxu0 %v1916
  %2057 = vmatprep.subr.bf16.mxu0 %v1919
  %2058 = vmatpush1.bf16.msra.mxu0 %v1918
  %2059 = vmatprep.subr.bf16.mxu0 %v1921
  %2060 = vmatpush1.bf16.msra.mxu0 %v1920
  %2061 = vmatprep.subr.bf16.mxu0 %v1923
  %2062 = vmatpush1.bf16.msra.mxu0 %v1922
  %2063 = vmatprep.subr.bf16.mxu0 %v1925
  %2064 = vmatpush1.bf16.msra.mxu0 %v1924
  %2065 = vmatprep.subr.bf16.mxu0 %v1927
  %2066 = vmatpush1.bf16.msra.mxu0 %v1926
  %2067 = vmatprep.subr.bf16.mxu0 %v1929
  %2068 = vmatpush1.bf16.msra.mxu0 %v1928
  %2069 = vmatprep.subr.bf16.mxu0 %v1931
  %2070 = vmatpush1.bf16.msra.mxu0 %v1930
  %2071 = vmatprep.subr.bf16.mxu0 %v1933
  %2072 = vmatpush1.bf16.msra.mxu0 %v1932
  %2073 = vmatprep.subr.bf16.mxu0 %v1935
  %2074 = vmatpush1.bf16.msra.mxu0 %v1934
  %2075 = vmatprep.subr.bf16.mxu0 %v1937
  %2076 = vmatpush1.bf16.msra.mxu0 %v1936
  %2077 = vmatprep.subr.bf16.mxu0 %v1939
  %2078 = vmatpush1.bf16.msra.mxu0 %v1938
  %2079 = vmatprep.subr.bf16.mxu0 %v1941
  %2080 = vmatpush1.bf16.msra.mxu0 %v1940
  %2081 = vmatprep.subr.bf16.mxu0 %v1943
  %2082 = vmatpush1.bf16.msra.mxu0 %v1942
  %2083 = vmatprep.subr.bf16.mxu0 %v1945
  %2084 = vmatpush1.bf16.msra.mxu0 %v1944
  %2085 = vmatprep.mubr.bf16.mxu0 %v1613
  %2086 = vmatmul.mubr.bf16.gmra.mrb[0].mxu0 %v1612
  %v2087 = vpop.f32.mrb[0].mxu0
  %v2088 = vadd.f32 %v2045, %v2087
  %v2089 = vpop.f32.mrb[0].mxu0
  %v2090 = vadd.f32 %v2047, %v2089
  %v2091 = vpop.f32.mrb[0].mxu0
  %v2092 = vadd.f32 %v2049, %v2091
  %v2093 = vpop.f32.mrb[0].mxu0
  %v2094 = vadd.f32 %v2051, %v2093
  %2095 = vdwg.mxu0
  %v2096 = vpack.c.bf16 %v2092, %v2088
  %v2097 = vpack.c.bf16 %v2094, %v2090
  %v2098 = vmax.bf16 %v2096, 0
  %v2099 = vmax.bf16 %v2097, 0
  %v2100 = vld [vmem:[%s5] sm:$0xff]
  %v2101 = vld [vmem:[%s5 + $0x8] sm:$0xff]
  %v2102 = vld [vmem:[%s5 + $0x10] sm:$0xff]
  %v2103 = vld [vmem:[%s5 + $0x18] sm:$0xff]
  %v2104 = vld [vmem:[%s5 + $0x20] sm:$0xff]
  %v2105 = vld [vmem:[%s5 + $0x28] sm:$0xff]
  %v2106 = vld [vmem:[%s5 + $0x30] sm:$0xff]
  %v2107 = vld [vmem:[%s5 + $0x38] sm:$0xff]
  %v2108 = vld [vmem:[%s5 + $0x40] sm:$0xff]
  %v2109 = vld [vmem:[%s5 + $0x48] sm:$0xff]
  %v2110 = vld [vmem:[%s5 + $0x50] sm:$0xff]
  %v2111 = vld [vmem:[%s5 + $0x58] sm:$0xff]
  %v2112 = vld [vmem:[%s5 + $0x60] sm:$0xff]
  %v2113 = vld [vmem:[%s5 + $0x68] sm:$0xff]
  %v2114 = vld [vmem:[%s5 + $0x70] sm:$0xff]
  %v2115 = vld [vmem:[%s5 + $0x78] sm:$0xff]
  %v2116 = vld [vmem:[%s5 + $0x80] sm:$0xff]
  %v2117 = vld [vmem:[%s5 + $0x88] sm:$0xff]
  %v2118 = vld [vmem:[%s5 + $0x90] sm:$0xff]
  %v2119 = vld [vmem:[%s5 + $0x98] sm:$0xff]
  %v2120 = vld [vmem:[%s5 + $0xa0] sm:$0xff]
  %v2121 = vld [vmem:[%s5 + $0xa8] sm:$0xff]
  %v2122 = vld [vmem:[%s5 + $0xb0] sm:$0xff]
  %v2123 = vld [vmem:[%s5 + $0xb8] sm:$0xff]
  %v2124 = vld [vmem:[%s5 + $0xc0] sm:$0xff]
  %v2125 = vld [vmem:[%s5 + $0xc8] sm:$0xff]
  %v2126 = vld [vmem:[%s5 + $0xd0] sm:$0xff]
  %v2127 = vld [vmem:[%s5 + $0xd8] sm:$0xff]
  %v2128 = vld [vmem:[%s5 + $0xe0] sm:$0xff]
  %v2129 = vld [vmem:[%s5 + $0xe8] sm:$0xff]
  %v2130 = vld [vmem:[%s5 + $0xf0] sm:$0xff]
  %v2131 = vld [vmem:[%s5 + $0xf8] sm:$0xff]
  %v2132 = vld [vmem:[%s6] sm:$0x3]
  %v2134 = vlaneseq
  %v2135 = vshrl.u32 %v2134, 7
  %v2136 = vsub.s32 0, %v2135
  %v2137 = vrot.slane %v2132, %v2136
  %v2138 = vlaneseq
  %v2139 = vshrl.u32 %v2138, 7
  %v2140 = vsub.s32 1, %v2139
  %v2141 = vrot.slane %v2132, %v2140
  %v2176 = vunpack.c.l.b16 %v2100
  %v2177 = vunpack.c.h.b16 %v2100
  %v2178 = vunpack.c.l.b16 %v2101
  %v2179 = vunpack.c.h.b16 %v2101
  %v2180 = vunpack.c.l.b16 %v2102
  %v2181 = vunpack.c.h.b16 %v2102
  %v2182 = vunpack.c.l.b16 %v2103
  %v2183 = vunpack.c.h.b16 %v2103
  %v2184 = vunpack.c.l.b16 %v2104
  %v2185 = vunpack.c.h.b16 %v2104
  %v2186 = vunpack.c.l.b16 %v2105
  %v2187 = vunpack.c.h.b16 %v2105
  %v2188 = vunpack.c.l.b16 %v2106
  %v2189 = vunpack.c.h.b16 %v2106
  %v2190 = vunpack.c.l.b16 %v2107
  %v2191 = vunpack.c.h.b16 %v2107
  %v2192 = vunpack.c.l.b16 %v2108
  %v2193 = vunpack.c.h.b16 %v2108
  %v2194 = vunpack.c.l.b16 %v2109
  %v2195 = vunpack.c.h.b16 %v2109
  %v2196 = vunpack.c.l.b16 %v2110
  %v2197 = vunpack.c.h.b16 %v2110
  %v2198 = vunpack.c.l.b16 %v2111
  %v2199 = vunpack.c.h.b16 %v2111
  %v2200 = vunpack.c.l.b16 %v2112
  %v2201 = vunpack.c.h.b16 %v2112
  %v2202 = vunpack.c.l.b16 %v2113
  %v2203 = vunpack.c.h.b16 %v2113
  %v2204 = vunpack.c.l.b16 %v2114
  %v2205 = vunpack.c.h.b16 %v2114
  %v2206 = vunpack.c.l.b16 %v2115
  %v2207 = vunpack.c.h.b16 %v2115
  %v2208 = vunpack.c.l.b16 %v2116
  %v2209 = vunpack.c.h.b16 %v2116
  %v2210 = vunpack.c.l.b16 %v2117
  %v2211 = vunpack.c.h.b16 %v2117
  %v2212 = vunpack.c.l.b16 %v2118
  %v2213 = vunpack.c.h.b16 %v2118
  %v2214 = vunpack.c.l.b16 %v2119
  %v2215 = vunpack.c.h.b16 %v2119
  %v2216 = vunpack.c.l.b16 %v2120
  %v2217 = vunpack.c.h.b16 %v2120
  %v2218 = vunpack.c.l.b16 %v2121
  %v2219 = vunpack.c.h.b16 %v2121
  %v2220 = vunpack.c.l.b16 %v2122
  %v2221 = vunpack.c.h.b16 %v2122
  %v2222 = vunpack.c.l.b16 %v2123
  %v2223 = vunpack.c.h.b16 %v2123
  %v2224 = vunpack.c.l.b16 %v2124
  %v2225 = vunpack.c.h.b16 %v2124
  %v2226 = vunpack.c.l.b16 %v2125
  %v2227 = vunpack.c.h.b16 %v2125
  %v2228 = vunpack.c.l.b16 %v2126
  %v2229 = vunpack.c.h.b16 %v2126
  %v2230 = vunpack.c.l.b16 %v2127
  %v2231 = vunpack.c.h.b16 %v2127
  %v2232 = vunpack.c.l.b16 %v2128
  %v2233 = vunpack.c.h.b16 %v2128
  %v2234 = vunpack.c.l.b16 %v2129
  %v2235 = vunpack.c.h.b16 %v2129
  %v2236 = vunpack.c.l.b16 %v2130
  %v2237 = vunpack.c.h.b16 %v2130
  %v2238 = vunpack.c.l.b16 %v2131
  %v2239 = vunpack.c.h.b16 %v2131
  %v2240 = vpack.c.b16 %v2178, %v2176
  %v2241 = vpack.c.b16 %v2179, %v2177
  %v2242 = vpack.c.b16 %v2182, %v2180
  %v2243 = vpack.c.b16 %v2183, %v2181
  %v2244 = vpack.c.b16 %v2186, %v2184
  %v2245 = vpack.c.b16 %v2187, %v2185
  %v2246 = vpack.c.b16 %v2190, %v2188
  %v2247 = vpack.c.b16 %v2191, %v2189
  %v2248 = vpack.c.b16 %v2194, %v2192
  %v2249 = vpack.c.b16 %v2195, %v2193
  %v2250 = vpack.c.b16 %v2198, %v2196
  %v2251 = vpack.c.b16 %v2199, %v2197
  %v2252 = vpack.c.b16 %v2202, %v2200
  %v2253 = vpack.c.b16 %v2203, %v2201
  %v2254 = vpack.c.b16 %v2206, %v2204
  %v2255 = vpack.c.b16 %v2207, %v2205
  %v2256 = vpack.c.b16 %v2210, %v2208
  %v2257 = vpack.c.b16 %v2211, %v2209
  %v2258 = vpack.c.b16 %v2214, %v2212
  %v2259 = vpack.c.b16 %v2215, %v2213
  %v2260 = vpack.c.b16 %v2218, %v2216
  %v2261 = vpack.c.b16 %v2219, %v2217
  %v2262 = vpack.c.b16 %v2222, %v2220
  %v2263 = vpack.c.b16 %v2223, %v2221
  %v2264 = vpack.c.b16 %v2226, %v2224
  %v2265 = vpack.c.b16 %v2227, %v2225
  %v2266 = vpack.c.b16 %v2230, %v2228
  %v2267 = vpack.c.b16 %v2231, %v2229
  %v2268 = vpack.c.b16 %v2234, %v2232
  %v2269 = vpack.c.b16 %v2235, %v2233
  %v2270 = vpack.c.b16 %v2238, %v2236
  %v2271 = vpack.c.b16 %v2239, %v2237
  %2304 = vmatprep.subr.bf16.mxu0 %v2241
  %2305 = vmatpush1.bf16.msra.mxu0 %v2240
  %2306 = vmatprep.subr.bf16.mxu0 %v2243
  %2307 = vmatpush1.bf16.msra.mxu0 %v2242
  %2308 = vmatprep.subr.bf16.mxu0 %v2245
  %2309 = vmatpush1.bf16.msra.mxu0 %v2244
  %2310 = vmatprep.subr.bf16.mxu0 %v2247
  %2311 = vmatpush1.bf16.msra.mxu0 %v2246
  %2312 = vmatprep.subr.bf16.mxu0 %v2249
  %2313 = vmatpush1.bf16.msra.mxu0 %v2248
  %2314 = vmatprep.subr.bf16.mxu0 %v2251
  %2315 = vmatpush1.bf16.msra.mxu0 %v2250
  %2316 = vmatprep.subr.bf16.mxu0 %v2253
  %2317 = vmatpush1.bf16.msra.mxu0 %v2252
  %2318 = vmatprep.subr.bf16.mxu0 %v2255
  %2319 = vmatpush1.bf16.msra.mxu0 %v2254
  %2320 = vmatprep.subr.bf16.mxu0 %v2257
  %2321 = vmatpush1.bf16.msra.mxu0 %v2256
  %2322 = vmatprep.subr.bf16.mxu0 %v2259
  %2323 = vmatpush1.bf16.msra.mxu0 %v2258
  %2324 = vmatprep.subr.bf16.mxu0 %v2261
  %2325 = vmatpush1.bf16.msra.mxu0 %v2260
  %2326 = vmatprep.subr.bf16.mxu0 %v2263
  %2327 = vmatpush1.bf16.msra.mxu0 %v2262
  %2328 = vmatprep.subr.bf16.mxu0 %v2265
  %2329 = vmatpush1.bf16.msra.mxu0 %v2264
  %2330 = vmatprep.subr.bf16.mxu0 %v2267
  %2331 = vmatpush1.bf16.msra.mxu0 %v2266
  %2332 = vmatprep.subr.bf16.mxu0 %v2269
  %2333 = vmatpush1.bf16.msra.mxu0 %v2268
  %2334 = vmatprep.subr.bf16.mxu0 %v2271
  %2335 = vmatpush1.bf16.msra.mxu0 %v2270
  %2336 = vmatprep.mubr.bf16.mxu0 %v2099
  %2337 = vmatmul.mubr.bf16.gmra.mrb[0].mxu0 %v2098
  %v2338 = vpop.f32.mrb[0].mxu0
  %v2339 = vadd.f32 %v2137, %v2338
  %v2340 = vpop.f32.mrb[0].mxu0
  %v2341 = vadd.f32 %v2141, %v2340
  %v2342 = vpop.f32.mrb[0].mxu0
  %v2343 = vadd.f32 %v2137, %v2342
  %v2344 = vpop.f32.mrb[0].mxu0
  %v2345 = vadd.f32 %v2141, %v2344
  %2346 = vdwg.mxu0
  %v2347 = vpack.c.bf16 %v2343, %v2339
  %v2348 = vpack.c.bf16 %v2345, %v2341
  %v2349 = vmax.bf16 %v2347, 0
  %v2350 = vmax.bf16 %v2348, 0
  %v2351 = vld [vmem:[%s7] sm:$0xff]
  %v2352 = vld [vmem:[%s7 + $0x8] sm:$0xff]
  %v2353 = vld [vmem:[%s7 + $0x10] sm:$0xff]
  %v2354 = vld [vmem:[%s7 + $0x18] sm:$0xff]
  %v2355 = vld [vmem:[%s7 + $0x20] sm:$0xff]
  %v2356 = vld [vmem:[%s7 + $0x28] sm:$0xff]
  %v2357 = vld [vmem:[%s7 + $0x30] sm:$0xff]
  %v2358 = vld [vmem:[%s7 + $0x38] sm:$0xff]
  %v2359 = vld [vmem:[%s7 + $0x40] sm:$0xff]
  %v2360 = vld [vmem:[%s7 + $0x48] sm:$0xff]
  %v2361 = vld [vmem:[%s7 + $0x50] sm:$0xff]
  %v2362 = vld [vmem:[%s7 + $0x58] sm:$0xff]
  %v2363 = vld [vmem:[%s7 + $0x60] sm:$0xff]
  %v2364 = vld [vmem:[%s7 + $0x68] sm:$0xff]
  %v2365 = vld [vmem:[%s7 + $0x70] sm:$0xff]
  %v2366 = vld [vmem:[%s7 + $0x78] sm:$0xff]
  %v2367 = vld [vmem:[%s7 + $0x80] sm:$0xff]
  %v2368 = vld [vmem:[%s7 + $0x88] sm:$0xff]
  %v2369 = vld [vmem:[%s7 + $0x90] sm:$0xff]
  %v2370 = vld [vmem:[%s7 + $0x98] sm:$0xff]
  %v2371 = vld [vmem:[%s7 + $0xa0] sm:$0xff]
  %v2372 = vld [vmem:[%s7 + $0xa8] sm:$0xff]
  %v2373 = vld [vmem:[%s7 + $0xb0] sm:$0xff]
  %v2374 = vld [vmem:[%s7 + $0xb8] sm:$0xff]
  %v2375 = vld [vmem:[%s7 + $0xc0] sm:$0xff]
  %v2376 = vld [vmem:[%s7 + $0xc8] sm:$0xff]
  %v2377 = vld [vmem:[%s7 + $0xd0] sm:$0xff]
  %v2378 = vld [vmem:[%s7 + $0xd8] sm:$0xff]
  %v2379 = vld [vmem:[%s7 + $0xe0] sm:$0xff]
  %v2380 = vld [vmem:[%s7 + $0xe8] sm:$0xff]
  %v2381 = vld [vmem:[%s7 + $0xf0] sm:$0xff]
  %v2382 = vld [vmem:[%s7 + $0xf8] sm:$0xff]
  %v2383 = vld [vmem:[%s7 + $0x100] sm:$0xff]
  %v2384 = vld [vmem:[%s7 + $0x108] sm:$0xff]
  %v2385 = vld [vmem:[%s7 + $0x110] sm:$0xff]
  %v2386 = vld [vmem:[%s7 + $0x118] sm:$0xff]
  %v2387 = vld [vmem:[%s7 + $0x120] sm:$0xff]
  %v2388 = vld [vmem:[%s7 + $0x128] sm:$0xff]
  %v2389 = vld [vmem:[%s7 + $0x130] sm:$0xff]
  %v2390 = vld [vmem:[%s7 + $0x138] sm:$0xff]
  %v2391 = vld [vmem:[%s7 + $0x140] sm:$0xff]
  %v2392 = vld [vmem:[%s7 + $0x148] sm:$0xff]
  %v2393 = vld [vmem:[%s7 + $0x150] sm:$0xff]
  %v2394 = vld [vmem:[%s7 + $0x158] sm:$0xff]
  %v2395 = vld [vmem:[%s7 + $0x160] sm:$0xff]
  %v2396 = vld [vmem:[%s7 + $0x168] sm:$0xff]
  %v2397 = vld [vmem:[%s7 + $0x170] sm:$0xff]
  %v2398 = vld [vmem:[%s7 + $0x178] sm:$0xff]
  %v2399 = vld [vmem:[%s7 + $0x180] sm:$0xff]
  %v2400 = vld [vmem:[%s7 + $0x188] sm:$0xff]
  %v2401 = vld [vmem:[%s7 + $0x190] sm:$0xff]
  %v2402 = vld [vmem:[%s7 + $0x198] sm:$0xff]
  %v2403 = vld [vmem:[%s7 + $0x1a0] sm:$0xff]
  %v2404 = vld [vmem:[%s7 + $0x1a8] sm:$0xff]
  %v2405 = vld [vmem:[%s7 + $0x1b0] sm:$0xff]
  %v2406 = vld [vmem:[%s7 + $0x1b8] sm:$0xff]
  %v2407 = vld [vmem:[%s7 + $0x1c0] sm:$0xff]
  %v2408 = vld [vmem:[%s7 + $0x1c8] sm:$0xff]
  %v2409 = vld [vmem:[%s7 + $0x1d0] sm:$0xff]
  %v2410 = vld [vmem:[%s7 + $0x1d8] sm:$0xff]
  %v2411 = vld [vmem:[%s7 + $0x1e0] sm:$0xff]
  %v2412 = vld [vmem:[%s7 + $0x1e8] sm:$0xff]
  %v2413 = vld [vmem:[%s7 + $0x1f0] sm:$0xff]
  %v2414 = vld [vmem:[%s7 + $0x1f8] sm:$0xff]
  %v2415 = vld [vmem:[%s8] sm:$0xf]
  %v2417 = vlaneseq
  %v2418 = vshrl.u32 %v2417, 7
  %v2419 = vsub.s32 0, %v2418
  %v2420 = vrot.slane %v2415, %v2419
  %v2421 = vlaneseq
  %v2422 = vshrl.u32 %v2421, 7
  %v2423 = vsub.s32 1, %v2422
  %v2424 = vrot.slane %v2415, %v2423
  %v2425 = vlaneseq
  %v2426 = vshrl.u32 %v2425, 7
  %v2427 = vsub.s32 2, %v2426
  %v2428 = vrot.slane %v2415, %v2427
  %v2429 = vlaneseq
  %v2430 = vshrl.u32 %v2429, 7
  %v2431 = vsub.s32 3, %v2430
  %v2432 = vrot.slane %v2415, %v2431
  %v2501 = vunpack.c.l.b16 %v2351
  %v2502 = vunpack.c.h.b16 %v2351
  %v2503 = vunpack.c.l.b16 %v2352
  %v2504 = vunpack.c.h.b16 %v2352
  %v2505 = vunpack.c.l.b16 %v2353
  %v2506 = vunpack.c.h.b16 %v2353
  %v2507 = vunpack.c.l.b16 %v2354
  %v2508 = vunpack.c.h.b16 %v2354
  %v2509 = vunpack.c.l.b16 %v2355
  %v2510 = vunpack.c.h.b16 %v2355
  %v2511 = vunpack.c.l.b16 %v2356
  %v2512 = vunpack.c.h.b16 %v2356
  %v2513 = vunpack.c.l.b16 %v2357
  %v2514 = vunpack.c.h.b16 %v2357
  %v2515 = vunpack.c.l.b16 %v2358
  %v2516 = vunpack.c.h.b16 %v2358
  %v2517 = vunpack.c.l.b16 %v2359
  %v2518 = vunpack.c.h.b16 %v2359
  %v2519 = vunpack.c.l.b16 %v2360
  %v2520 = vunpack.c.h.b16 %v2360
  %v2521 = vunpack.c.l.b16 %v2361
  %v2522 = vunpack.c.h.b16 %v2361
  %v2523 = vunpack.c.l.b16 %v2362
  %v2524 = vunpack.c.h.b16 %v2362
  %v2525 = vunpack.c.l.b16 %v2363
  %v2526 = vunpack.c.h.b16 %v2363
  %v2527 = vunpack.c.l.b16 %v2364
  %v2528 = vunpack.c.h.b16 %v2364
  %v2529 = vunpack.c.l.b16 %v2365
  %v2530 = vunpack.c.h.b16 %v2365
  %v2531 = vunpack.c.l.b16 %v2366
  %v2532 = vunpack.c.h.b16 %v2366
  %v2533 = vunpack.c.l.b16 %v2367
  %v2534 = vunpack.c.h.b16 %v2367
  %v2535 = vunpack.c.l.b16 %v2368
  %v2536 = vunpack.c.h.b16 %v2368
  %v2537 = vunpack.c.l.b16 %v2369
  %v2538 = vunpack.c.h.b16 %v2369
  %v2539 = vunpack.c.l.b16 %v2370
  %v2540 = vunpack.c.h.b16 %v2370
  %v2541 = vunpack.c.l.b16 %v2371
  %v2542 = vunpack.c.h.b16 %v2371
  %v2543 = vunpack.c.l.b16 %v2372
  %v2544 = vunpack.c.h.b16 %v2372
  %v2545 = vunpack.c.l.b16 %v2373
  %v2546 = vunpack.c.h.b16 %v2373
  %v2547 = vunpack.c.l.b16 %v2374
  %v2548 = vunpack.c.h.b16 %v2374
  %v2549 = vunpack.c.l.b16 %v2375
  %v2550 = vunpack.c.h.b16 %v2375
  %v2551 = vunpack.c.l.b16 %v2376
  %v2552 = vunpack.c.h.b16 %v2376
  %v2553 = vunpack.c.l.b16 %v2377
  %v2554 = vunpack.c.h.b16 %v2377
  %v2555 = vunpack.c.l.b16 %v2378
  %v2556 = vunpack.c.h.b16 %v2378
  %v2557 = vunpack.c.l.b16 %v2379
  %v2558 = vunpack.c.h.b16 %v2379
  %v2559 = vunpack.c.l.b16 %v2380
  %v2560 = vunpack.c.h.b16 %v2380
  %v2561 = vunpack.c.l.b16 %v2381
  %v2562 = vunpack.c.h.b16 %v2381
  %v2563 = vunpack.c.l.b16 %v2382
  %v2564 = vunpack.c.h.b16 %v2382
  %v2565 = vunpack.c.l.b16 %v2383
  %v2566 = vunpack.c.h.b16 %v2383
  %v2567 = vunpack.c.l.b16 %v2384
  %v2568 = vunpack.c.h.b16 %v2384
  %v2569 = vunpack.c.l.b16 %v2385
  %v2570 = vunpack.c.h.b16 %v2385
  %v2571 = vunpack.c.l.b16 %v2386
  %v2572 = vunpack.c.h.b16 %v2386
  %v2573 = vunpack.c.l.b16 %v2387
  %v2574 = vunpack.c.h.b16 %v2387
  %v2575 = vunpack.c.l.b16 %v2388
  %v2576 = vunpack.c.h.b16 %v2388
  %v2577 = vunpack.c.l.b16 %v2389
  %v2578 = vunpack.c.h.b16 %v2389
  %v2579 = vunpack.c.l.b16 %v2390
  %v2580 = vunpack.c.h.b16 %v2390
  %v2581 = vunpack.c.l.b16 %v2391
  %v2582 = vunpack.c.h.b16 %v2391
  %v2583 = vunpack.c.l.b16 %v2392
  %v2584 = vunpack.c.h.b16 %v2392
  %v2585 = vunpack.c.l.b16 %v2393
  %v2586 = vunpack.c.h.b16 %v2393
  %v2587 = vunpack.c.l.b16 %v2394
  %v2588 = vunpack.c.h.b16 %v2394
  %v2589 = vunpack.c.l.b16 %v2395
  %v2590 = vunpack.c.h.b16 %v2395
  %v2591 = vunpack.c.l.b16 %v2396
  %v2592 = vunpack.c.h.b16 %v2396
  %v2593 = vunpack.c.l.b16 %v2397
  %v2594 = vunpack.c.h.b16 %v2397
  %v2595 = vunpack.c.l.b16 %v2398
  %v2596 = vunpack.c.h.b16 %v2398
  %v2597 = vunpack.c.l.b16 %v2399
  %v2598 = vunpack.c.h.b16 %v2399
  %v2599 = vunpack.c.l.b16 %v2400
  %v2600 = vunpack.c.h.b16 %v2400
  %v2601 = vunpack.c.l.b16 %v2401
  %v2602 = vunpack.c.h.b16 %v2401
  %v2603 = vunpack.c.l.b16 %v2402
  %v2604 = vunpack.c.h.b16 %v2402
  %v2605 = vunpack.c.l.b16 %v2403
  %v2606 = vunpack.c.h.b16 %v2403
  %v2607 = vunpack.c.l.b16 %v2404
  %v2608 = vunpack.c.h.b16 %v2404
  %v2609 = vunpack.c.l.b16 %v2405
  %v2610 = vunpack.c.h.b16 %v2405
  %v2611 = vunpack.c.l.b16 %v2406
  %v2612 = vunpack.c.h.b16 %v2406
  %v2613 = vunpack.c.l.b16 %v2407
  %v2614 = vunpack.c.h.b16 %v2407
  %v2615 = vunpack.c.l.b16 %v2408
  %v2616 = vunpack.c.h.b16 %v2408
  %v2617 = vunpack.c.l.b16 %v2409
  %v2618 = vunpack.c.h.b16 %v2409
  %v2619 = vunpack.c.l.b16 %v2410
  %v2620 = vunpack.c.h.b16 %v2410
  %v2621 = vunpack.c.l.b16 %v2411
  %v2622 = vunpack.c.h.b16 %v2411
  %v2623 = vunpack.c.l.b16 %v2412
  %v2624 = vunpack.c.h.b16 %v2412
  %v2625 = vunpack.c.l.b16 %v2413
  %v2626 = vunpack.c.h.b16 %v2413
  %v2627 = vunpack.c.l.b16 %v2414
  %v2628 = vunpack.c.h.b16 %v2414
  %v2629 = vpack.c.b16 %v2505, %v2501
  %v2630 = vpack.c.b16 %v2506, %v2502
  %v2631 = vpack.c.b16 %v2507, %v2503
  %v2632 = vpack.c.b16 %v2508, %v2504
  %v2633 = vpack.c.b16 %v2513, %v2509
  %v2634 = vpack.c.b16 %v2514, %v2510
  %v2635 = vpack.c.b16 %v2515, %v2511
  %v2636 = vpack.c.b16 %v2516, %v2512
  %v2637 = vpack.c.b16 %v2521, %v2517
  %v2638 = vpack.c.b16 %v2522, %v2518
  %v2639 = vpack.c.b16 %v2523, %v2519
  %v2640 = vpack.c.b16 %v2524, %v2520
  %v2641 = vpack.c.b16 %v2529, %v2525
  %v2642 = vpack.c.b16 %v2530, %v2526
  %v2643 = vpack.c.b16 %v2531, %v2527
  %v2644 = vpack.c.b16 %v2532, %v2528
  %v2645 = vpack.c.b16 %v2537, %v2533
  %v2646 = vpack.c.b16 %v2538, %v2534
  %v2647 = vpack.c.b16 %v2539, %v2535
  %v2648 = vpack.c.b16 %v2540, %v2536
  %v2649 = vpack.c.b16 %v2545, %v2541
  %v2650 = vpack.c.b16 %v2546, %v2542
  %v2651 = vpack.c.b16 %v2547, %v2543
  %v2652 = vpack.c.b16 %v2548, %v2544
  %v2653 = vpack.c.b16 %v2553, %v2549
  %v2654 = vpack.c.b16 %v2554, %v2550
  %v2655 = vpack.c.b16 %v2555, %v2551
  %v2656 = vpack.c.b16 %v2556, %v2552
  %v2657 = vpack.c.b16 %v2561, %v2557
  %v2658 = vpack.c.b16 %v2562, %v2558
  %v2659 = vpack.c.b16 %v2563, %v2559
  %v2660 = vpack.c.b16 %v2564, %v2560
  %v2661 = vpack.c.b16 %v2569, %v2565
  %v2662 = vpack.c.b16 %v2570, %v2566
  %v2663 = vpack.c.b16 %v2571, %v2567
  %v2664 = vpack.c.b16 %v2572, %v2568
  %v2665 = vpack.c.b16 %v2577, %v2573
  %v2666 = vpack.c.b16 %v2578, %v2574
  %v2667 = vpack.c.b16 %v2579, %v2575
  %v2668 = vpack.c.b16 %v2580, %v2576
  %v2669 = vpack.c.b16 %v2585, %v2581
  %v2670 = vpack.c.b16 %v2586, %v2582
  %v2671 = vpack.c.b16 %v2587, %v2583
  %v2672 = vpack.c.b16 %v2588, %v2584
  %v2673 = vpack.c.b16 %v2593, %v2589
  %v2674 = vpack.c.b16 %v2594, %v2590
  %v2675 = vpack.c.b16 %v2595, %v2591
  %v2676 = vpack.c.b16 %v2596, %v2592
  %v2677 = vpack.c.b16 %v2601, %v2597
  %v2678 = vpack.c.b16 %v2602, %v2598
  %v2679 = vpack.c.b16 %v2603, %v2599
  %v2680 = vpack.c.b16 %v2604, %v2600
  %v2681 = vpack.c.b16 %v2609, %v2605
  %v2682 = vpack.c.b16 %v2610, %v2606
  %v2683 = vpack.c.b16 %v2611, %v2607
  %v2684 = vpack.c.b16 %v2612, %v2608
  %v2685 = vpack.c.b16 %v2617, %v2613
  %v2686 = vpack.c.b16 %v2618, %v2614
  %v2687 = vpack.c.b16 %v2619, %v2615
  %v2688 = vpack.c.b16 %v2620, %v2616
  %v2689 = vpack.c.b16 %v2625, %v2621
  %v2690 = vpack.c.b16 %v2626, %v2622
  %v2691 = vpack.c.b16 %v2627, %v2623
  %v2692 = vpack.c.b16 %v2628, %v2624
  %2757 = vmatprep.subr.bf16.mxu0 %v2630
  %2758 = vmatpush1.bf16.msra.mxu0 %v2629
  %2759 = vmatprep.subr.bf16.mxu0 %v2634
  %2760 = vmatpush1.bf16.msra.mxu0 %v2633
  %2761 = vmatprep.subr.bf16.mxu0 %v2638
  %2762 = vmatpush1.bf16.msra.mxu0 %v2637
  %2763 = vmatprep.subr.bf16.mxu0 %v2642
  %2764 = vmatpush1.bf16.msra.mxu0 %v2641
  %2765 = vmatprep.subr.bf16.mxu0 %v2646
  %2766 = vmatpush1.bf16.msra.mxu0 %v2645
  %2767 = vmatprep.subr.bf16.mxu0 %v2650
  %2768 = vmatpush1.bf16.msra.mxu0 %v2649
  %2769 = vmatprep.subr.bf16.mxu0 %v2654
  %2770 = vmatpush1.bf16.msra.mxu0 %v2653
  %2771 = vmatprep.subr.bf16.mxu0 %v2658
  %2772 = vmatpush1.bf16.msra.mxu0 %v2657
  %2773 = vmatprep.subr.bf16.mxu0 %v2662
  %2774 = vmatpush1.bf16.msra.mxu0 %v2661
  %2775 = vmatprep.subr.bf16.mxu0 %v2666
  %2776 = vmatpush1.bf16.msra.mxu0 %v2665
  %2777 = vmatprep.subr.bf16.mxu0 %v2670
  %2778 = vmatpush1.bf16.msra.mxu0 %v2669
  %2779 = vmatprep.subr.bf16.mxu0 %v2674
  %2780 = vmatpush1.bf16.msra.mxu0 %v2673
  %2781 = vmatprep.subr.bf16.mxu0 %v2678
  %2782 = vmatpush1.bf16.msra.mxu0 %v2677
  %2783 = vmatprep.subr.bf16.mxu0 %v2682
  %2784 = vmatpush1.bf16.msra.mxu0 %v2681
  %2785 = vmatprep.subr.bf16.mxu0 %v2686
  %2786 = vmatpush1.bf16.msra.mxu0 %v2685
  %2787 = vmatprep.subr.bf16.mxu0 %v2690
  %2788 = vmatpush1.bf16.msra.mxu0 %v2689
  %2789 = vmatprep.mubr.bf16.mxu0 %v2350
  %2790 = vmatmul.mubr.bf16.gmra.mrb[0].mxu0 %v2349
  %v2791 = vpop.f32.mrb[0].mxu0
  %v2792 = vadd.f32 %v2420, %v2791
  %v2793 = vpop.f32.mrb[0].mxu0
  %v2794 = vadd.f32 %v2424, %v2793
  %v2795 = vpop.f32.mrb[0].mxu0
  %v2796 = vadd.f32 %v2420, %v2795
  %v2797 = vpop.f32.mrb[0].mxu0
  %v2798 = vadd.f32 %v2424, %v2797
  %2799 = vdwg.mxu0
  %2800 = vmatprep.subr.bf16.mxu0 %v2632
  %2801 = vmatpush1.bf16.msra.mxu0 %v2631
  %2802 = vmatprep.subr.bf16.mxu0 %v2636
  %2803 = vmatpush1.bf16.msra.mxu0 %v2635
  %2804 = vmatprep.subr.bf16.mxu0 %v2640
  %2805 = vmatpush1.bf16.msra.mxu0 %v2639
  %2806 = vmatprep.subr.bf16.mxu0 %v2644
  %2807 = vmatpush1.bf16.msra.mxu0 %v2643
  %2808 = vmatprep.subr.bf16.mxu0 %v2648
  %2809 = vmatpush1.bf16.msra.mxu0 %v2647
  %2810 = vmatprep.subr.bf16.mxu0 %v2652
  %2811 = vmatpush1.bf16.msra.mxu0 %v2651
  %2812 = vmatprep.subr.bf16.mxu0 %v2656
  %2813 = vmatpush1.bf16.msra.mxu0 %v2655
  %2814 = vmatprep.subr.bf16.mxu0 %v2660
  %2815 = vmatpush1.bf16.msra.mxu0 %v2659
  %2816 = vmatprep.subr.bf16.mxu0 %v2664
  %2817 = vmatpush1.bf16.msra.mxu0 %v2663
  %2818 = vmatprep.subr.bf16.mxu0 %v2668
  %2819 = vmatpush1.bf16.msra.mxu0 %v2667
  %2820 = vmatprep.subr.bf16.mxu0 %v2672
  %2821 = vmatpush1.bf16.msra.mxu0 %v2671
  %2822 = vmatprep.subr.bf16.mxu0 %v2676
  %2823 = vmatpush1.bf16.msra.mxu0 %v2675
  %2824 = vmatprep.subr.bf16.mxu0 %v2680
  %2825 = vmatpush1.bf16.msra.mxu0 %v2679
  %2826 = vmatprep.subr.bf16.mxu0 %v2684
  %2827 = vmatpush1.bf16.msra.mxu0 %v2683
  %2828 = vmatprep.subr.bf16.mxu0 %v2688
  %2829 = vmatpush1.bf16.msra.mxu0 %v2687
  %2830 = vmatprep.subr.bf16.mxu0 %v2692
  %2831 = vmatpush1.bf16.msra.mxu0 %v2691
  %2832 = vmatprep.mubr.bf16.mxu0 %v2350
  %2833 = vmatmul.mubr.bf16.gmra.mrb[0].mxu0 %v2349
  %v2834 = vpop.f32.mrb[0].mxu0
  %v2835 = vadd.f32 %v2428, %v2834
  %v2836 = vpop.f32.mrb[0].mxu0
  %v2837 = vadd.f32 %v2432, %v2836
  %v2838 = vpop.f32.mrb[0].mxu0
  %v2839 = vadd.f32 %v2428, %v2838
  %v2840 = vpop.f32.mrb[0].mxu0
  %v2841 = vadd.f32 %v2432, %v2840
  %2842 = vdwg.mxu0
  %v2843 = vpack.c.bf16 %v2796, %v2792
  %v2844 = vpack.c.bf16 %v2798, %v2794
  %v2845 = vpack.c.bf16 %v2839, %v2835
  %v2846 = vpack.c.bf16 %v2841, %v2837
  %v2847 = vmax.bf16 %v2843, 0
  %v2848 = vmax.bf16 %v2844, 0
  %v2849 = vmax.bf16 %v2845, 0
  %v2850 = vmax.bf16 %v2846, 0
  %v2851 = vld [vmem:[%s9] sm:$0xff]
  %v2852 = vld [vmem:[%s9 + $0x8] sm:$0xff]
  %v2853 = vld [vmem:[%s9 + $0x10] sm:$0xff]
  %v2854 = vld [vmem:[%s9 + $0x18] sm:$0xf]
  %v2855 = vld [vmem:[%s9 + $0x1c] sm:$0xff]
  %v2856 = vld [vmem:[%s9 + $0x24] sm:$0xff]
  %v2857 = vld [vmem:[%s9 + $0x2c] sm:$0xff]
  %v2858 = vld [vmem:[%s9 + $0x34] sm:$0xf]
  %v2859 = vld [vmem:[%s9 + $0x38] sm:$0xff]
  %v2860 = vld [vmem:[%s9 + $0x40] sm:$0xff]
  %v2861 = vld [vmem:[%s9 + $0x48] sm:$0xff]
  %v2862 = vld [vmem:[%s9 + $0x50] sm:$0xf]
  %v2863 = vld [vmem:[%s9 + $0x54] sm:$0xff]
  %v2864 = vld [vmem:[%s9 + $0x5c] sm:$0xff]
  %v2865 = vld [vmem:[%s9 + $0x64] sm:$0xff]
  %v2866 = vld [vmem:[%s9 + $0x6c] sm:$0xf]
  %v2867 = vld [vmem:[%s9 + $0x70] sm:$0xff]
  %v2868 = vld [vmem:[%s9 + $0x78] sm:$0xff]
  %v2869 = vld [vmem:[%s9 + $0x80] sm:$0xff]
  %v2870 = vld [vmem:[%s9 + $0x88] sm:$0xf]
  %v2871 = vld [vmem:[%s9 + $0x8c] sm:$0xff]
  %v2872 = vld [vmem:[%s9 + $0x94] sm:$0xff]
  %v2873 = vld [vmem:[%s9 + $0x9c] sm:$0xff]
  %v2874 = vld [vmem:[%s9 + $0xa4] sm:$0xf]
  %v2875 = vld [vmem:[%s9 + $0xa8] sm:$0xff]
  %v2876 = vld [vmem:[%s9 + $0xb0] sm:$0xff]
  %v2877 = vld [vmem:[%s9 + $0xb8] sm:$0xff]
  %v2878 = vld [vmem:[%s9 + $0xc0] sm:$0xf]
  %v2879 = vld [vmem:[%s9 + $0xc4] sm:$0xff]
  %v2880 = vld [vmem:[%s9 + $0xcc] sm:$0xff]
  %v2881 = vld [vmem:[%s9 + $0xd4] sm:$0xff]
  %v2882 = vld [vmem:[%s9 + $0xdc] sm:$0xf]
  %v2883 = vld [vmem:[%s9 + $0xe0] sm:$0xff]
  %v2884 = vld [vmem:[%s9 + $0xe8] sm:$0xff]
  %v2885 = vld [vmem:[%s9 + $0xf0] sm:$0xff]
  %v2886 = vld [vmem:[%s9 + $0xf8] sm:$0xf]
  %v2887 = vld [vmem:[%s9 + $0xfc] sm:$0xff]
  %v2888 = vld [vmem:[%s9 + $0x104] sm:$0xff]
  %v2889 = vld [vmem:[%s9 + $0x10c] sm:$0xff]
  %v2890 = vld [vmem:[%s9 + $0x114] sm:$0xf]
  %v2891 = vld [vmem:[%s9 + $0x118] sm:$0xff]
  %v2892 = vld [vmem:[%s9 + $0x120] sm:$0xff]
  %v2893 = vld [vmem:[%s9 + $0x128] sm:$0xff]
  %v2894 = vld [vmem:[%s9 + $0x130] sm:$0xf]
  %v2895 = vld [vmem:[%s9 + $0x134] sm:$0xff]
  %v2896 = vld [vmem:[%s9 + $0x13c] sm:$0xff]
  %v2897 = vld [vmem:[%s9 + $0x144] sm:$0xff]
  %v2898 = vld [vmem:[%s9 + $0x14c] sm:$0xf]
  %v2899 = vld [vmem:[%s9 + $0x150] sm:$0xff]
  %v2900 = vld [vmem:[%s9 + $0x158] sm:$0xff]
  %v2901 = vld [vmem:[%s9 + $0x160] sm:$0xff]
  %v2902 = vld [vmem:[%s9 + $0x168] sm:$0xf]
  %v2903 = vld [vmem:[%s9 + $0x16c] sm:$0xff]
  %v2904 = vld [vmem:[%s9 + $0x174] sm:$0xff]
  %v2905 = vld [vmem:[%s9 + $0x17c] sm:$0xff]
  %v2906 = vld [vmem:[%s9 + $0x184] sm:$0xf]
  %v2907 = vld [vmem:[%s9 + $0x188] sm:$0xff]
  %v2908 = vld [vmem:[%s9 + $0x190] sm:$0xff]
  %v2909 = vld [vmem:[%s9 + $0x198] sm:$0xff]
  %v2910 = vld [vmem:[%s9 + $0x1a0] sm:$0xf]
  %v2911 = vld [vmem:[%s9 + $0x1a4] sm:$0xff]
  %v2912 = vld [vmem:[%s9 + $0x1ac] sm:$0xff]
  %v2913 = vld [vmem:[%s9 + $0x1b4] sm:$0xff]
  %v2914 = vld [vmem:[%s9 + $0x1bc] sm:$0xf]
  %v2915 = vld [vmem:[%s9 + $0x1c0] sm:$0xff]
  %v2916 = vld [vmem:[%s9 + $0x1c8] sm:$0xff]
  %v2917 = vld [vmem:[%s9 + $0x1d0] sm:$0xff]
  %v2918 = vld [vmem:[%s9 + $0x1d8] sm:$0xf]
  %v2919 = vld [vmem:[%s9 + $0x1dc] sm:$0xff]
  %v2920 = vld [vmem:[%s9 + $0x1e4] sm:$0xff]
  %v2921 = vld [vmem:[%s9 + $0x1ec] sm:$0xff]
  %v2922 = vld [vmem:[%s9 + $0x1f4] sm:$0xf]
  %v2923 = vld [vmem:[%s9 + $0x1f8] sm:$0xff]
  %v2924 = vld [vmem:[%s9 + $0x200] sm:$0xff]
  %v2925 = vld [vmem:[%s9 + $0x208] sm:$0xff]
  %v2926 = vld [vmem:[%s9 + $0x210] sm:$0xf]
  %v2927 = vld [vmem:[%s9 + $0x214] sm:$0xff]
  %v2928 = vld [vmem:[%s9 + $0x21c] sm:$0xff]
  %v2929 = vld [vmem:[%s9 + $0x224] sm:$0xff]
  %v2930 = vld [vmem:[%s9 + $0x22c] sm:$0xf]
  %v2931 = vld [vmem:[%s9 + $0x230] sm:$0xff]
  %v2932 = vld [vmem:[%s9 + $0x238] sm:$0xff]
  %v2933 = vld [vmem:[%s9 + $0x240] sm:$0xff]
  %v2934 = vld [vmem:[%s9 + $0x248] sm:$0xf]
  %v2935 = vld [vmem:[%s9 + $0x24c] sm:$0xff]
  %v2936 = vld [vmem:[%s9 + $0x254] sm:$0xff]
  %v2937 = vld [vmem:[%s9 + $0x25c] sm:$0xff]
  %v2938 = vld [vmem:[%s9 + $0x264] sm:$0xf]
  %v2939 = vld [vmem:[%s9 + $0x268] sm:$0xff]
  %v2940 = vld [vmem:[%s9 + $0x270] sm:$0xff]
  %v2941 = vld [vmem:[%s9 + $0x278] sm:$0xff]
  %v2942 = vld [vmem:[%s9 + $0x280] sm:$0xf]
  %v2943 = vld [vmem:[%s9 + $0x284] sm:$0xff]
  %v2944 = vld [vmem:[%s9 + $0x28c] sm:$0xff]
  %v2945 = vld [vmem:[%s9 + $0x294] sm:$0xff]
  %v2946 = vld [vmem:[%s9 + $0x29c] sm:$0xf]
  %v2947 = vld [vmem:[%s9 + $0x2a0] sm:$0xff]
  %v2948 = vld [vmem:[%s9 + $0x2a8] sm:$0xff]
  %v2949 = vld [vmem:[%s9 + $0x2b0] sm:$0xff]
  %v2950 = vld [vmem:[%s9 + $0x2b8] sm:$0xf]
  %v2951 = vld [vmem:[%s9 + $0x2bc] sm:$0xff]
  %v2952 = vld [vmem:[%s9 + $0x2c4] sm:$0xff]
  %v2953 = vld [vmem:[%s9 + $0x2cc] sm:$0xff]
  %v2954 = vld [vmem:[%s9 + $0x2d4] sm:$0xf]
  %v2955 = vld [vmem:[%s9 + $0x2d8] sm:$0xff]
  %v2956 = vld [vmem:[%s9 + $0x2e0] sm:$0xff]
  %v2957 = vld [vmem:[%s9 + $0x2e8] sm:$0xff]
  %v2958 = vld [vmem:[%s9 + $0x2f0] sm:$0xf]
  %v2959 = vld [vmem:[%s9 + $0x2f4] sm:$0xff]
  %v2960 = vld [vmem:[%s9 + $0x2fc] sm:$0xff]
  %v2961 = vld [vmem:[%s9 + $0x304] sm:$0xff]
  %v2962 = vld [vmem:[%s9 + $0x30c] sm:$0xf]
  %v2963 = vld [vmem:[%s9 + $0x310] sm:$0xff]
  %v2964 = vld [vmem:[%s9 + $0x318] sm:$0xff]
  %v2965 = vld [vmem:[%s9 + $0x320] sm:$0xff]
  %v2966 = vld [vmem:[%s9 + $0x328] sm:$0xf]
  %v2967 = vld [vmem:[%s9 + $0x32c] sm:$0xff]
  %v2968 = vld [vmem:[%s9 + $0x334] sm:$0xff]
  %v2969 = vld [vmem:[%s9 + $0x33c] sm:$0xff]
  %v2970 = vld [vmem:[%s9 + $0x344] sm:$0xf]
  %v2971 = vld [vmem:[%s9 + $0x348] sm:$0xff]
  %v2972 = vld [vmem:[%s9 + $0x350] sm:$0xff]
  %v2973 = vld [vmem:[%s9 + $0x358] sm:$0xff]
  %v2974 = vld [vmem:[%s9 + $0x360] sm:$0xf]
  %v2975 = vld [vmem:[%s9 + $0x364] sm:$0xff]
  %v2976 = vld [vmem:[%s9 + $0x36c] sm:$0xff]
  %v2977 = vld [vmem:[%s9 + $0x374] sm:$0xff]
  %v2978 = vld [vmem:[%s9 + $0x37c] sm:$0xf]
  %v2979 = vld [vmem:[%s9 + $0x380] sm:$0xff]
  %v2980 = vld [vmem:[%s9 + $0x388] sm:$0xff]
  %v2981 = vld [vmem:[%s9 + $0x390] sm:$0xff]
  %v2982 = vld [vmem:[%s9 + $0x398] sm:$0xf]
  %v2983 = vld [vmem:[%s9 + $0x39c] sm:$0xff]
  %v2984 = vld [vmem:[%s9 + $0x3a4] sm:$0xff]
  %v2985 = vld [vmem:[%s9 + $0x3ac] sm:$0xff]
  %v2986 = vld [vmem:[%s9 + $0x3b4] sm:$0xf]
  %v2987 = vld [vmem:[%s9 + $0x3b8] sm:$0xff]
  %v2988 = vld [vmem:[%s9 + $0x3c0] sm:$0xff]
  %v2989 = vld [vmem:[%s9 + $0x3c8] sm:$0xff]
  %v2990 = vld [vmem:[%s9 + $0x3d0] sm:$0xf]
  %v2991 = vld [vmem:[%s9 + $0x3d4] sm:$0xff]
  %v2992 = vld [vmem:[%s9 + $0x3dc] sm:$0xff]
  %v2993 = vld [vmem:[%s9 + $0x3e4] sm:$0xff]
  %v2994 = vld [vmem:[%s9 + $0x3ec] sm:$0xf]
  %v2995 = vld [vmem:[%s9 + $0x3f0] sm:$0xff]
  %v2996 = vld [vmem:[%s9 + $0x3f8] sm:$0xff]
  %v2997 = vld [vmem:[%s9 + $0x400] sm:$0xff]
  %v2998 = vld [vmem:[%s9 + $0x408] sm:$0xf]
  %v2999 = vld [vmem:[%s9 + $0x40c] sm:$0xff]
  %v3000 = vld [vmem:[%s9 + $0x414] sm:$0xff]
  %v3001 = vld [vmem:[%s9 + $0x41c] sm:$0xff]
  %v3002 = vld [vmem:[%s9 + $0x424] sm:$0xf]
  %v3003 = vld [vmem:[%s9 + $0x428] sm:$0xff]
  %v3004 = vld [vmem:[%s9 + $0x430] sm:$0xff]
  %v3005 = vld [vmem:[%s9 + $0x438] sm:$0xff]
  %v3006 = vld [vmem:[%s9 + $0x440] sm:$0xf]
  %v3007 = vld [vmem:[%s9 + $0x444] sm:$0xff]
  %v3008 = vld [vmem:[%s9 + $0x44c] sm:$0xff]
  %v3009 = vld [vmem:[%s9 + $0x454] sm:$0xff]
  %v3010 = vld [vmem:[%s9 + $0x45c] sm:$0xf]
  %v3011 = vld [vmem:[%s9 + $0x460] sm:$0xff]
  %v3012 = vld [vmem:[%s9 + $0x468] sm:$0xff]
  %v3013 = vld [vmem:[%s9 + $0x470] sm:$0xff]
  %v3014 = vld [vmem:[%s9 + $0x478] sm:$0xf]
  %v3015 = vld [vmem:[%s9 + $0x47c] sm:$0xff]
  %v3016 = vld [vmem:[%s9 + $0x484] sm:$0xff]
  %v3017 = vld [vmem:[%s9 + $0x48c] sm:$0xff]
  %v3018 = vld [vmem:[%s9 + $0x494] sm:$0xf]
  %v3019 = vld [vmem:[%s9 + $0x498] sm:$0xff]
  %v3020 = vld [vmem:[%s9 + $0x4a0] sm:$0xff]
  %v3021 = vld [vmem:[%s9 + $0x4a8] sm:$0xff]
  %v3022 = vld [vmem:[%s9 + $0x4b0] sm:$0xf]
  %v3023 = vld [vmem:[%s9 + $0x4b4] sm:$0xff]
  %v3024 = vld [vmem:[%s9 + $0x4bc] sm:$0xff]
  %v3025 = vld [vmem:[%s9 + $0x4c4] sm:$0xff]
  %v3026 = vld [vmem:[%s9 + $0x4cc] sm:$0xf]
  %v3027 = vld [vmem:[%s9 + $0x4d0] sm:$0xff]
  %v3028 = vld [vmem:[%s9 + $0x4d8] sm:$0xff]
  %v3029 = vld [vmem:[%s9 + $0x4e0] sm:$0xff]
  %v3030 = vld [vmem:[%s9 + $0x4e8] sm:$0xf]
  %v3031 = vld [vmem:[%s9 + $0x4ec] sm:$0xff]
  %v3032 = vld [vmem:[%s9 + $0x4f4] sm:$0xff]
  %v3033 = vld [vmem:[%s9 + $0x4fc] sm:$0xff]
  %v3034 = vld [vmem:[%s9 + $0x504] sm:$0xf]
  %v3035 = vld [vmem:[%s9 + $0x508] sm:$0xff]
  %v3036 = vld [vmem:[%s9 + $0x510] sm:$0xff]
  %v3037 = vld [vmem:[%s9 + $0x518] sm:$0xff]
  %v3038 = vld [vmem:[%s9 + $0x520] sm:$0xf]
  %v3039 = vld [vmem:[%s9 + $0x524] sm:$0xff]
  %v3040 = vld [vmem:[%s9 + $0x52c] sm:$0xff]
  %v3041 = vld [vmem:[%s9 + $0x534] sm:$0xff]
  %v3042 = vld [vmem:[%s9 + $0x53c] sm:$0xf]
  %v3043 = vld [vmem:[%s9 + $0x540] sm:$0xff]
  %v3044 = vld [vmem:[%s9 + $0x548] sm:$0xff]
  %v3045 = vld [vmem:[%s9 + $0x550] sm:$0xff]
  %v3046 = vld [vmem:[%s9 + $0x558] sm:$0xf]
  %v3047 = vld [vmem:[%s9 + $0x55c] sm:$0xff]
  %v3048 = vld [vmem:[%s9 + $0x564] sm:$0xff]
  %v3049 = vld [vmem:[%s9 + $0x56c] sm:$0xff]
  %v3050 = vld [vmem:[%s9 + $0x574] sm:$0xf]
  %v3051 = vld [vmem:[%s9 + $0x578] sm:$0xff]
  %v3052 = vld [vmem:[%s9 + $0x580] sm:$0xff]
  %v3053 = vld [vmem:[%s9 + $0x588] sm:$0xff]
  %v3054 = vld [vmem:[%s9 + $0x590] sm:$0xf]
  %v3055 = vld [vmem:[%s9 + $0x594] sm:$0xff]
  %v3056 = vld [vmem:[%s9 + $0x59c] sm:$0xff]
  %v3057 = vld [vmem:[%s9 + $0x5a4] sm:$0xff]
  %v3058 = vld [vmem:[%s9 + $0x5ac] sm:$0xf]
  %v3059 = vld [vmem:[%s9 + $0x5b0] sm:$0xff]
  %v3060 = vld [vmem:[%s9 + $0x5b8] sm:$0xff]
  %v3061 = vld [vmem:[%s9 + $0x5c0] sm:$0xff]
  %v3062 = vld [vmem:[%s9 + $0x5c8] sm:$0xf]
  %v3063 = vld [vmem:[%s9 + $0x5cc] sm:$0xff]
  %v3064 = vld [vmem:[%s9 + $0x5d4] sm:$0xff]
  %v3065 = vld [vmem:[%s9 + $0x5dc] sm:$0xff]
  %v3066 = vld [vmem:[%s9 + $0x5e4] sm:$0xf]
  %v3067 = vld [vmem:[%s9 + $0x5e8] sm:$0xff]
  %v3068 = vld [vmem:[%s9 + $0x5f0] sm:$0xff]
  %v3069 = vld [vmem:[%s9 + $0x5f8] sm:$0xff]
  %v3070 = vld [vmem:[%s9 + $0x600] sm:$0xf]
  %v3071 = vld [vmem:[%s9 + $0x604] sm:$0xff]
  %v3072 = vld [vmem:[%s9 + $0x60c] sm:$0xff]
  %v3073 = vld [vmem:[%s9 + $0x614] sm:$0xff]
  %v3074 = vld [vmem:[%s9 + $0x61c] sm:$0xf]
  %v3075 = vld [vmem:[%s9 + $0x620] sm:$0xff]
  %v3076 = vld [vmem:[%s9 + $0x628] sm:$0xff]
  %v3077 = vld [vmem:[%s9 + $0x630] sm:$0xff]
  %v3078 = vld [vmem:[%s9 + $0x638] sm:$0xf]
  %v3079 = vld [vmem:[%s9 + $0x63c] sm:$0xff]
  %v3080 = vld [vmem:[%s9 + $0x644] sm:$0xff]
  %v3081 = vld [vmem:[%s9 + $0x64c] sm:$0xff]
  %v3082 = vld [vmem:[%s9 + $0x654] sm:$0xf]
  %v3083 = vld [vmem:[%s9 + $0x658] sm:$0xff]
  %v3084 = vld [vmem:[%s9 + $0x660] sm:$0xff]
  %v3085 = vld [vmem:[%s9 + $0x668] sm:$0xff]
  %v3086 = vld [vmem:[%s9 + $0x670] sm:$0xf]
  %v3087 = vld [vmem:[%s9 + $0x674] sm:$0xff]
  %v3088 = vld [vmem:[%s9 + $0x67c] sm:$0xff]
  %v3089 = vld [vmem:[%s9 + $0x684] sm:$0xff]
  %v3090 = vld [vmem:[%s9 + $0x68c] sm:$0xf]
  %v3091 = vld [vmem:[%s9 + $0x690] sm:$0xff]
  %v3092 = vld [vmem:[%s9 + $0x698] sm:$0xff]
  %v3093 = vld [vmem:[%s9 + $0x6a0] sm:$0xff]
  %v3094 = vld [vmem:[%s9 + $0x6a8] sm:$0xf]
  %v3095 = vld [vmem:[%s9 + $0x6ac] sm:$0xff]
  %v3096 = vld [vmem:[%s9 + $0x6b4] sm:$0xff]
  %v3097 = vld [vmem:[%s9 + $0x6bc] sm:$0xff]
  %v3098 = vld [vmem:[%s9 + $0x6c4] sm:$0xf]
  %v3099 = vld [vmem:[%s9 + $0x6c8] sm:$0xff]
  %v3100 = vld [vmem:[%s9 + $0x6d0] sm:$0xff]
  %v3101 = vld [vmem:[%s9 + $0x6d8] sm:$0xff]
  %v3102 = vld [vmem:[%s9 + $0x6e0] sm:$0xf]
  %v3103 = vld [vmem:[%s9 + $0x6e4] sm:$0xff]
  %v3104 = vld [vmem:[%s9 + $0x6ec] sm:$0xff]
  %v3105 = vld [vmem:[%s9 + $0x6f4] sm:$0xff]
  %v3106 = vld [vmem:[%s9 + $0x6fc] sm:$0xf]
  %v3107 = vld [vmem:[%s10] sm:$0x7f]
  %v3109 = vlaneseq
  %v3110 = vshrl.u32 %v3109, 7
  %v3111 = vsub.s32 0, %v3110
  %v3112 = vrot.slane %v3107, %v3111
  %v3113 = vlaneseq
  %v3114 = vshrl.u32 %v3113, 7
  %v3115 = vsub.s32 1, %v3114
  %v3116 = vrot.slane %v3107, %v3115
  %v3117 = vlaneseq
  %v3118 = vshrl.u32 %v3117, 7
  %v3119 = vsub.s32 2, %v3118
  %v3120 = vrot.slane %v3107, %v3119
  %v3121 = vlaneseq
  %v3122 = vshrl.u32 %v3121, 7
  %v3123 = vsub.s32 3, %v3122
  %v3124 = vrot.slane %v3107, %v3123
  %v3125 = vlaneseq
  %v3126 = vshrl.u32 %v3125, 7
  %v3127 = vsub.s32 4, %v3126
  %v3128 = vrot.slane %v3107, %v3127
  %v3129 = vlaneseq
  %v3130 = vshrl.u32 %v3129, 7
  %v3131 = vsub.s32 5, %v3130
  %v3132 = vrot.slane %v3107, %v3131
  %v3133 = vlaneseq
  %v3134 = vshrl.u32 %v3133, 7
  %v3135 = vsub.s32 6, %v3134
  %v3136 = vrot.slane %v3107, %v3135
  %v3400 = vunpack.c.l.b16 %v2851
  %v3401 = vunpack.c.h.b16 %v2851
  %v3402 = vunpack.c.l.b16 %v2852
  %v3403 = vunpack.c.h.b16 %v2852
  %v3404 = vunpack.c.l.b16 %v2853
  %v3405 = vunpack.c.h.b16 %v2853
  %v3406 = vunpack.c.l.b16 %v2854
  %v3407 = vunpack.c.l.b16 %v2855
  %v3408 = vunpack.c.h.b16 %v2855
  %v3409 = vunpack.c.l.b16 %v2856
  %v3410 = vunpack.c.h.b16 %v2856
  %v3411 = vunpack.c.l.b16 %v2857
  %v3412 = vunpack.c.h.b16 %v2857
  %v3413 = vunpack.c.l.b16 %v2858
  %v3414 = vunpack.c.l.b16 %v2859
  %v3415 = vunpack.c.h.b16 %v2859
  %v3416 = vunpack.c.l.b16 %v2860
  %v3417 = vunpack.c.h.b16 %v2860
  %v3418 = vunpack.c.l.b16 %v2861
  %v3419 = vunpack.c.h.b16 %v2861
  %v3420 = vunpack.c.l.b16 %v2862
  %v3421 = vunpack.c.l.b16 %v2863
  %v3422 = vunpack.c.h.b16 %v2863
  %v3423 = vunpack.c.l.b16 %v2864
  %v3424 = vunpack.c.h.b16 %v2864
  %v3425 = vunpack.c.l.b16 %v2865
  %v3426 = vunpack.c.h.b16 %v2865
  %v3427 = vunpack.c.l.b16 %v2866
  %v3428 = vunpack.c.l.b16 %v2867
  %v3429 = vunpack.c.h.b16 %v2867
  %v3430 = vunpack.c.l.b16 %v2868
  %v3431 = vunpack.c.h.b16 %v2868
  %v3432 = vunpack.c.l.b16 %v2869
  %v3433 = vunpack.c.h.b16 %v2869
  %v3434 = vunpack.c.l.b16 %v2870
  %v3435 = vunpack.c.l.b16 %v2871
  %v3436 = vunpack.c.h.b16 %v2871
  %v3437 = vunpack.c.l.b16 %v2872
  %v3438 = vunpack.c.h.b16 %v2872
  %v3439 = vunpack.c.l.b16 %v2873
  %v3440 = vunpack.c.h.b16 %v2873
  %v3441 = vunpack.c.l.b16 %v2874
  %v3442 = vunpack.c.l.b16 %v2875
  %v3443 = vunpack.c.h.b16 %v2875
  %v3444 = vunpack.c.l.b16 %v2876
  %v3445 = vunpack.c.h.b16 %v2876
  %v3446 = vunpack.c.l.b16 %v2877
  %v3447 = vunpack.c.h.b16 %v2877
  %v3448 = vunpack.c.l.b16 %v2878
  %v3449 = vunpack.c.l.b16 %v2879
  %v3450 = vunpack.c.h.b16 %v2879
  %v3451 = vunpack.c.l.b16 %v2880
  %v3452 = vunpack.c.h.b16 %v2880
  %v3453 = vunpack.c.l.b16 %v2881
  %v3454 = vunpack.c.h.b16 %v2881
  %v3455 = vunpack.c.l.b16 %v2882
  %v3456 = vunpack.c.l.b16 %v2883
  %v3457 = vunpack.c.h.b16 %v2883
  %v3458 = vunpack.c.l.b16 %v2884
  %v3459 = vunpack.c.h.b16 %v2884
  %v3460 = vunpack.c.l.b16 %v2885
  %v3461 = vunpack.c.h.b16 %v2885
  %v3462 = vunpack.c.l.b16 %v2886
  %v3463 = vunpack.c.l.b16 %v2887
  %v3464 = vunpack.c.h.b16 %v2887
  %v3465 = vunpack.c.l.b16 %v2888
  %v3466 = vunpack.c.h.b16 %v2888
  %v3467 = vunpack.c.l.b16 %v2889
  %v3468 = vunpack.c.h.b16 %v2889
  %v3469 = vunpack.c.l.b16 %v2890
  %v3470 = vunpack.c.l.b16 %v2891
  %v3471 = vunpack.c.h.b16 %v2891
  %v3472 = vunpack.c.l.b16 %v2892
  %v3473 = vunpack.c.h.b16 %v2892
  %v3474 = vunpack.c.l.b16 %v2893
  %v3475 = vunpack.c.h.b16 %v2893
  %v3476 = vunpack.c.l.b16 %v2894
  %v3477 = vunpack.c.l.b16 %v2895
  %v3478 = vunpack.c.h.b16 %v2895
  %v3479 = vunpack.c.l.b16 %v2896
  %v3480 = vunpack.c.h.b16 %v2896
  %v3481 = vunpack.c.l.b16 %v2897
  %v3482 = vunpack.c.h.b16 %v2897
  %v3483 = vunpack.c.l.b16 %v2898
  %v3484 = vunpack.c.l.b16 %v2899
  %v3485 = vunpack.c.h.b16 %v2899
  %v3486 = vunpack.c.l.b16 %v2900
  %v3487 = vunpack.c.h.b16 %v2900
  %v3488 = vunpack.c.l.b16 %v2901
  %v3489 = vunpack.c.h.b16 %v2901
  %v3490 = vunpack.c.l.b16 %v2902
  %v3491 = vunpack.c.l.b16 %v2903
  %v3492 = vunpack.c.h.b16 %v2903
  %v3493 = vunpack.c.l.b16 %v2904
  %v3494 = vunpack.c.h.b16 %v2904
  %v3495 = vunpack.c.l.b16 %v2905
  %v3496 = vunpack.c.h.b16 %v2905
  %v3497 = vunpack.c.l.b16 %v2906
  %v3498 = vunpack.c.l.b16 %v2907
  %v3499 = vunpack.c.h.b16 %v2907
  %v3500 = vunpack.c.l.b16 %v2908
  %v3501 = vunpack.c.h.b16 %v2908
  %v3502 = vunpack.c.l.b16 %v2909
  %v3503 = vunpack.c.h.b16 %v2909
  %v3504 = vunpack.c.l.b16 %v2910
  %v3505 = vunpack.c.l.b16 %v2911
  %v3506 = vunpack.c.h.b16 %v2911
  %v3507 = vunpack.c.l.b16 %v2912
  %v3508 = vunpack.c.h.b16 %v2912
  %v3509 = vunpack.c.l.b16 %v2913
  %v3510 = vunpack.c.h.b16 %v2913
  %v3511 = vunpack.c.l.b16 %v2914
  %v3512 = vunpack.c.l.b16 %v2915
  %v3513 = vunpack.c.h.b16 %v2915
  %v3514 = vunpack.c.l.b16 %v2916
  %v3515 = vunpack.c.h.b16 %v2916
  %v3516 = vunpack.c.l.b16 %v2917
  %v3517 = vunpack.c.h.b16 %v2917
  %v3518 = vunpack.c.l.b16 %v2918
  %v3519 = vunpack.c.l.b16 %v2919
  %v3520 = vunpack.c.h.b16 %v2919
  %v3521 = vunpack.c.l.b16 %v2920
  %v3522 = vunpack.c.h.b16 %v2920
  %v3523 = vunpack.c.l.b16 %v2921
  %v3524 = vunpack.c.h.b16 %v2921
  %v3525 = vunpack.c.l.b16 %v2922
  %v3526 = vunpack.c.l.b16 %v2923
  %v3527 = vunpack.c.h.b16 %v2923
  %v3528 = vunpack.c.l.b16 %v2924
  %v3529 = vunpack.c.h.b16 %v2924
  %v3530 = vunpack.c.l.b16 %v2925
  %v3531 = vunpack.c.h.b16 %v2925
  %v3532 = vunpack.c.l.b16 %v2926
  %v3533 = vunpack.c.l.b16 %v2927
  %v3534 = vunpack.c.h.b16 %v2927
  %v3535 = vunpack.c.l.b16 %v2928
  %v3536 = vunpack.c.h.b16 %v2928
  %v3537 = vunpack.c.l.b16 %v2929
  %v3538 = vunpack.c.h.b16 %v2929
  %v3539 = vunpack.c.l.b16 %v2930
  %v3540 = vunpack.c.l.b16 %v2931
  %v3541 = vunpack.c.h.b16 %v2931
  %v3542 = vunpack.c.l.b16 %v2932
  %v3543 = vunpack.c.h.b16 %v2932
  %v3544 = vunpack.c.l.b16 %v2933
  %v3545 = vunpack.c.h.b16 %v2933
  %v3546 = vunpack.c.l.b16 %v2934
  %v3547 = vunpack.c.l.b16 %v2935
  %v3548 = vunpack.c.h.b16 %v2935
  %v3549 = vunpack.c.l.b16 %v2936
  %v3550 = vunpack.c.h.b16 %v2936
  %v3551 = vunpack.c.l.b16 %v2937
  %v3552 = vunpack.c.h.b16 %v2937
  %v3553 = vunpack.c.l.b16 %v2938
  %v3554 = vunpack.c.l.b16 %v2939
  %v3555 = vunpack.c.h.b16 %v2939
  %v3556 = vunpack.c.l.b16 %v2940
  %v3557 = vunpack.c.h.b16 %v2940
  %v3558 = vunpack.c.l.b16 %v2941
  %v3559 = vunpack.c.h.b16 %v2941
  %v3560 = vunpack.c.l.b16 %v2942
  %v3561 = vunpack.c.l.b16 %v2943
  %v3562 = vunpack.c.h.b16 %v2943
  %v3563 = vunpack.c.l.b16 %v2944
  %v3564 = vunpack.c.h.b16 %v2944
  %v3565 = vunpack.c.l.b16 %v2945
  %v3566 = vunpack.c.h.b16 %v2945
  %v3567 = vunpack.c.l.b16 %v2946
  %v3568 = vunpack.c.l.b16 %v2947
  %v3569 = vunpack.c.h.b16 %v2947
  %v3570 = vunpack.c.l.b16 %v2948
  %v3571 = vunpack.c.h.b16 %v2948
  %v3572 = vunpack.c.l.b16 %v2949
  %v3573 = vunpack.c.h.b16 %v2949
  %v3574 = vunpack.c.l.b16 %v2950
  %v3575 = vunpack.c.l.b16 %v2951
  %v3576 = vunpack.c.h.b16 %v2951
  %v3577 = vunpack.c.l.b16 %v2952
  %v3578 = vunpack.c.h.b16 %v2952
  %v3579 = vunpack.c.l.b16 %v2953
  %v3580 = vunpack.c.h.b16 %v2953
  %v3581 = vunpack.c.l.b16 %v2954
  %v3582 = vunpack.c.l.b16 %v2955
  %v3583 = vunpack.c.h.b16 %v2955
  %v3584 = vunpack.c.l.b16 %v2956
  %v3585 = vunpack.c.h.b16 %v2956
  %v3586 = vunpack.c.l.b16 %v2957
  %v3587 = vunpack.c.h.b16 %v2957
  %v3588 = vunpack.c.l.b16 %v2958
  %v3589 = vunpack.c.l.b16 %v2959
  %v3590 = vunpack.c.h.b16 %v2959
  %v3591 = vunpack.c.l.b16 %v2960
  %v3592 = vunpack.c.h.b16 %v2960
  %v3593 = vunpack.c.l.b16 %v2961
  %v3594 = vunpack.c.h.b16 %v2961
  %v3595 = vunpack.c.l.b16 %v2962
  %v3596 = vunpack.c.l.b16 %v2963
  %v3597 = vunpack.c.h.b16 %v2963
  %v3598 = vunpack.c.l.b16 %v2964
  %v3599 = vunpack.c.h.b16 %v2964
  %v3600 = vunpack.c.l.b16 %v2965
  %v3601 = vunpack.c.h.b16 %v2965
  %v3602 = vunpack.c.l.b16 %v2966
  %v3603 = vunpack.c.l.b16 %v2967
  %v3604 = vunpack.c.h.b16 %v2967
  %v3605 = vunpack.c.l.b16 %v2968
  %v3606 = vunpack.c.h.b16 %v2968
  %v3607 = vunpack.c.l.b16 %v2969
  %v3608 = vunpack.c.h.b16 %v2969
  %v3609 = vunpack.c.l.b16 %v2970
  %v3610 = vunpack.c.l.b16 %v2971
  %v3611 = vunpack.c.h.b16 %v2971
  %v3612 = vunpack.c.l.b16 %v2972
  %v3613 = vunpack.c.h.b16 %v2972
  %v3614 = vunpack.c.l.b16 %v2973
  %v3615 = vunpack.c.h.b16 %v2973
  %v3616 = vunpack.c.l.b16 %v2974
  %v3617 = vunpack.c.l.b16 %v2975
  %v3618 = vunpack.c.h.b16 %v2975
  %v3619 = vunpack.c.l.b16 %v2976
  %v3620 = vunpack.c.h.b16 %v2976
  %v3621 = vunpack.c.l.b16 %v2977
  %v3622 = vunpack.c.h.b16 %v2977
  %v3623 = vunpack.c.l.b16 %v2978
  %v3624 = vunpack.c.l.b16 %v2979
  %v3625 = vunpack.c.h.b16 %v2979
  %v3626 = vunpack.c.l.b16 %v2980
  %v3627 = vunpack.c.h.b16 %v2980
  %v3628 = vunpack.c.l.b16 %v2981
  %v3629 = vunpack.c.h.b16 %v2981
  %v3630 = vunpack.c.l.b16 %v2982
  %v3631 = vunpack.c.l.b16 %v2983
  %v3632 = vunpack.c.h.b16 %v2983
  %v3633 = vunpack.c.l.b16 %v2984
  %v3634 = vunpack.c.h.b16 %v2984
  %v3635 = vunpack.c.l.b16 %v2985
  %v3636 = vunpack.c.h.b16 %v2985
  %v3637 = vunpack.c.l.b16 %v2986
  %v3638 = vunpack.c.l.b16 %v2987
  %v3639 = vunpack.c.h.b16 %v2987
  %v3640 = vunpack.c.l.b16 %v2988
  %v3641 = vunpack.c.h.b16 %v2988
  %v3642 = vunpack.c.l.b16 %v2989
  %v3643 = vunpack.c.h.b16 %v2989
  %v3644 = vunpack.c.l.b16 %v2990
  %v3645 = vunpack.c.l.b16 %v2991
  %v3646 = vunpack.c.h.b16 %v2991
  %v3647 = vunpack.c.l.b16 %v2992
  %v3648 = vunpack.c.h.b16 %v2992
  %v3649 = vunpack.c.l.b16 %v2993
  %v3650 = vunpack.c.h.b16 %v2993
  %v3651 = vunpack.c.l.b16 %v2994
  %v3652 = vunpack.c.l.b16 %v2995
  %v3653 = vunpack.c.h.b16 %v2995
  %v3654 = vunpack.c.l.b16 %v2996
  %v3655 = vunpack.c.h.b16 %v2996
  %v3656 = vunpack.c.l.b16 %v2997
  %v3657 = vunpack.c.h.b16 %v2997
  %v3658 = vunpack.c.l.b16 %v2998
  %v3659 = vunpack.c.l.b16 %v2999
  %v3660 = vunpack.c.h.b16 %v2999
  %v3661 = vunpack.c.l.b16 %v3000
  %v3662 = vunpack.c.h.b16 %v3000
  %v3663 = vunpack.c.l.b16 %v3001
  %v3664 = vunpack.c.h.b16 %v3001
  %v3665 = vunpack.c.l.b16 %v3002
  %v3666 = vunpack.c.l.b16 %v3003
  %v3667 = vunpack.c.h.b16 %v3003
  %v3668 = vunpack.c.l.b16 %v3004
  %v3669 = vunpack.c.h.b16 %v3004
  %v3670 = vunpack.c.l.b16 %v3005
  %v3671 = vunpack.c.h.b16 %v3005
  %v3672 = vunpack.c.l.b16 %v3006
  %v3673 = vunpack.c.l.b16 %v3007
  %v3674 = vunpack.c.h.b16 %v3007
  %v3675 = vunpack.c.l.b16 %v3008
  %v3676 = vunpack.c.h.b16 %v3008
  %v3677 = vunpack.c.l.b16 %v3009
  %v3678 = vunpack.c.h.b16 %v3009
  %v3679 = vunpack.c.l.b16 %v3010
  %v3680 = vunpack.c.l.b16 %v3011
  %v3681 = vunpack.c.h.b16 %v3011
  %v3682 = vunpack.c.l.b16 %v3012
  %v3683 = vunpack.c.h.b16 %v3012
  %v3684 = vunpack.c.l.b16 %v3013
  %v3685 = vunpack.c.h.b16 %v3013
  %v3686 = vunpack.c.l.b16 %v3014
  %v3687 = vunpack.c.l.b16 %v3015
  %v3688 = vunpack.c.h.b16 %v3015
  %v3689 = vunpack.c.l.b16 %v3016
  %v3690 = vunpack.c.h.b16 %v3016
  %v3691 = vunpack.c.l.b16 %v3017
  %v3692 = vunpack.c.h.b16 %v3017
  %v3693 = vunpack.c.l.b16 %v3018
  %v3694 = vunpack.c.l.b16 %v3019
  %v3695 = vunpack.c.h.b16 %v3019
  %v3696 = vunpack.c.l.b16 %v3020
  %v3697 = vunpack.c.h.b16 %v3020
  %v3698 = vunpack.c.l.b16 %v3021
  %v3699 = vunpack.c.h.b16 %v3021
  %v3700 = vunpack.c.l.b16 %v3022
  %v3701 = vunpack.c.l.b16 %v3023
  %v3702 = vunpack.c.h.b16 %v3023
  %v3703 = vunpack.c.l.b16 %v3024
  %v3704 = vunpack.c.h.b16 %v3024
  %v3705 = vunpack.c.l.b16 %v3025
  %v3706 = vunpack.c.h.b16 %v3025
  %v3707 = vunpack.c.l.b16 %v3026
  %v3708 = vunpack.c.l.b16 %v3027
  %v3709 = vunpack.c.h.b16 %v3027
  %v3710 = vunpack.c.l.b16 %v3028
  %v3711 = vunpack.c.h.b16 %v3028
  %v3712 = vunpack.c.l.b16 %v3029
  %v3713 = vunpack.c.h.b16 %v3029
  %v3714 = vunpack.c.l.b16 %v3030
  %v3715 = vunpack.c.l.b16 %v3031
  %v3716 = vunpack.c.h.b16 %v3031
  %v3717 = vunpack.c.l.b16 %v3032
  %v3718 = vunpack.c.h.b16 %v3032
  %v3719 = vunpack.c.l.b16 %v3033
  %v3720 = vunpack.c.h.b16 %v3033
  %v3721 = vunpack.c.l.b16 %v3034
  %v3722 = vunpack.c.l.b16 %v3035
  %v3723 = vunpack.c.h.b16 %v3035
  %v3724 = vunpack.c.l.b16 %v3036
  %v3725 = vunpack.c.h.b16 %v3036
  %v3726 = vunpack.c.l.b16 %v3037
  %v3727 = vunpack.c.h.b16 %v3037
  %v3728 = vunpack.c.l.b16 %v3038
  %v3729 = vunpack.c.l.b16 %v3039
  %v3730 = vunpack.c.h.b16 %v3039
  %v3731 = vunpack.c.l.b16 %v3040
  %v3732 = vunpack.c.h.b16 %v3040
  %v3733 = vunpack.c.l.b16 %v3041
  %v3734 = vunpack.c.h.b16 %v3041
  %v3735 = vunpack.c.l.b16 %v3042
  %v3736 = vunpack.c.l.b16 %v3043
  %v3737 = vunpack.c.h.b16 %v3043
  %v3738 = vunpack.c.l.b16 %v3044
  %v3739 = vunpack.c.h.b16 %v3044
  %v3740 = vunpack.c.l.b16 %v3045
  %v3741 = vunpack.c.h.b16 %v3045
  %v3742 = vunpack.c.l.b16 %v3046
  %v3743 = vunpack.c.l.b16 %v3047
  %v3744 = vunpack.c.h.b16 %v3047
  %v3745 = vunpack.c.l.b16 %v3048
  %v3746 = vunpack.c.h.b16 %v3048
  %v3747 = vunpack.c.l.b16 %v3049
  %v3748 = vunpack.c.h.b16 %v3049
  %v3749 = vunpack.c.l.b16 %v3050
  %v3750 = vunpack.c.l.b16 %v3051
  %v3751 = vunpack.c.h.b16 %v3051
  %v3752 = vunpack.c.l.b16 %v3052
  %v3753 = vunpack.c.h.b16 %v3052
  %v3754 = vunpack.c.l.b16 %v3053
  %v3755 = vunpack.c.h.b16 %v3053
  %v3756 = vunpack.c.l.b16 %v3054
  %v3757 = vunpack.c.l.b16 %v3055
  %v3758 = vunpack.c.h.b16 %v3055
  %v3759 = vunpack.c.l.b16 %v3056
  %v3760 = vunpack.c.h.b16 %v3056
  %v3761 = vunpack.c.l.b16 %v3057
  %v3762 = vunpack.c.h.b16 %v3057
  %v3763 = vunpack.c.l.b16 %v3058
  %v3764 = vunpack.c.l.b16 %v3059
  %v3765 = vunpack.c.h.b16 %v3059
  %v3766 = vunpack.c.l.b16 %v3060
  %v3767 = vunpack.c.h.b16 %v3060
  %v3768 = vunpack.c.l.b16 %v3061
  %v3769 = vunpack.c.h.b16 %v3061
  %v3770 = vunpack.c.l.b16 %v3062
  %v3771 = vunpack.c.l.b16 %v3063
  %v3772 = vunpack.c.h.b16 %v3063
  %v3773 = vunpack.c.l.b16 %v3064
  %v3774 = vunpack.c.h.b16 %v3064
  %v3775 = vunpack.c.l.b16 %v3065
  %v3776 = vunpack.c.h.b16 %v3065
  %v3777 = vunpack.c.l.b16 %v3066
  %v3778 = vunpack.c.l.b16 %v3067
  %v3779 = vunpack.c.h.b16 %v3067
  %v3780 = vunpack.c.l.b16 %v3068
  %v3781 = vunpack.c.h.b16 %v3068
  %v3782 = vunpack.c.l.b16 %v3069
  %v3783 = vunpack.c.h.b16 %v3069
  %v3784 = vunpack.c.l.b16 %v3070
  %v3785 = vunpack.c.l.b16 %v3071
  %v3786 = vunpack.c.h.b16 %v3071
  %v3787 = vunpack.c.l.b16 %v3072
  %v3788 = vunpack.c.h.b16 %v3072
  %v3789 = vunpack.c.l.b16 %v3073
  %v3790 = vunpack.c.h.b16 %v3073
  %v3791 = vunpack.c.l.b16 %v3074
  %v3792 = vunpack.c.l.b16 %v3075
  %v3793 = vunpack.c.h.b16 %v3075
  %v3794 = vunpack.c.l.b16 %v3076
  %v3795 = vunpack.c.h.b16 %v3076
  %v3796 = vunpack.c.l.b16 %v3077
  %v3797 = vunpack.c.h.b16 %v3077
  %v3798 = vunpack.c.l.b16 %v3078
  %v3799 = vunpack.c.l.b16 %v3079
  %v3800 = vunpack.c.h.b16 %v3079
  %v3801 = vunpack.c.l.b16 %v3080
  %v3802 = vunpack.c.h.b16 %v3080
  %v3803 = vunpack.c.l.b16 %v3081
  %v3804 = vunpack.c.h.b16 %v3081
  %v3805 = vunpack.c.l.b16 %v3082
  %v3806 = vunpack.c.l.b16 %v3083
  %v3807 = vunpack.c.h.b16 %v3083
  %v3808 = vunpack.c.l.b16 %v3084
  %v3809 = vunpack.c.h.b16 %v3084
  %v3810 = vunpack.c.l.b16 %v3085
  %v3811 = vunpack.c.h.b16 %v3085
  %v3812 = vunpack.c.l.b16 %v3086
  %v3813 = vunpack.c.l.b16 %v3087
  %v3814 = vunpack.c.h.b16 %v3087
  %v3815 = vunpack.c.l.b16 %v3088
  %v3816 = vunpack.c.h.b16 %v3088
  %v3817 = vunpack.c.l.b16 %v3089
  %v3818 = vunpack.c.h.b16 %v3089
  %v3819 = vunpack.c.l.b16 %v3090
  %v3820 = vunpack.c.l.b16 %v3091
  %v3821 = vunpack.c.h.b16 %v3091
  %v3822 = vunpack.c.l.b16 %v3092
  %v3823 = vunpack.c.h.b16 %v3092
  %v3824 = vunpack.c.l.b16 %v3093
  %v3825 = vunpack.c.h.b16 %v3093
  %v3826 = vunpack.c.l.b16 %v3094
  %v3827 = vunpack.c.l.b16 %v3095
  %v3828 = vunpack.c.h.b16 %v3095
  %v3829 = vunpack.c.l.b16 %v3096
  %v3830 = vunpack.c.h.b16 %v3096
  %v3831 = vunpack.c.l.b16 %v3097
  %v3832 = vunpack.c.h.b16 %v3097
  %v3833 = vunpack.c.l.b16 %v3098
  %v3834 = vunpack.c.l.b16 %v3099
  %v3835 = vunpack.c.h.b16 %v3099
  %v3836 = vunpack.c.l.b16 %v3100
  %v3837 = vunpack.c.h.b16 %v3100
  %v3838 = vunpack.c.l.b16 %v3101
  %v3839 = vunpack.c.h.b16 %v3101
  %v3840 = vunpack.c.l.b16 %v3102
  %v3841 = vunpack.c.l.b16 %v3103
  %v3842 = vunpack.c.h.b16 %v3103
  %v3843 = vunpack.c.l.b16 %v3104
  %v3844 = vunpack.c.h.b16 %v3104
  %v3845 = vunpack.c.l.b16 %v3105
  %v3846 = vunpack.c.h.b16 %v3105
  %v3847 = vunpack.c.l.b16 %v3106
  %v3848 = vpack.c.b16 %v3407, %v3400
  %v3849 = vpack.c.b16 %v3408, %v3401
  %v3850 = vpack.c.b16 %v3409, %v3402
  %v3851 = vpack.c.b16 %v3410, %v3403
  %v3852 = vpack.c.b16 %v3411, %v3404
  %v3853 = vpack.c.b16 %v3412, %v3405
  %v3854 = vpack.c.b16 %v3413, %v3406
  %v3855 = vpack.c.b16 %v3421, %v3414
  %v3856 = vpack.c.b16 %v3422, %v3415
  %v3857 = vpack.c.b16 %v3423, %v3416
  %v3858 = vpack.c.b16 %v3424, %v3417
  %v3859 = vpack.c.b16 %v3425, %v3418
  %v3860 = vpack.c.b16 %v3426, %v3419
  %v3861 = vpack.c.b16 %v3427, %v3420
  %v3862 = vpack.c.b16 %v3435, %v3428
  %v3863 = vpack.c.b16 %v3436, %v3429
  %v3864 = vpack.c.b16 %v3437, %v3430
  %v3865 = vpack.c.b16 %v3438, %v3431
  %v3866 = vpack.c.b16 %v3439, %v3432
  %v3867 = vpack.c.b16 %v3440, %v3433
  %v3868 = vpack.c.b16 %v3441, %v3434
  %v3869 = vpack.c.b16 %v3449, %v3442
  %v3870 = vpack.c.b16 %v3450, %v3443
  %v3871 = vpack.c.b16 %v3451, %v3444
  %v3872 = vpack.c.b16 %v3452, %v3445
  %v3873 = vpack.c.b16 %v3453, %v3446
  %v3874 = vpack.c.b16 %v3454, %v3447
  %v3875 = vpack.c.b16 %v3455, %v3448
  %v3876 = vpack.c.b16 %v3463, %v3456
  %v3877 = vpack.c.b16 %v3464, %v3457
  %v3878 = vpack.c.b16 %v3465, %v3458
  %v3879 = vpack.c.b16 %v3466, %v3459
  %v3880 = vpack.c.b16 %v3467, %v3460
  %v3881 = vpack.c.b16 %v3468, %v3461
  %v3882 = vpack.c.b16 %v3469, %v3462
  %v3883 = vpack.c.b16 %v3477, %v3470
  %v3884 = vpack.c.b16 %v3478, %v3471
  %v3885 = vpack.c.b16 %v3479, %v3472
  %v3886 = vpack.c.b16 %v3480, %v3473
  %v3887 = vpack.c.b16 %v3481, %v3474
  %v3888 = vpack.c.b16 %v3482, %v3475
  %v3889 = vpack.c.b16 %v3483, %v3476
  %v3890 = vpack.c.b16 %v3491, %v3484
  %v3891 = vpack.c.b16 %v3492, %v3485
  %v3892 = vpack.c.b16 %v3493, %v3486
  %v3893 = vpack.c.b16 %v3494, %v3487
  %v3894 = vpack.c.b16 %v3495, %v3488
  %v3895 = vpack.c.b16 %v3496, %v3489
  %v3896 = vpack.c.b16 %v3497, %v3490
  %v3897 = vpack.c.b16 %v3505, %v3498
  %v3898 = vpack.c.b16 %v3506, %v3499
  %v3899 = vpack.c.b16 %v3507, %v3500
  %v3900 = vpack.c.b16 %v3508, %v3501
  %v3901 = vpack.c.b16 %v3509, %v3502
  %v3902 = vpack.c.b16 %v3510, %v3503
  %v3903 = vpack.c.b16 %v3511, %v3504
  %v3904 = vpack.c.b16 %v3519, %v3512
  %v3905 = vpack.c.b16 %v3520, %v3513
  %v3906 = vpack.c.b16 %v3521, %v3514
  %v3907 = vpack.c.b16 %v3522, %v3515
  %v3908 = vpack.c.b16 %v3523, %v3516
  %v3909 = vpack.c.b16 %v3524, %v3517
  %v3910 = vpack.c.b16 %v3525, %v3518
  %v3911 = vpack.c.b16 %v3533, %v3526
  %v3912 = vpack.c.b16 %v3534, %v3527
  %v3913 = vpack.c.b16 %v3535, %v3528
  %v3914 = vpack.c.b16 %v3536, %v3529
  %v3915 = vpack.c.b16 %v3537, %v3530
  %v3916 = vpack.c.b16 %v3538, %v3531
  %v3917 = vpack.c.b16 %v3539, %v3532
  %v3918 = vpack.c.b16 %v3547, %v3540
  %v3919 = vpack.c.b16 %v3548, %v3541
  %v3920 = vpack.c.b16 %v3549, %v3542
  %v3921 = vpack.c.b16 %v3550, %v3543
  %v3922 = vpack.c.b16 %v3551, %v3544
  %v3923 = vpack.c.b16 %v3552, %v3545
  %v3924 = vpack.c.b16 %v3553, %v3546
  %v3925 = vpack.c.b16 %v3561, %v3554
  %v3926 = vpack.c.b16 %v3562, %v3555
  %v3927 = vpack.c.b16 %v3563, %v3556
  %v3928 = vpack.c.b16 %v3564, %v3557
  %v3929 = vpack.c.b16 %v3565, %v3558
  %v3930 = vpack.c.b16 %v3566, %v3559
  %v3931 = vpack.c.b16 %v3567, %v3560
  %v3932 = vpack.c.b16 %v3575, %v3568
  %v3933 = vpack.c.b16 %v3576, %v3569
  %v3934 = vpack.c.b16 %v3577, %v3570
  %v3935 = vpack.c.b16 %v3578, %v3571
  %v3936 = vpack.c.b16 %v3579, %v3572
  %v3937 = vpack.c.b16 %v3580, %v3573
  %v3938 = vpack.c.b16 %v3581, %v3574
  %v3939 = vpack.c.b16 %v3589, %v3582
  %v3940 = vpack.c.b16 %v3590, %v3583
  %v3941 = vpack.c.b16 %v3591, %v3584
  %v3942 = vpack.c.b16 %v3592, %v3585
  %v3943 = vpack.c.b16 %v3593, %v3586
  %v3944 = vpack.c.b16 %v3594, %v3587
  %v3945 = vpack.c.b16 %v3595, %v3588
  %v3946 = vpack.c.b16 %v3603, %v3596
  %v3947 = vpack.c.b16 %v3604, %v3597
  %v3948 = vpack.c.b16 %v3605, %v3598
  %v3949 = vpack.c.b16 %v3606, %v3599
  %v3950 = vpack.c.b16 %v3607, %v3600
  %v3951 = vpack.c.b16 %v3608, %v3601
  %v3952 = vpack.c.b16 %v3609, %v3602
  %v3953 = vpack.c.b16 %v3617, %v3610
  %v3954 = vpack.c.b16 %v3618, %v3611
  %v3955 = vpack.c.b16 %v3619, %v3612
  %v3956 = vpack.c.b16 %v3620, %v3613
  %v3957 = vpack.c.b16 %v3621, %v3614
  %v3958 = vpack.c.b16 %v3622, %v3615
  %v3959 = vpack.c.b16 %v3623, %v3616
  %v3960 = vpack.c.b16 %v3631, %v3624
  %v3961 = vpack.c.b16 %v3632, %v3625
  %v3962 = vpack.c.b16 %v3633, %v3626
  %v3963 = vpack.c.b16 %v3634, %v3627
  %v3964 = vpack.c.b16 %v3635, %v3628
  %v3965 = vpack.c.b16 %v3636, %v3629
  %v3966 = vpack.c.b16 %v3637, %v3630
  %v3967 = vpack.c.b16 %v3645, %v3638
  %v3968 = vpack.c.b16 %v3646, %v3639
  %v3969 = vpack.c.b16 %v3647, %v3640
  %v3970 = vpack.c.b16 %v3648, %v3641
  %v3971 = vpack.c.b16 %v3649, %v3642
  %v3972 = vpack.c.b16 %v3650, %v3643
  %v3973 = vpack.c.b16 %v3651, %v3644
  %v3974 = vpack.c.b16 %v3659, %v3652
  %v3975 = vpack.c.b16 %v3660, %v3653
  %v3976 = vpack.c.b16 %v3661, %v3654
  %v3977 = vpack.c.b16 %v3662, %v3655
  %v3978 = vpack.c.b16 %v3663, %v3656
  %v3979 = vpack.c.b16 %v3664, %v3657
  %v3980 = vpack.c.b16 %v3665, %v3658
  %v3981 = vpack.c.b16 %v3673, %v3666
  %v3982 = vpack.c.b16 %v3674, %v3667
  %v3983 = vpack.c.b16 %v3675, %v3668
  %v3984 = vpack.c.b16 %v3676, %v3669
  %v3985 = vpack.c.b16 %v3677, %v3670
  %v3986 = vpack.c.b16 %v3678, %v3671
  %v3987 = vpack.c.b16 %v3679, %v3672
  %v3988 = vpack.c.b16 %v3687, %v3680
  %v3989 = vpack.c.b16 %v3688, %v3681
  %v3990 = vpack.c.b16 %v3689, %v3682
  %v3991 = vpack.c.b16 %v3690, %v3683
  %v3992 = vpack.c.b16 %v3691, %v3684
  %v3993 = vpack.c.b16 %v3692, %v3685
  %v3994 = vpack.c.b16 %v3693, %v3686
  %v3995 = vpack.c.b16 %v3701, %v3694
  %v3996 = vpack.c.b16 %v3702, %v3695
  %v3997 = vpack.c.b16 %v3703, %v3696
  %v3998 = vpack.c.b16 %v3704, %v3697
  %v3999 = vpack.c.b16 %v3705, %v3698
  %v4000 = vpack.c.b16 %v3706, %v3699
  %v4001 = vpack.c.b16 %v3707, %v3700
  %v4002 = vpack.c.b16 %v3715, %v3708
  %v4003 = vpack.c.b16 %v3716, %v3709
  %v4004 = vpack.c.b16 %v3717, %v3710
  %v4005 = vpack.c.b16 %v3718, %v3711
  %v4006 = vpack.c.b16 %v3719, %v3712
  %v4007 = vpack.c.b16 %v3720, %v3713
  %v4008 = vpack.c.b16 %v3721, %v3714
  %v4009 = vpack.c.b16 %v3729, %v3722
  %v4010 = vpack.c.b16 %v3730, %v3723
  %v4011 = vpack.c.b16 %v3731, %v3724
  %v4012 = vpack.c.b16 %v3732, %v3725
  %v4013 = vpack.c.b16 %v3733, %v3726
  %v4014 = vpack.c.b16 %v3734, %v3727
  %v4015 = vpack.c.b16 %v3735, %v3728
  %v4016 = vpack.c.b16 %v3743, %v3736
  %v4017 = vpack.c.b16 %v3744, %v3737
  %v4018 = vpack.c.b16 %v3745, %v3738
  %v4019 = vpack.c.b16 %v3746, %v3739
  %v4020 = vpack.c.b16 %v3747, %v3740
  %v4021 = vpack.c.b16 %v3748, %v3741
  %v4022 = vpack.c.b16 %v3749, %v3742
  %v4023 = vpack.c.b16 %v3757, %v3750
  %v4024 = vpack.c.b16 %v3758, %v3751
  %v4025 = vpack.c.b16 %v3759, %v3752
  %v4026 = vpack.c.b16 %v3760, %v3753
  %v4027 = vpack.c.b16 %v3761, %v3754
  %v4028 = vpack.c.b16 %v3762, %v3755
  %v4029 = vpack.c.b16 %v3763, %v3756
  %v4030 = vpack.c.b16 %v3771, %v3764
  %v4031 = vpack.c.b16 %v3772, %v3765
  %v4032 = vpack.c.b16 %v3773, %v3766
  %v4033 = vpack.c.b16 %v3774, %v3767
  %v4034 = vpack.c.b16 %v3775, %v3768
  %v4035 = vpack.c.b16 %v3776, %v3769
  %v4036 = vpack.c.b16 %v3777, %v3770
  %v4037 = vpack.c.b16 %v3785, %v3778
  %v4038 = vpack.c.b16 %v3786, %v3779
  %v4039 = vpack.c.b16 %v3787, %v3780
  %v4040 = vpack.c.b16 %v3788, %v3781
  %v4041 = vpack.c.b16 %v3789, %v3782
  %v4042 = vpack.c.b16 %v3790, %v3783
  %v4043 = vpack.c.b16 %v3791, %v3784
  %v4044 = vpack.c.b16 %v3799, %v3792
  %v4045 = vpack.c.b16 %v3800, %v3793
  %v4046 = vpack.c.b16 %v3801, %v3794
  %v4047 = vpack.c.b16 %v3802, %v3795
  %v4048 = vpack.c.b16 %v3803, %v3796
  %v4049 = vpack.c.b16 %v3804, %v3797
  %v4050 = vpack.c.b16 %v3805, %v3798
  %v4051 = vpack.c.b16 %v3813, %v3806
  %v4052 = vpack.c.b16 %v3814, %v3807
  %v4053 = vpack.c.b16 %v3815, %v3808
  %v4054 = vpack.c.b16 %v3816, %v3809
  %v4055 = vpack.c.b16 %v3817, %v3810
  %v4056 = vpack.c.b16 %v3818, %v3811
  %v4057 = vpack.c.b16 %v3819, %v3812
  %v4058 = vpack.c.b16 %v3827, %v3820
  %v4059 = vpack.c.b16 %v3828, %v3821
  %v4060 = vpack.c.b16 %v3829, %v3822
  %v4061 = vpack.c.b16 %v3830, %v3823
  %v4062 = vpack.c.b16 %v3831, %v3824
  %v4063 = vpack.c.b16 %v3832, %v3825
  %v4064 = vpack.c.b16 %v3833, %v3826
  %v4065 = vpack.c.b16 %v3841, %v3834
  %v4066 = vpack.c.b16 %v3842, %v3835
  %v4067 = vpack.c.b16 %v3843, %v3836
  %v4068 = vpack.c.b16 %v3844, %v3837
  %v4069 = vpack.c.b16 %v3845, %v3838
  %v4070 = vpack.c.b16 %v3846, %v3839
  %v4071 = vpack.c.b16 %v3847, %v3840
  %4296 = vmatprep.subr.bf16.mxu0 %v3849
  %4297 = vmatpush1.bf16.msra.mxu0 %v3848
  %4298 = vmatprep.subr.bf16.mxu0 %v3856
  %4299 = vmatpush1.bf16.msra.mxu0 %v3855
  %4300 = vmatprep.subr.bf16.mxu0 %v3863
  %4301 = vmatpush1.bf16.msra.mxu0 %v3862
  %4302 = vmatprep.subr.bf16.mxu0 %v3870
  %4303 = vmatpush1.bf16.msra.mxu0 %v3869
  %4304 = vmatprep.subr.bf16.mxu0 %v3877
  %4305 = vmatpush1.bf16.msra.mxu0 %v3876
  %4306 = vmatprep.subr.bf16.mxu0 %v3884
  %4307 = vmatpush1.bf16.msra.mxu0 %v3883
  %4308 = vmatprep.subr.bf16.mxu0 %v3891
  %4309 = vmatpush1.bf16.msra.mxu0 %v3890
  %4310 = vmatprep.subr.bf16.mxu0 %v3898
  %4311 = vmatpush1.bf16.msra.mxu0 %v3897
  %4312 = vmatprep.subr.bf16.mxu0 %v3905
  %4313 = vmatpush1.bf16.msra.mxu0 %v3904
  %4314 = vmatprep.subr.bf16.mxu0 %v3912
  %4315 = vmatpush1.bf16.msra.mxu0 %v3911
  %4316 = vmatprep.subr.bf16.mxu0 %v3919
  %4317 = vmatpush1.bf16.msra.mxu0 %v3918
  %4318 = vmatprep.subr.bf16.mxu0 %v3926
  %4319 = vmatpush1.bf16.msra.mxu0 %v3925
  %4320 = vmatprep.subr.bf16.mxu0 %v3933
  %4321 = vmatpush1.bf16.msra.mxu0 %v3932
  %4322 = vmatprep.subr.bf16.mxu0 %v3940
  %4323 = vmatpush1.bf16.msra.mxu0 %v3939
  %4324 = vmatprep.subr.bf16.mxu0 %v3947
  %4325 = vmatpush1.bf16.msra.mxu0 %v3946
  %4326 = vmatprep.subr.bf16.mxu0 %v3954
  %4327 = vmatpush1.bf16.msra.mxu0 %v3953
  %4328 = vmatprep.mubr.bf16.mxu0 %v2848
  %4329 = vmatmul.mubr.bf16.gmra.mrb[0].mxu0 %v2847
  %v4330 = vpop.f32.mrb[0].mxu0
  %v4331 = vadd.f32 %v3112, %v4330
  %v4332 = vpop.f32.mrb[0].mxu0
  %v4333 = vadd.f32 %v3116, %v4332
  %v4334 = vpop.f32.mrb[0].mxu0
  %v4335 = vadd.f32 %v3112, %v4334
  %v4336 = vpop.f32.mrb[0].mxu0
  %v4337 = vadd.f32 %v3116, %v4336
  %4338 = vdwg.mxu0
  %4339 = vmatprep.subr.bf16.mxu0 %v3961
  %4340 = vmatpush1.bf16.msra.mxu0 %v3960
  %4341 = vmatprep.subr.bf16.mxu0 %v3968
  %4342 = vmatpush1.bf16.msra.mxu0 %v3967
  %4343 = vmatprep.subr.bf16.mxu0 %v3975
  %4344 = vmatpush1.bf16.msra.mxu0 %v3974
  %4345 = vmatprep.subr.bf16.mxu0 %v3982
  %4346 = vmatpush1.bf16.msra.mxu0 %v3981
  %4347 = vmatprep.subr.bf16.mxu0 %v3989
  %4348 = vmatpush1.bf16.msra.mxu0 %v3988
  %4349 = vmatprep.subr.bf16.mxu0 %v3996
  %4350 = vmatpush1.bf16.msra.mxu0 %v3995
  %4351 = vmatprep.subr.bf16.mxu0 %v4003
  %4352 = vmatpush1.bf16.msra.mxu0 %v4002
  %4353 = vmatprep.subr.bf16.mxu0 %v4010
  %4354 = vmatpush1.bf16.msra.mxu0 %v4009
  %4355 = vmatprep.subr.bf16.mxu0 %v4017
  %4356 = vmatpush1.bf16.msra.mxu0 %v4016
  %4357 = vmatprep.subr.bf16.mxu0 %v4024
  %4358 = vmatpush1.bf16.msra.mxu0 %v4023
  %4359 = vmatprep.subr.bf16.mxu0 %v4031
  %4360 = vmatpush1.bf16.msra.mxu0 %v4030
  %4361 = vmatprep.subr.bf16.mxu0 %v4038
  %4362 = vmatpush1.bf16.msra.mxu0 %v4037
  %4363 = vmatprep.subr.bf16.mxu0 %v4045
  %4364 = vmatpush1.bf16.msra.mxu0 %v4044
  %4365 = vmatprep.subr.bf16.mxu0 %v4052
  %4366 = vmatpush1.bf16.msra.mxu0 %v4051
  %4367 = vmatprep.subr.bf16.mxu0 %v4059
  %4368 = vmatpush1.bf16.msra.mxu0 %v4058
  %4369 = vmatprep.subr.bf16.mxu0 %v4066
  %4370 = vmatpush1.bf16.msra.mxu0 %v4065
  %4371 = vmatprep.mubr.bf16.mxu0 %v2850
  %4372 = vmatmul.mubr.bf16.gmra.mrb[0].mxu0 %v2849
  %v4373 = vpop.f32.mrb[0].mxu0
  %v4374 = vadd.f32 %v4331, %v4373
  %v4375 = vpop.f32.mrb[0].mxu0
  %v4376 = vadd.f32 %v4333, %v4375
  %v4377 = vpop.f32.mrb[0].mxu0
  %v4378 = vadd.f32 %v4335, %v4377
  %v4379 = vpop.f32.mrb[0].mxu0
  %v4380 = vadd.f32 %v4337, %v4379
  %4381 = vdwg.mxu0
  %4382 = vmatprep.subr.bf16.mxu0 %v3851
  %4383 = vmatpush1.bf16.msra.mxu0 %v3850
  %4384 = vmatprep.subr.bf16.mxu0 %v3858
  %4385 = vmatpush1.bf16.msra.mxu0 %v3857
  %4386 = vmatprep.subr.bf16.mxu0 %v3865
  %4387 = vmatpush1.bf16.msra.mxu0 %v3864
  %4388 = vmatprep.subr.bf16.mxu0 %v3872
  %4389 = vmatpush1.bf16.msra.mxu0 %v3871
  %4390 = vmatprep.subr.bf16.mxu0 %v3879
  %4391 = vmatpush1.bf16.msra.mxu0 %v3878
  %4392 = vmatprep.subr.bf16.mxu0 %v3886
  %4393 = vmatpush1.bf16.msra.mxu0 %v3885
  %4394 = vmatprep.subr.bf16.mxu0 %v3893
  %4395 = vmatpush1.bf16.msra.mxu0 %v3892
  %4396 = vmatprep.subr.bf16.mxu0 %v3900
  %4397 = vmatpush1.bf16.msra.mxu0 %v3899
  %4398 = vmatprep.subr.bf16.mxu0 %v3907
  %4399 = vmatpush1.bf16.msra.mxu0 %v3906
  %4400 = vmatprep.subr.bf16.mxu0 %v3914
  %4401 = vmatpush1.bf16.msra.mxu0 %v3913
  %4402 = vmatprep.subr.bf16.mxu0 %v3921
  %4403 = vmatpush1.bf16.msra.mxu0 %v3920
  %4404 = vmatprep.subr.bf16.mxu0 %v3928
  %4405 = vmatpush1.bf16.msra.mxu0 %v3927
  %4406 = vmatprep.subr.bf16.mxu0 %v3935
  %4407 = vmatpush1.bf16.msra.mxu0 %v3934
  %4408 = vmatprep.subr.bf16.mxu0 %v3942
  %4409 = vmatpush1.bf16.msra.mxu0 %v3941
  %4410 = vmatprep.subr.bf16.mxu0 %v3949
  %4411 = vmatpush1.bf16.msra.mxu0 %v3948
  %4412 = vmatprep.subr.bf16.mxu0 %v3956
  %4413 = vmatpush1.bf16.msra.mxu0 %v3955
  %4414 = vmatprep.mubr.bf16.mxu0 %v2848
  %4415 = vmatmul.mubr.bf16.gmra.mrb[0].mxu0 %v2847
  %v4416 = vpop.f32.mrb[0].mxu0
  %v4417 = vadd.f32 %v3120, %v4416
  %v4418 = vpop.f32.mrb[0].mxu0
  %v4419 = vadd.f32 %v3124, %v4418
  %v4420 = vpop.f32.mrb[0].mxu0
  %v4421 = vadd.f32 %v3120, %v4420
  %v4422 = vpop.f32.mrb[0].mxu0
  %v4423 = vadd.f32 %v3124, %v4422
  %4424 = vdwg.mxu0
  %4425 = vmatprep.subr.bf16.mxu0 %v3963
  %4426 = vmatpush1.bf16.msra.mxu0 %v3962
  %4427 = vmatprep.subr.bf16.mxu0 %v3970
  %4428 = vmatpush1.bf16.msra.mxu0 %v3969
  %4429 = vmatprep.subr.bf16.mxu0 %v3977
  %4430 = vmatpush1.bf16.msra.mxu0 %v3976
  %4431 = vmatprep.subr.bf16.mxu0 %v3984
  %4432 = vmatpush1.bf16.msra.mxu0 %v3983
  %4433 = vmatprep.subr.bf16.mxu0 %v3991
  %4434 = vmatpush1.bf16.msra.mxu0 %v3990
  %4435 = vmatprep.subr.bf16.mxu0 %v3998
  %4436 = vmatpush1.bf16.msra.mxu0 %v3997
  %4437 = vmatprep.subr.bf16.mxu0 %v4005
  %4438 = vmatpush1.bf16.msra.mxu0 %v4004
  %4439 = vmatprep.subr.bf16.mxu0 %v4012
  %4440 = vmatpush1.bf16.msra.mxu0 %v4011
  %4441 = vmatprep.subr.bf16.mxu0 %v4019
  %4442 = vmatpush1.bf16.msra.mxu0 %v4018
  %4443 = vmatprep.subr.bf16.mxu0 %v4026
  %4444 = vmatpush1.bf16.msra.mxu0 %v4025
  %4445 = vmatprep.subr.bf16.mxu0 %v4033
  %4446 = vmatpush1.bf16.msra.mxu0 %v4032
  %4447 = vmatprep.subr.bf16.mxu0 %v4040
  %4448 = vmatpush1.bf16.msra.mxu0 %v4039
  %4449 = vmatprep.subr.bf16.mxu0 %v4047
  %4450 = vmatpush1.bf16.msra.mxu0 %v4046
  %4451 = vmatprep.subr.bf16.mxu0 %v4054
  %4452 = vmatpush1.bf16.msra.mxu0 %v4053
  %4453 = vmatprep.subr.bf16.mxu0 %v4061
  %4454 = vmatpush1.bf16.msra.mxu0 %v4060
  %4455 = vmatprep.subr.bf16.mxu0 %v4068
  %4456 = vmatpush1.bf16.msra.mxu0 %v4067
  %4457 = vmatprep.mubr.bf16.mxu0 %v2850
  %4458 = vmatmul.mubr.bf16.gmra.mrb[0].mxu0 %v2849
  %v4459 = vpop.f32.mrb[0].mxu0
  %v4460 = vadd.f32 %v4417, %v4459
  %v4461 = vpop.f32.mrb[0].mxu0
  %v4462 = vadd.f32 %v4419, %v4461
  %v4463 = vpop.f32.mrb[0].mxu0
  %v4464 = vadd.f32 %v4421, %v4463
  %v4465 = vpop.f32.mrb[0].mxu0
  %v4466 = vadd.f32 %v4423, %v4465
  %4467 = vdwg.mxu0
  %4468 = vmatprep.subr.bf16.mxu0 %v3853
  %4469 = vmatpush1.bf16.msra.mxu0 %v3852
  %4470 = vmatprep.subr.bf16.mxu0 %v3860
  %4471 = vmatpush1.bf16.msra.mxu0 %v3859
  %4472 = vmatprep.subr.bf16.mxu0 %v3867
  %4473 = vmatpush1.bf16.msra.mxu0 %v3866
  %4474 = vmatprep.subr.bf16.mxu0 %v3874
  %4475 = vmatpush1.bf16.msra.mxu0 %v3873
  %4476 = vmatprep.subr.bf16.mxu0 %v3881
  %4477 = vmatpush1.bf16.msra.mxu0 %v3880
  %4478 = vmatprep.subr.bf16.mxu0 %v3888
  %4479 = vmatpush1.bf16.msra.mxu0 %v3887
  %4480 = vmatprep.subr.bf16.mxu0 %v3895
  %4481 = vmatpush1.bf16.msra.mxu0 %v3894
  %4482 = vmatprep.subr.bf16.mxu0 %v3902
  %4483 = vmatpush1.bf16.msra.mxu0 %v3901
  %4484 = vmatprep.subr.bf16.mxu0 %v3909
  %4485 = vmatpush1.bf16.msra.mxu0 %v3908
  %4486 = vmatprep.subr.bf16.mxu0 %v3916
  %4487 = vmatpush1.bf16.msra.mxu0 %v3915
  %4488 = vmatprep.subr.bf16.mxu0 %v3923
  %4489 = vmatpush1.bf16.msra.mxu0 %v3922
  %4490 = vmatprep.subr.bf16.mxu0 %v3930
  %4491 = vmatpush1.bf16.msra.mxu0 %v3929
  %4492 = vmatprep.subr.bf16.mxu0 %v3937
  %4493 = vmatpush1.bf16.msra.mxu0 %v3936
  %4494 = vmatprep.subr.bf16.mxu0 %v3944
  %4495 = vmatpush1.bf16.msra.mxu0 %v3943
  %4496 = vmatprep.subr.bf16.mxu0 %v3951
  %4497 = vmatpush1.bf16.msra.mxu0 %v3950
  %4498 = vmatprep.subr.bf16.mxu0 %v3958
  %4499 = vmatpush1.bf16.msra.mxu0 %v3957
  %4500 = vmatprep.mubr.bf16.mxu0 %v2848
  %4501 = vmatmul.mubr.bf16.gmra.mrb[0].mxu0 %v2847
  %v4502 = vpop.f32.mrb[0].mxu0
  %v4503 = vadd.f32 %v3128, %v4502
  %v4504 = vpop.f32.mrb[0].mxu0
  %v4505 = vadd.f32 %v3132, %v4504
  %v4506 = vpop.f32.mrb[0].mxu0
  %v4507 = vadd.f32 %v3128, %v4506
  %v4508 = vpop.f32.mrb[0].mxu0
  %v4509 = vadd.f32 %v3132, %v4508
  %4510 = vdwg.mxu0
  %4511 = vmatprep.subr.bf16.mxu0 %v3965
  %4512 = vmatpush1.bf16.msra.mxu0 %v3964
  %4513 = vmatprep.subr.bf16.mxu0 %v3972
  %4514 = vmatpush1.bf16.msra.mxu0 %v3971
  %4515 = vmatprep.subr.bf16.mxu0 %v3979
  %4516 = vmatpush1.bf16.msra.mxu0 %v3978
  %4517 = vmatprep.subr.bf16.mxu0 %v3986
  %4518 = vmatpush1.bf16.msra.mxu0 %v3985
  %4519 = vmatprep.subr.bf16.mxu0 %v3993
  %4520 = vmatpush1.bf16.msra.mxu0 %v3992
  %4521 = vmatprep.subr.bf16.mxu0 %v4000
  %4522 = vmatpush1.bf16.msra.mxu0 %v3999
  %4523 = vmatprep.subr.bf16.mxu0 %v4007
  %4524 = vmatpush1.bf16.msra.mxu0 %v4006
  %4525 = vmatprep.subr.bf16.mxu0 %v4014
  %4526 = vmatpush1.bf16.msra.mxu0 %v4013
  %4527 = vmatprep.subr.bf16.mxu0 %v4021
  %4528 = vmatpush1.bf16.msra.mxu0 %v4020
  %4529 = vmatprep.subr.bf16.mxu0 %v4028
  %4530 = vmatpush1.bf16.msra.mxu0 %v4027
  %4531 = vmatprep.subr.bf16.mxu0 %v4035
  %4532 = vmatpush1.bf16.msra.mxu0 %v4034
  %4533 = vmatprep.subr.bf16.mxu0 %v4042
  %4534 = vmatpush1.bf16.msra.mxu0 %v4041
  %4535 = vmatprep.subr.bf16.mxu0 %v4049
  %4536 = vmatpush1.bf16.msra.mxu0 %v4048
  %4537 = vmatprep.subr.bf16.mxu0 %v4056
  %4538 = vmatpush1.bf16.msra.mxu0 %v4055
  %4539 = vmatprep.subr.bf16.mxu0 %v4063
  %4540 = vmatpush1.bf16.msra.mxu0 %v4062
  %4541 = vmatprep.subr.bf16.mxu0 %v4070
  %4542 = vmatpush1.bf16.msra.mxu0 %v4069
  %4543 = vmatprep.mubr.bf16.mxu0 %v2850
  %4544 = vmatmul.mubr.bf16.gmra.mrb[0].mxu0 %v2849
  %v4545 = vpop.f32.mrb[0].mxu0
  %v4546 = vadd.f32 %v4503, %v4545
  %v4547 = vpop.f32.mrb[0].mxu0
  %v4548 = vadd.f32 %v4505, %v4547
  %v4549 = vpop.f32.mrb[0].mxu0
  %v4550 = vadd.f32 %v4507, %v4549
  %v4551 = vpop.f32.mrb[0].mxu0
  %v4552 = vadd.f32 %v4509, %v4551
  %4553 = vdwg.mxu0
  %4554 = vmatprep.subr.bf16.mxu0 0
  %4555 = vmatpush1.bf16.msra.mxu0 %v3854
  %4556 = vmatprep.subr.bf16.mxu0 0
  %4557 = vmatpush1.bf16.msra.mxu0 %v3861
  %4558 = vmatprep.subr.bf16.mxu0 0
  %4559 = vmatpush1.bf16.msra.mxu0 %v3868
  %4560 = vmatprep.subr.bf16.mxu0 0
  %4561 = vmatpush1.bf16.msra.mxu0 %v3875
  %4562 = vmatprep.subr.bf16.mxu0 0
  %4563 = vmatpush1.bf16.msra.mxu0 %v3882
  %4564 = vmatprep.subr.bf16.mxu0 0
  %4565 = vmatpush1.bf16.msra.mxu0 %v3889
  %4566 = vmatprep.subr.bf16.mxu0 0
  %4567 = vmatpush1.bf16.msra.mxu0 %v3896
  %4568 = vmatprep.subr.bf16.mxu0 0
  %4569 = vmatpush1.bf16.msra.mxu0 %v3903
  %4570 = vmatprep.subr.bf16.mxu0 0
  %4571 = vmatpush1.bf16.msra.mxu0 %v3910
  %4572 = vmatprep.subr.bf16.mxu0 0
  %4573 = vmatpush1.bf16.msra.mxu0 %v3917
  %4574 = vmatprep.subr.bf16.mxu0 0
  %4575 = vmatpush1.bf16.msra.mxu0 %v3924
  %4576 = vmatprep.subr.bf16.mxu0 0
  %4577 = vmatpush1.bf16.msra.mxu0 %v3931
  %4578 = vmatprep.subr.bf16.mxu0 0
  %4579 = vmatpush1.bf16.msra.mxu0 %v3938
  %4580 = vmatprep.subr.bf16.mxu0 0
  %4581 = vmatpush1.bf16.msra.mxu0 %v3945
  %4582 = vmatprep.subr.bf16.mxu0 0
  %4583 = vmatpush1.bf16.msra.mxu0 %v3952
  %4584 = vmatprep.subr.bf16.mxu0 0
  %4585 = vmatpush1.bf16.msra.mxu0 %v3959
  %4586 = vmatprep.mubr.bf16.mxu0 %v2848
  %4587 = vmatmul.mubr.bf16.gmra.mrb[0].mxu0 %v2847
  %v4588 = vpop.f32.mrb[0].mxu0
  %v4589 = vadd.f32 %v3136, %v4588
  %v4590 = vpop.f32.mrb[0].mxu0
  %v4591 = vpop.f32.mrb[0].mxu0
  %v4592 = vadd.f32 %v3136, %v4591
  %v4593 = vpop.f32.mrb[0].mxu0
  %4594 = vdwg.mxu0
  %4595 = vmatprep.subr.bf16.mxu0 0
  %4596 = vmatpush1.bf16.msra.mxu0 %v3966
  %4597 = vmatprep.subr.bf16.mxu0 0
  %4598 = vmatpush1.bf16.msra.mxu0 %v3973
  %4599 = vmatprep.subr.bf16.mxu0 0
  %4600 = vmatpush1.bf16.msra.mxu0 %v3980
  %4601 = vmatprep.subr.bf16.mxu0 0
  %4602 = vmatpush1.bf16.msra.mxu0 %v3987
  %4603 = vmatprep.subr.bf16.mxu0 0
  %4604 = vmatpush1.bf16.msra.mxu0 %v3994
  %4605 = vmatprep.subr.bf16.mxu0 0
  %4606 = vmatpush1.bf16.msra.mxu0 %v4001
  %4607 = vmatprep.subr.bf16.mxu0 0
  %4608 = vmatpush1.bf16.msra.mxu0 %v4008
  %4609 = vmatprep.subr.bf16.mxu0 0
  %4610 = vmatpush1.bf16.msra.mxu0 %v4015
  %4611 = vmatprep.subr.bf16.mxu0 0
  %4612 = vmatpush1.bf16.msra.mxu0 %v4022
  %4613 = vmatprep.subr.bf16.mxu0 0
  %4614 = vmatpush1.bf16.msra.mxu0 %v4029
  %4615 = vmatprep.subr.bf16.mxu0 0
  %4616 = vmatpush1.bf16.msra.mxu0 %v4036
  %4617 = vmatprep.subr.bf16.mxu0 0
  %4618 = vmatpush1.bf16.msra.mxu0 %v4043
  %4619 = vmatprep.subr.bf16.mxu0 0
  %4620 = vmatpush1.bf16.msra.mxu0 %v4050
  %4621 = vmatprep.subr.bf16.mxu0 0
  %4622 = vmatpush1.bf16.msra.mxu0 %v4057
  %4623 = vmatprep.subr.bf16.mxu0 0
  %4624 = vmatpush1.bf16.msra.mxu0 %v4064
  %4625 = vmatprep.subr.bf16.mxu0 0
  %4626 = vmatpush1.bf16.msra.mxu0 %v4071
  %4627 = vmatprep.mubr.bf16.mxu0 %v2850
  %4628 = vmatmul.mubr.bf16.gmra.mrb[0].mxu0 %v2849
  %v4629 = vpop.f32.mrb[0].mxu0
  %v4630 = vadd.f32 %v4589, %v4629
  %v4631 = vpop.f32.mrb[0].mxu0
  %v4632 = vpop.f32.mrb[0].mxu0
  %v4633 = vadd.f32 %v4592, %v4632
  %v4634 = vpop.f32.mrb[0].mxu0
  %4635 = vdwg.mxu0
  %v4636 = vsub.f32 0.0, %v4374
  %v4637 = vsub.f32 0.0, %v4376
  %v4638 = vsub.f32 0.0, %v4460
  %v4639 = vsub.f32 0.0, %v4462
  %v4640 = vsub.f32 0.0, %v4546
  %v4641 = vsub.f32 0.0, %v4548
  %v4642 = vsub.f32 0.0, %v4630
  %v4643 = vsub.f32 0.0, %v4378
  %v4644 = vsub.f32 0.0, %v4380
  %v4645 = vsub.f32 0.0, %v4464
  %v4646 = vsub.f32 0.0, %v4466
  %v4647 = vsub.f32 0.0, %v4550
  %v4648 = vsub.f32 0.0, %v4552
  %v4649 = vsub.f32 0.0, %v4633
  %v4650 = vmul.f32 %v4636, 1.442695
  %v4651 = vpow.pop %v4650
  %v4652 = vmul.f32 %v4637, 1.442695
  %v4653 = vpow.pop %v4652
  %v4654 = vmul.f32 %v4638, 1.442695
  %v4655 = vpow.pop %v4654
  %v4656 = vmul.f32 %v4639, 1.442695
  %v4657 = vpow.pop %v4656
  %v4658 = vmul.f32 %v4640, 1.442695
  %v4659 = vpow.pop %v4658
  %v4660 = vmul.f32 %v4641, 1.442695
  %v4661 = vpow.pop %v4660
  %v4662 = vmul.f32 %v4642, 1.442695
  %v4663 = vpow.pop %v4662
  %v4664 = vmul.f32 %v4643, 1.442695
  %v4665 = vpow.pop %v4664
  %v4666 = vmul.f32 %v4644, 1.442695
  %v4667 = vpow.pop %v4666
  %v4668 = vmul.f32 %v4645, 1.442695
  %v4669 = vpow.pop %v4668
  %v4670 = vmul.f32 %v4646, 1.442695
  %v4671 = vpow.pop %v4670
  %v4672 = vmul.f32 %v4647, 1.442695
  %v4673 = vpow.pop %v4672
  %v4674 = vmul.f32 %v4648, 1.442695
  %v4675 = vpow.pop %v4674
  %v4676 = vmul.f32 %v4649, 1.442695
  %v4677 = vpow.pop %v4676
  %v4678 = vadd.f32 %v4651, 1.0
  %v4679 = vadd.f32 %v4653, 1.0
  %v4680 = vadd.f32 %v4655, 1.0
  %v4681 = vadd.f32 %v4657, 1.0
  %v4682 = vadd.f32 %v4659, 1.0
  %v4683 = vadd.f32 %v4661, 1.0
  %v4684 = vadd.f32 %v4663, 1.0
  %v4685 = vadd.f32 %v4665, 1.0
  %v4686 = vadd.f32 %v4667, 1.0
  %v4687 = vadd.f32 %v4669, 1.0
  %v4688 = vadd.f32 %v4671, 1.0
  %v4689 = vadd.f32 %v4673, 1.0
  %v4690 = vadd.f32 %v4675, 1.0
  %v4691 = vadd.f32 %v4677, 1.0
  %v4692 = vrcp.pop %v4678
  %v4693 = vrcp.pop %v4679
  %v4694 = vrcp.pop %v4680
  %v4695 = vrcp.pop %v4681
  %v4696 = vrcp.pop %v4682
  %v4697 = vrcp.pop %v4683
  %v4698 = vrcp.pop %v4684
  %v4699 = vrcp.pop %v4685
  %v4700 = vrcp.pop %v4686
  %v4701 = vrcp.pop %v4687
  %v4702 = vrcp.pop %v4688
  %v4703 = vrcp.pop %v4689
  %v4704 = vrcp.pop %v4690
  %v4705 = vrcp.pop %v4691
  %4706 = vst [vmem:[%s11] sm:$0xff] %v4692
  %4707 = vst [vmem:[%s11 + $0x8] sm:$0xff] %v4693
  %4708 = vst [vmem:[%s11 + $0x10] sm:$0xff] %v4694
  %4709 = vst [vmem:[%s11 + $0x18] sm:$0xff] %v4695
  %4710 = vst [vmem:[%s11 + $0x20] sm:$0xff] %v4696
  %4711 = vst [vmem:[%s11 + $0x28] sm:$0xff] %v4697
  %4712 = vst.msk [vmem:[%s11 + $0x30] sm:$0xff] %vm1258, %v4698
  %4713 = vst [vmem:[%s11 + $0x38] sm:$0xff] %v4699
  %4714 = vst [vmem:[%s11 + $0x40] sm:$0xff] %v4700
  %4715 = vst [vmem:[%s11 + $0x48] sm:$0xff] %v4701
  %4716 = vst [vmem:[%s11 + $0x50] sm:$0xff] %v4702
  %4717 = vst [vmem:[%s11 + $0x58] sm:$0xff] %v4703
  %4718 = vst [vmem:[%s11 + $0x60] sm:$0xff] %v4704
  %4719 = vst.msk [vmem:[%s11 + $0x68] sm:$0xff] %vm1258, %v4705
  // Predicated region
  $region46: #{autoencoder_forward.1} parent=0 // pred_check
    _
  $region47: #{autoencoder_forward.1} parent=0 // pred_check_branch
    %4721 = sbr.rel (0) target = $region49
  $region48: #{autoencoder_forward.1} parent=0 // pred_region
    _
  $region49: #{autoencoder_forward.1} parent=0 // pred_fallthru
    _
  // Predicated region
  $region50: #{autoencoder_forward.1} parent=0 // pred_check
    _
  $region51: #{autoencoder_forward.1} parent=0 // pred_check_branch
    %4723 = sbr.rel (0) target = $region53
  $region52: #{autoencoder_forward.1} parent=0 // pred_region
    _
  $region53: #{autoencoder_forward.1} parent=0 // pred_fallthru
    _

</llo_original>
